<compile_context>
chip_gen: v7x
topology: tpu7x:2x2x1
jax: 0.10.0
libtpu: 0.0.40
codegen_flags: <defaults>
</compile_context>

<pallas_src>
import functools
import math

import jax
import jax.numpy as jnp
import numpy as np
from jax.experimental import pallas as pl
from jax.experimental.pallas import tpu as pltpu

_EPS = 1e-6

_COMPILER_PARAMS = pltpu.CompilerParams(
    dimension_semantics=("parallel",),
    vmem_limit_bytes=32 * 1024 * 1024,  # explicit so tiling stays v7x-safe (64 MiB phys VMEM)
)


def _full_spec(shape):
    """BlockSpec for a small tensor fully resident at every grid step."""
    return pl.BlockSpec(shape, lambda *_: (0,) * len(shape))


# ----------------------------- in-kernel helpers ------------------------------

def _layernorm_f32(x, g, b, eps):
    # PyTorch x.std(-1): unbiased (divide by D-1), eps added to the std.
    mean = jnp.mean(x, axis=-1, keepdims=True)
    diff = x - mean
    var = jnp.sum(diff * diff, axis=-1, keepdims=True) / (x.shape[-1] - 1)
    return g * diff / (jnp.sqrt(var) + eps) + b


def _split_heads(x2d, n_heads, dk):
    # (T, H*dk) -> (H, T, dk): static lane slices + leading-axis stack.
    # (Head split happens only in registers; HBM layouts stay lane-dense.)
    return jnp.stack([x2d[:, h * dk:(h + 1) * dk] for h in range(n_heads)], axis=0)


def _merge_heads(x3d, n_heads):
    # (H, T, dk) -> (T, H*dk)
    return jnp.concatenate([x3d[h] for h in range(n_heads)], axis=-1)


def _mha_core(q2d, k2d, v2d, mask_b, n_heads, scale):
    """All heads in one batched einsum. q2d:(Tq,D), k2d/v2d:(Tk,D) f32;
    mask_b broadcastable to (H,Tq,Tk), 0 == masked."""
    dk = q2d.shape[-1] // n_heads
    q = _split_heads(q2d, n_heads, dk).astype(jnp.bfloat16)
    k = _split_heads(k2d, n_heads, dk).astype(jnp.bfloat16)
    v = _split_heads(v2d, n_heads, dk).astype(jnp.bfloat16)
    s = jnp.einsum("hqd,hkd->hqk", q, k,
                   preferred_element_type=jnp.float32) * scale
    s = jnp.where(mask_b == 0.0, -1e9, s)          # masked_fill(mask==0, -1e9)
    s = s - jnp.max(s, axis=-1, keepdims=True)     # stable softmax (f32)
    p = jnp.exp(s)
    p = p * pl.reciprocal(jnp.sum(p, axis=-1, keepdims=True), approx=True)
    ctx = jnp.einsum("hqk,hkd->hqd", p.astype(jnp.bfloat16), v,
                     preferred_element_type=jnp.float32)
    return _merge_heads(ctx, n_heads)              # (Tq, D) f32


# --------------------------------- kernels ------------------------------------

def _self_attn_sublayer_kernel(x_ref, m_ref, g_ref, b_ref, wqkv_ref, bqkv_ref,
                               wo_ref, bo_ref, o_ref, *, n_heads, scale, eps):
    x = x_ref[0]                                    # (T, D) f32 residual input
    D = x.shape[-1]
    h = _layernorm_f32(x, g_ref[...], b_ref[...], eps)
    qkv = jnp.dot(h.astype(jnp.bfloat16), wqkv_ref[...],
                  preferred_element_type=jnp.float32) + bqkv_ref[...]   # (T, 3D)
    ctx = _mha_core(qkv[:, :D], qkv[:, D:2 * D], qkv[:, 2 * D:],
                    m_ref[0][None, :, :], n_heads, scale)
    out = jnp.dot(ctx.astype(jnp.bfloat16), wo_ref[...],
                  preferred_element_type=jnp.float32) + bo_ref[...]
    o_ref[0] = x + out                              # fused residual add


def _cross_attn_sublayer_kernel(x_ref, mem_ref, m_ref, g_ref, b_ref,
                                wq_ref, bq_ref, wkv_ref, bkv_ref,
                                wo_ref, bo_ref, o_ref, *, n_heads, scale, eps):
    x = x_ref[0]                                    # (T, D)
    mem = mem_ref[0]                                # (S, D), NOT normed (as in PyTorch)
    D = x.shape[-1]
    h = _layernorm_f32(x, g_ref[...], b_ref[...], eps)
    q = jnp.dot(h.astype(jnp.bfloat16), wq_ref[...],
                preferred_element_type=jnp.float32) + bq_ref[...]       # (T, D)
    kv = jnp.dot(mem.astype(jnp.bfloat16), wkv_ref[...],
                 preferred_element_type=jnp.float32) + bkv_ref[...]     # (S, 2D)
    ctx = _mha_core(q, kv[:, :D], kv[:, D:],
                    m_ref[0][None, :, :], n_heads, scale)
    out = jnp.dot(ctx.astype(jnp.bfloat16), wo_ref[...],
                  preferred_element_type=jnp.float32) + bo_ref[...]
    o_ref[0] = x + out


def _ffn_sublayer_kernel(x_ref, g_ref, b_ref, w1_ref, b1_ref, w2_ref, b2_ref,
                         o_ref, *, eps):
    x = x_ref[0]
    h = _layernorm_f32(x, g_ref[...], b_ref[...], eps)
    h1 = jnp.dot(h.astype(jnp.bfloat16), w1_ref[...],
                 preferred_element_type=jnp.float32) + b1_ref[...]
    h1 = jnp.maximum(h1, 0.0)                       # ReLU
    out = jnp.dot(h1.astype(jnp.bfloat16), w2_ref[...],
                  preferred_element_type=jnp.float32) + b2_ref[...]
    o_ref[0] = x + out


def _final_ln_kernel(x_ref, g_ref, b_ref, o_ref, *, eps):
    o_ref[0] = _layernorm_f32(x_ref[0], g_ref[...], b_ref[...], eps)


# --------------------------------- wrappers ------------------------------------

def self_attn_sublayer(x, tgt_mask, lp, n_heads):
    B, T, D = x.shape
    scale = 1.0 / math.sqrt(D // n_heads)
    return pl.pallas_call(
        functools.partial(_self_attn_sublayer_kernel,
                          n_heads=n_heads, scale=scale, eps=_EPS),
        out_shape=jax.ShapeDtypeStruct((B, T, D), jnp.float32),
        grid=(B,),
        in_specs=[
            pl.BlockSpec((1, T, D), lambda i: (i, 0, 0)),   # x
            pl.BlockSpec((1, T, T), lambda i: (i, 0, 0)),   # tgt_mask (B,T,T)
            _full_spec((1, D)), _full_spec((1, D)),         # ln gamma / beta
            _full_spec((D, 3 * D)), _full_spec((1, 3 * D)), # fused Wqkv / bqkv
            _full_spec((D, D)), _full_spec((1, D)),         # Wo / bo
        ],
        out_specs=pl.BlockSpec((1, T, D), lambda i: (i, 0, 0)),
        compiler_params=_COMPILER_PARAMS,
    )(x, tgt_mask, lp["ln0_g"], lp["ln0_b"], lp["wqkv"], lp["bqkv"],
      lp["wo_s"], lp["bo_s"])


def cross_attn_sublayer(x, memory, src_mask, lp, n_heads):
    B, T, D = x.shape
    S = memory.shape[1]
    scale = 1.0 / math.sqrt(D // n_heads)
    return pl.pallas_call(
        functools.partial(_cross_attn_sublayer_kernel,
                          n_heads=n_heads, scale=scale, eps=_EPS),
        out_shape=jax.ShapeDtypeStruct((B, T, D), jnp.float32),
        grid=(B,),
        in_specs=[
            pl.BlockSpec((1, T, D), lambda i: (i, 0, 0)),   # x
            pl.BlockSpec((1, S, D), lambda i: (i, 0, 0)),   # memory
            pl.BlockSpec((1, 1, S), lambda i: (i, 0, 0)),   # src_mask (B,1,S)
            _full_spec((1, D)), _full_spec((1, D)),         # ln gamma / beta
            _full_spec((D, D)), _full_spec((1, D)),         # Wq / bq
            _full_spec((D, 2 * D)), _full_spec((1, 2 * D)), # fused Wkv / bkv
            _full_spec((D, D)), _full_spec((1, D)),         # Wo / bo
        ],
        out_specs=pl.BlockSpec((1, T, D), lambda i: (i, 0, 0)),
        compiler_params=_COMPILER_PARAMS,
    )(x, memory, src_mask, lp["ln1_g"], lp["ln1_b"], lp["wq_c"], lp["bq_c"],
      lp["wkv_c"], lp["bkv_c"], lp["wo_c"], lp["bo_c"])


def ffn_sublayer(x, lp):
    B, T, D = x.shape
    F = lp["w1"].shape[1]
    return pl.pallas_call(
        functools.partial(_ffn_sublayer_kernel, eps=_EPS),
        out_shape=jax.ShapeDtypeStruct((B, T, D), jnp.float32),
        grid=(B,),
        in_specs=[
            pl.BlockSpec((1, T, D), lambda i: (i, 0, 0)),
            _full_spec((1, D)), _full_spec((1, D)),
            _full_spec((D, F)), _full_spec((1, F)),
            _full_spec((F, D)), _full_spec((1, D)),
        ],
        out_specs=pl.BlockSpec((1, T, D), lambda i: (i, 0, 0)),
        compiler_params=_COMPILER_PARAMS,
    )(x, lp["ln2_g"], lp["ln2_b"], lp["w1"], lp["b1"], lp["w2"], lp["b2"])


def final_layernorm(x, gamma, beta):
    B, T, D = x.shape
    return pl.pallas_call(
        functools.partial(_final_ln_kernel, eps=_EPS),
        out_shape=jax.ShapeDtypeStruct((B, T, D), jnp.float32),
        grid=(B,),
        in_specs=[
            pl.BlockSpec((1, T, D), lambda i: (i, 0, 0)),
            _full_spec((1, D)), _full_spec((1, D)),
        ],
        out_specs=pl.BlockSpec((1, T, D), lambda i: (i, 0, 0)),
        compiler_params=_COMPILER_PARAMS,
    )(x, gamma.reshape(1, D), beta.reshape(1, D))


# ------------------------- parameter packing / forward -------------------------

def _prep_layer(p):
    """Pack raw per-layer params into fused, bf16 matmul weights (once per call)."""
    sa, ca = p["self_attn"], p["src_attn"]
    bf16 = jnp.bfloat16
    return dict(
        ln0_g=p["ln0_g"].reshape(1, -1), ln0_b=p["ln0_b"].reshape(1, -1),
        wqkv=jnp.concatenate([sa["wq"], sa["wk"], sa["wv"]], axis=1).astype(bf16),
        bqkv=jnp.concatenate([sa["bq"], sa["bk"], sa["bv"]]).reshape(1, -1),
        wo_s=sa["wo"].astype(bf16), bo_s=sa["bo"].reshape(1, -1),
        ln1_g=p["ln1_g"].reshape(1, -1), ln1_b=p["ln1_b"].reshape(1, -1),
        wq_c=ca["wq"].astype(bf16), bq_c=ca["bq"].reshape(1, -1),
        wkv_c=jnp.concatenate([ca["wk"], ca["wv"]], axis=1).astype(bf16),
        bkv_c=jnp.concatenate([ca["bk"], ca["bv"]]).reshape(1, -1),
        wo_c=ca["wo"].astype(bf16), bo_c=ca["bo"].reshape(1, -1),
        ln2_g=p["ln2_g"].reshape(1, -1), ln2_b=p["ln2_b"].reshape(1, -1),
        w1=p["w1"].astype(bf16), b1=p["b1"].reshape(1, -1),
        w2=p["w2"].astype(bf16), b2=p["b2"].reshape(1, -1),
    )


def decoder_forward(x, memory, src_mask, tgt_mask, params, n_heads, past=None):
    """Decoder.forward for past=None (full-sequence path)."""
    assert past is None  # TODO(synk): incremental decoding (KV cache / `present`) not implemented
    src_mask = src_mask.astype(jnp.float32)
    tgt_mask = tgt_mask.astype(jnp.float32)
    for p in params["layers"]:
        lp = _prep_layer(p)
        x = self_attn_sublayer(x, tgt_mask, lp, n_heads)
        x = cross_attn_sublayer(x, memory, src_mask, lp, n_heads)
        x = ffn_sublayer(x, lp)
    return final_layernorm(x, params["norm_g"], params["norm_b"])


# ------------------------------ parameter init ---------------------------------

def init_params(key, n_layers, d_model, d_ff):
    keys = iter(jax.random.split(key, 8 * n_layers * 4 + 4))

    def dense(shape):
        return 0.02 * jax.random.normal(next(keys), shape, jnp.float32)

    def attn_params():
        return dict(
            wq=dense((d_model, d_model)), bq=jnp.zeros((d_model,), jnp.float32),
            wk=dense((d_model, d_model)), bk=jnp.zeros((d_model,), jnp.float32),
            wv=dense((d_model, d_model)), bv=jnp.zeros((d_model,), jnp.float32),
            wo=dense((d_model, d_model)), bo=jnp.zeros((d_model,), jnp.float32),
        )

    layers = []
    for _ in range(n_layers):
        layers.append(dict(
            self_attn=attn_params(),
            src_attn=attn_params(),
            w1=dense((d_model, d_ff)), b1=jnp.zeros((d_ff,), jnp.float32),
            w2=dense((d_ff, d_model)), b2=jnp.zeros((d_model,), jnp.float32),
            ln0_g=jnp.ones((d_model,), jnp.float32), ln0_b=jnp.zeros((d_model,), jnp.float32),
            ln1_g=jnp.ones((d_model,), jnp.float32), ln1_b=jnp.zeros((d_model,), jnp.float32),
            ln2_g=jnp.ones((d_model,), jnp.float32), ln2_b=jnp.zeros((d_model,), jnp.float32),
        ))
    return dict(
        layers=layers,
        norm_g=jnp.ones((d_model,), jnp.float32),
        norm_b=jnp.zeros((d_model,), jnp.float32),
    )


# ----------------------------- pure-JAX reference -------------------------------

def _ref_layernorm(x, g, b, eps=1e-6):
    mean = x.mean(-1, keepdims=True)
    var = ((x - mean) ** 2).sum(-1, keepdims=True) / (x.shape[-1] - 1)
    return g * (x - mean) / (jnp.sqrt(var) + eps) + b


def _ref_mha(q_in, k_in, v_in, mask, p, H):
    B, Tq, D = q_in.shape
    Tk = k_in.shape[1]
    dk = D // H
    q = (q_in @ p["wq"] + p["bq"]).reshape(B, Tq, H, dk).transpose(0, 2, 1, 3)
    k = (k_in @ p["wk"] + p["bk"]).reshape(B, Tk, H, dk).transpose(0, 2, 1, 3)
    v = (v_in @ p["wv"] + p["bv"]).reshape(B, Tk, H, dk).transpose(0, 2, 1, 3)
    s = jnp.einsum("bhqd,bhkd->bhqk", q, k) / math.sqrt(dk)
    s = jnp.where(mask[:, None, :, :] == 0, -1e9, s)
    a = jax.nn.softmax(s, axis=-1)
    o = jnp.einsum("bhqk,bhkd->bhqd", a, v).transpose(0, 2, 1, 3).reshape(B, Tq, D)
    return o @ p["wo"] + p["bo"]


def _ref_decoder(x, memory, src_mask, tgt_mask, params, H):
    for p in params["layers"]:
        h = _ref_layernorm(x, p["ln0_g"], p["ln0_b"])
        x = x + _ref_mha(h, h, h, tgt_mask, p["self_attn"], H)
        h = _ref_layernorm(x, p["ln1_g"], p["ln1_b"])
        x = x + _ref_mha(h, memory, memory, src_mask, p["src_attn"], H)
        h = _ref_layernorm(x, p["ln2_g"], p["ln2_b"])
        x = x + jnp.maximum(h @ p["w1"] + p["b1"], 0.0) @ p["w2"] + p["b2"]
    return _ref_layernorm(x, params["norm_g"], params["norm_b"])


# ------------------------------------ main --------------------------------------

if __name__ == "__main__":
    B, T, S, D, H, D_FF, N_LAYERS = 2, 8, 16, 32, 4, 64, 2

    key = jax.random.PRNGKey(0)
    k_x, k_mem, k_p = jax.random.split(key, 3)

    x = jax.random.normal(k_x, (B, T, D), jnp.float32)         # decoder input
    memory = jax.random.normal(k_mem, (B, S, D), jnp.float32)   # encoder memory
    src_mask = jnp.ones((B, 1, S), jnp.float32)                 # attend all src
    tgt_mask = jnp.tril(jnp.ones((T, T), jnp.float32))[None]    # causal
    tgt_mask = jnp.broadcast_to(tgt_mask, (B, T, T))

    params = init_params(k_p, N_LAYERS, D, D_FF)

    fwd = jax.jit(functools.partial(decoder_forward, n_heads=H))
    out = jax.block_until_ready(fwd(x, memory, src_mask, tgt_mask, params))

    ref = jax.block_until_ready(_ref_decoder(x, memory, src_mask, tgt_mask, params, H))

    assert out.shape == (B, T, D), out.shape
    assert np.all(np.isfinite(np.asarray(out)))
    np.testing.assert_allclose(np.asarray(out), np.asarray(ref), rtol=1e-2, atol=1e-2)

    print("KERNEL_OK")
</pallas_src>

<mosaic_0001>
module attributes {stable_mosaic.version = 11 : i64} {
  func.func @_self_attn_sublayer_kernel(%arg0: i32, %arg1: memref<1x8x32xf32, #tpu.memory_space<vmem>>, %arg2: memref<1x8x8xf32, #tpu.memory_space<vmem>>, %arg3: memref<1x32xf32, #tpu.memory_space<vmem>>, %arg4: memref<1x32xf32, #tpu.memory_space<vmem>>, %arg5: memref<32x96xbf16, #tpu.memory_space<vmem>>, %arg6: memref<1x96xf32, #tpu.memory_space<vmem>>, %arg7: memref<32x32xbf16, #tpu.memory_space<vmem>>, %arg8: memref<1x32xf32, #tpu.memory_space<vmem>>, %arg9: memref<1x8x32xf32, #tpu.memory_space<vmem>>) attributes {dimension_semantics = [#tpu.dimension_semantics<parallel>], iteration_bounds = array<i64: 2>, scalar_prefetch = 0 : i64, scratch_operands = 0 : i64, tpu.core_type = #tpu.core_type<tc>, window_params = [{transform_indices = @transform_0, window_bounds = array<i64: 1, 8, 32>}, {transform_indices = @transform_1, window_bounds = array<i64: 1, 8, 8>}, {pipeline_mode = #tpu.pipeline_mode<synchronous>, transform_indices = @transform_2, window_bounds = array<i64: 1, 32>}, {pipeline_mode = #tpu.pipeline_mode<synchronous>, transform_indices = @transform_3, window_bounds = array<i64: 1, 32>}, {pipeline_mode = #tpu.pipeline_mode<synchronous>, transform_indices = @transform_4, window_bounds = array<i64: 32, 96>}, {pipeline_mode = #tpu.pipeline_mode<synchronous>, transform_indices = @transform_5, window_bounds = array<i64: 1, 96>}, {pipeline_mode = #tpu.pipeline_mode<synchronous>, transform_indices = @transform_6, window_bounds = array<i64: 32, 32>}, {pipeline_mode = #tpu.pipeline_mode<synchronous>, transform_indices = @transform_7, window_bounds = array<i64: 1, 32>}, {transform_indices = @transform_8, window_bounds = array<i64: 1, 8, 32>}]} {
    %c0 = arith.constant 0 : index
    %c0_0 = arith.constant 0 : index
    %c0_1 = arith.constant 0 : index
    %0 = vector.load %arg1[%c0, %c0_0, %c0_1] : memref<1x8x32xf32, #tpu.memory_space<vmem>>, vector<1x8x32xf32>
    %1 = vector.shape_cast %0 : vector<1x8x32xf32> to vector<8x32xf32>
    %c0_2 = arith.constant 0 : index
    %c0_3 = arith.constant 0 : index
    %2 = vector.load %arg3[%c0_2, %c0_3] : memref<1x32xf32, #tpu.memory_space<vmem>>, vector<1x32xf32>
    %c0_4 = arith.constant 0 : index
    %c0_5 = arith.constant 0 : index
    %3 = vector.load %arg4[%c0_4, %c0_5] : memref<1x32xf32, #tpu.memory_space<vmem>>, vector<1x32xf32>
    %cst = arith.constant dense<0.000000e+00> : vector<8xf32>
    %4 = vector.multi_reduction <add>, %1, %cst [1] : vector<8x32xf32> to vector<8xf32>
    %5 = vector.shape_cast %4 : vector<8xf32> to vector<8x1xf32>
    %cst_6 = arith.constant 3.200000e+01 : f32
    %6 = vector.broadcast %cst_6 : f32 to vector<8x1xf32>
    %7 = arith.divf %5, %6 : vector<8x1xf32>
    %8 = vector.broadcast %7 : vector<8x1xf32> to vector<8x32xf32>
    %9 = arith.subf %1, %8 : vector<8x32xf32>
    %10 = arith.mulf %9, %9 : vector<8x32xf32>
    %cst_7 = arith.constant dense<0.000000e+00> : vector<8xf32>
    %11 = vector.multi_reduction <add>, %10, %cst_7 [1] : vector<8x32xf32> to vector<8xf32>
    %12 = vector.shape_cast %11 : vector<8xf32> to vector<8x1xf32>
    %cst_8 = arith.constant 3.100000e+01 : f32
    %13 = vector.broadcast %cst_8 : f32 to vector<8x1xf32>
    %14 = arith.divf %12, %13 : vector<8x1xf32>
    %15 = vector.broadcast %2 : vector<1x32xf32> to vector<8x32xf32>
    %16 = arith.mulf %15, %9 : vector<8x32xf32>
    %17 = math.sqrt %14 : vector<8x1xf32>
    %cst_9 = arith.constant 9.99999997E-7 : f32
    %18 = vector.broadcast %cst_9 : f32 to vector<8x1xf32>
    %19 = arith.addf %17, %18 : vector<8x1xf32>
    %20 = vector.broadcast %19 : vector<8x1xf32> to vector<8x32xf32>
    %21 = arith.divf %16, %20 : vector<8x32xf32>
    %22 = vector.broadcast %3 : vector<1x32xf32> to vector<8x32xf32>
    %23 = arith.addf %21, %22 : vector<8x32xf32>
    %24 = arith.truncf %23 : vector<8x32xf32> to vector<8x32xbf16>
    %c0_10 = arith.constant 0 : index
    %c0_11 = arith.constant 0 : index
    %25 = vector.load %arg5[%c0_10, %c0_11] : memref<32x96xbf16, #tpu.memory_space<vmem>>, vector<32x96xbf16>
    %cst_12 = arith.constant dense<0.000000e+00> : vector<8x96xf32>
    %26 = tpu.matmul %24, %25, %cst_12 {dimension_numbers = #tpu.dot_dimension_numbers<[1], [0], [0], [1], [0, 0, 1, 1], [], []>} : vector<8x32xbf16>, vector<32x96xbf16>, vector<8x96xf32> -> vector<8x96xf32>
    %c0_13 = arith.constant 0 : index
    %c0_14 = arith.constant 0 : index
    %27 = vector.load %arg6[%c0_13, %c0_14] : memref<1x96xf32, #tpu.memory_space<vmem>>, vector<1x96xf32>
    %28 = vector.broadcast %27 : vector<1x96xf32> to vector<8x96xf32>
    %29 = arith.addf %26, %28 : vector<8x96xf32>
    %30 = vector.extract_strided_slice %29 {offsets = [0, 0], sizes = [8, 32], strides = [1, 1]} : vector<8x96xf32> to vector<8x32xf32>
    %31 = vector.extract_strided_slice %29 {offsets = [0, 32], sizes = [8, 32], strides = [1, 1]} : vector<8x96xf32> to vector<8x32xf32>
    %32 = vector.extract_strided_slice %29 {offsets = [0, 64], sizes = [8, 32], strides = [1, 1]} : vector<8x96xf32> to vector<8x32xf32>
    %c0_15 = arith.constant 0 : index
    %c0_16 = arith.constant 0 : index
    %c0_17 = arith.constant 0 : index
    %33 = vector.load %arg2[%c0_15, %c0_16, %c0_17] : memref<1x8x8xf32, #tpu.memory_space<vmem>>, vector<1x8x8xf32>
    %34 = vector.shape_cast %33 : vector<1x8x8xf32> to vector<8x8xf32>
    %35 = vector.shape_cast %34 : vector<8x8xf32> to vector<1x8x8xf32>
    %36 = vector.extract_strided_slice %30 {offsets = [0, 0], sizes = [8, 8], strides = [1, 1]} : vector<8x32xf32> to vector<8x8xf32>
    %37 = vector.extract_strided_slice %30 {offsets = [0, 8], sizes = [8, 8], strides = [1, 1]} : vector<8x32xf32> to vector<8x8xf32>
    %38 = vector.extract_strided_slice %30 {offsets = [0, 16], sizes = [8, 8], strides = [1, 1]} : vector<8x32xf32> to vector<8x8xf32>
    %39 = vector.extract_strided_slice %30 {offsets = [0, 24], sizes = [8, 8], strides = [1, 1]} : vector<8x32xf32> to vector<8x8xf32>
    %40 = vector.shape_cast %36 : vector<8x8xf32> to vector<1x8x8xf32>
    %41 = vector.shape_cast %37 : vector<8x8xf32> to vector<1x8x8xf32>
    %42 = vector.shape_cast %38 : vector<8x8xf32> to vector<1x8x8xf32>
    %43 = vector.shape_cast %39 : vector<8x8xf32> to vector<1x8x8xf32>
    %44 = tpu.concatenate %40, %41, %42, %43 in 0 : vector<1x8x8xf32>, vector<1x8x8xf32>, vector<1x8x8xf32>, vector<1x8x8xf32> -> vector<4x8x8xf32>
    %45 = arith.truncf %44 : vector<4x8x8xf32> to vector<4x8x8xbf16>
    %46 = vector.extract_strided_slice %31 {offsets = [0, 0], sizes = [8, 8], strides = [1, 1]} : vector<8x32xf32> to vector<8x8xf32>
    %47 = vector.extract_strided_slice %31 {offsets = [0, 8], sizes = [8, 8], strides = [1, 1]} : vector<8x32xf32> to vector<8x8xf32>
    %48 = vector.extract_strided_slice %31 {offsets = [0, 16], sizes = [8, 8], strides = [1, 1]} : vector<8x32xf32> to vector<8x8xf32>
    %49 = vector.extract_strided_slice %31 {offsets = [0, 24], sizes = [8, 8], strides = [1, 1]} : vector<8x32xf32> to vector<8x8xf32>
    %50 = vector.shape_cast %46 : vector<8x8xf32> to vector<1x8x8xf32>
    %51 = vector.shape_cast %47 : vector<8x8xf32> to vector<1x8x8xf32>
    %52 = vector.shape_cast %48 : vector<8x8xf32> to vector<1x8x8xf32>
    %53 = vector.shape_cast %49 : vector<8x8xf32> to vector<1x8x8xf32>
    %54 = tpu.concatenate %50, %51, %52, %53 in 0 : vector<1x8x8xf32>, vector<1x8x8xf32>, vector<1x8x8xf32>, vector<1x8x8xf32> -> vector<4x8x8xf32>
    %55 = arith.truncf %54 : vector<4x8x8xf32> to vector<4x8x8xbf16>
    %56 = vector.extract_strided_slice %32 {offsets = [0, 0], sizes = [8, 8], strides = [1, 1]} : vector<8x32xf32> to vector<8x8xf32>
    %57 = vector.extract_strided_slice %32 {offsets = [0, 8], sizes = [8, 8], strides = [1, 1]} : vector<8x32xf32> to vector<8x8xf32>
    %58 = vector.extract_strided_slice %32 {offsets = [0, 16], sizes = [8, 8], strides = [1, 1]} : vector<8x32xf32> to vector<8x8xf32>
    %59 = vector.extract_strided_slice %32 {offsets = [0, 24], sizes = [8, 8], strides = [1, 1]} : vector<8x32xf32> to vector<8x8xf32>
    %60 = vector.shape_cast %56 : vector<8x8xf32> to vector<1x8x8xf32>
    %61 = vector.shape_cast %57 : vector<8x8xf32> to vector<1x8x8xf32>
    %62 = vector.shape_cast %58 : vector<8x8xf32> to vector<1x8x8xf32>
    %63 = vector.shape_cast %59 : vector<8x8xf32> to vector<1x8x8xf32>
    %64 = tpu.concatenate %60, %61, %62, %63 in 0 : vector<1x8x8xf32>, vector<1x8x8xf32>, vector<1x8x8xf32>, vector<1x8x8xf32> -> vector<4x8x8xf32>
    %65 = arith.truncf %64 : vector<4x8x8xf32> to vector<4x8x8xbf16>
    "tpu.trace_start"() <{level = 10 : i32, message = "hqd,hkd->hqk"}> : () -> ()
    %cst_18 = arith.constant dense<0.000000e+00> : vector<4x8x8xf32>
    %66 = tpu.matmul %45, %55, %cst_18 {dimension_numbers = #tpu.dot_dimension_numbers<[2], [2], [1], [1], [0, 0, 0, 1, 1, 1], [0], [0]>} : vector<4x8x8xbf16>, vector<4x8x8xbf16>, vector<4x8x8xf32> -> vector<4x8x8xf32>
    "tpu.trace_stop"() : () -> ()
    %cst_19 = arith.constant 0.353553385 : f32
    %67 = vector.broadcast %cst_19 : f32 to vector<4x8x8xf32>
    %68 = arith.mulf %66, %67 : vector<4x8x8xf32>
    %cst_20 = arith.constant 0.000000e+00 : f32
    %69 = vector.broadcast %cst_20 : f32 to vector<1x8x8xf32>
    %70 = arith.cmpf oeq, %35, %69 : vector<1x8x8xf32>
    %cst_21 = arith.constant -1.000000e+09 : f32
    %71 = vector.shape_cast %70 : vector<1x8x8xi1> to vector<1x8x8xi1>
    %72 = vector.broadcast %71 : vector<1x8x8xi1> to vector<4x8x8xi1>
    %73 = vector.broadcast %cst_21 : f32 to vector<4x8x8xf32>
    %74 = arith.select %72, %73, %68 : vector<4x8x8xi1>, vector<4x8x8xf32>
    %cst_22 = arith.constant dense<0xFF800000> : vector<4x8xf32>
    %75 = vector.multi_reduction <maximumf>, %74, %cst_22 [2] : vector<4x8x8xf32> to vector<4x8xf32>
    %76 = vector.shape_cast %75 : vector<4x8xf32> to vector<4x8x1xf32>
    %77 = vector.broadcast %76 : vector<4x8x1xf32> to vector<4x8x8xf32>
    %78 = arith.subf %74, %77 : vector<4x8x8xf32>
    %79 = math.exp %78 : vector<4x8x8xf32>
    %cst_23 = arith.constant dense<0.000000e+00> : vector<4x8xf32>
    %80 = vector.multi_reduction <add>, %79, %cst_23 [2] : vector<4x8x8xf32> to vector<4x8xf32>
    %81 = vector.shape_cast %80 : vector<4x8xf32> to vector<4x8x1xf32>
    %82 = tpu.reciprocal %81 {approx = true} : vector<4x8x1xf32> -> vector<4x8x1xf32>
    %83 = vector.broadcast %82 : vector<4x8x1xf32> to vector<4x8x8xf32>
    %84 = arith.mulf %79, %83 : vector<4x8x8xf32>
    %85 = arith.truncf %84 : vector<4x8x8xf32> to vector<4x8x8xbf16>
    "tpu.trace_start"() <{level = 10 : i32, message = "hqk,hkd->hqd"}> : () -> ()
    %cst_24 = arith.constant dense<0.000000e+00> : vector<4x8x8xf32>
    %86 = tpu.matmul %85, %65, %cst_24 {dimension_numbers = #tpu.dot_dimension_numbers<[2], [1], [1], [2], [0, 0, 0, 1, 1, 2], [0], [0]>} : vector<4x8x8xbf16>, vector<4x8x8xbf16>, vector<4x8x8xf32> -> vector<4x8x8xf32>
    "tpu.trace_stop"() : () -> ()
    %87 = vector.extract_strided_slice %86 {offsets = [0, 0, 0], sizes = [1, 8, 8], strides = [1, 1, 1]} : vector<4x8x8xf32> to vector<1x8x8xf32>
    %88 = vector.shape_cast %87 : vector<1x8x8xf32> to vector<8x8xf32>
    %89 = vector.extract_strided_slice %86 {offsets = [1, 0, 0], sizes = [1, 8, 8], strides = [1, 1, 1]} : vector<4x8x8xf32> to vector<1x8x8xf32>
    %90 = vector.shape_cast %89 : vector<1x8x8xf32> to vector<8x8xf32>
    %91 = vector.extract_strided_slice %86 {offsets = [2, 0, 0], sizes = [1, 8, 8], strides = [1, 1, 1]} : vector<4x8x8xf32> to vector<1x8x8xf32>
    %92 = vector.shape_cast %91 : vector<1x8x8xf32> to vector<8x8xf32>
    %93 = vector.extract_strided_slice %86 {offsets = [3, 0, 0], sizes = [1, 8, 8], strides = [1, 1, 1]} : vector<4x8x8xf32> to vector<1x8x8xf32>
    %94 = vector.shape_cast %93 : vector<1x8x8xf32> to vector<8x8xf32>
    %95 = tpu.concatenate %88, %90, %92, %94 in 1 : vector<8x8xf32>, vector<8x8xf32>, vector<8x8xf32>, vector<8x8xf32> -> vector<8x32xf32>
    %96 = arith.truncf %95 : vector<8x32xf32> to vector<8x32xbf16>
    %c0_25 = arith.constant 0 : index
    %c0_26 = arith.constant 0 : index
    %97 = vector.load %arg7[%c0_25, %c0_26] : memref<32x32xbf16, #tpu.memory_space<vmem>>, vector<32x32xbf16>
    %cst_27 = arith.constant dense<0.000000e+00> : vector<8x32xf32>
    %98 = tpu.matmul %96, %97, %cst_27 {dimension_numbers = #tpu.dot_dimension_numbers<[1], [0], [0], [1], [0, 0, 1, 1], [], []>} : vector<8x32xbf16>, vector<32x32xbf16>, vector<8x32xf32> -> vector<8x32xf32>
    %c0_28 = arith.constant 0 : index
    %c0_29 = arith.constant 0 : index
    %99 = vector.load %arg8[%c0_28, %c0_29] : memref<1x32xf32, #tpu.memory_space<vmem>>, vector<1x32xf32>
    %100 = vector.broadcast %99 : vector<1x32xf32> to vector<8x32xf32>
    %101 = arith.addf %98, %100 : vector<8x32xf32>
    %102 = arith.addf %1, %101 : vector<8x32xf32>
    %c0_30 = arith.constant 0 : index
    %c0_31 = arith.constant 0 : index
    %c0_32 = arith.constant 0 : index
    %103 = vector.load %arg9[%c0_30, %c0_31, %c0_32] : memref<1x8x32xf32, #tpu.memory_space<vmem>>, vector<1x8x32xf32>
    %104 = vector.shape_cast %103 : vector<1x8x32xf32> to vector<8x32xf32>
    %105 = vector.shape_cast %102 : vector<8x32xf32> to vector<1x8x32xf32>
    tpu.vector_store %arg9[%c0_30, %c0_31, %c0_32], %105 {strides = array<i32>} : memref<1x8x32xf32, #tpu.memory_space<vmem>>, vector<1x8x32xf32>,
    return
  }
  func.func @transform_0(%arg0: i32) -> (i32, i32, i32) {
    %c0_i32 = arith.constant 0 : i32
    %c0_i32_0 = arith.constant 0 : i32
    %c0_i32_1 = arith.constant 0 : i32
    return %arg0, %c0_i32, %c0_i32_0 : i32, i32, i32
  }
  func.func @transform_1(%arg0: i32) -> (i32, i32, i32) {
    %c0_i32 = arith.constant 0 : i32
    %c0_i32_0 = arith.constant 0 : i32
    %c0_i32_1 = arith.constant 0 : i32
    return %arg0, %c0_i32, %c0_i32_0 : i32, i32, i32
  }
  func.func @transform_2(%arg0: i32) -> (i32, i32) {
    %c0_i32 = arith.constant 0 : i32
    %c0_i32_0 = arith.constant 0 : i32
    %c0_i32_1 = arith.constant 0 : i32
    return %c0_i32, %c0_i32_0 : i32, i32
  }
  func.func @transform_3(%arg0: i32) -> (i32, i32) {
    %c0_i32 = arith.constant 0 : i32
    %c0_i32_0 = arith.constant 0 : i32
    %c0_i32_1 = arith.constant 0 : i32
    return %c0_i32, %c0_i32_0 : i32, i32
  }
  func.func @transform_4(%arg0: i32) -> (i32, i32) {
    %c0_i32 = arith.constant 0 : i32
    %c0_i32_0 = arith.constant 0 : i32
    %c0_i32_1 = arith.constant 0 : i32
    return %c0_i32, %c0_i32_0 : i32, i32
  }
  func.func @transform_5(%arg0: i32) -> (i32, i32) {
    %c0_i32 = arith.constant 0 : i32
    %c0_i32_0 = arith.constant 0 : i32
    %c0_i32_1 = arith.constant 0 : i32
    return %c0_i32, %c0_i32_0 : i32, i32
  }
  func.func @transform_6(%arg0: i32) -> (i32, i32) {
    %c0_i32 = arith.constant 0 : i32
    %c0_i32_0 = arith.constant 0 : i32
    %c0_i32_1 = arith.constant 0 : i32
    return %c0_i32, %c0_i32_0 : i32, i32
  }
  func.func @transform_7(%arg0: i32) -> (i32, i32) {
    %c0_i32 = arith.constant 0 : i32
    %c0_i32_0 = arith.constant 0 : i32
    %c0_i32_1 = arith.constant 0 : i32
    return %c0_i32, %c0_i32_0 : i32, i32
  }
  func.func @transform_8(%arg0: i32) -> (i32, i32, i32) {
    %c0_i32 = arith.constant 0 : i32
    %c0_i32_0 = arith.constant 0 : i32
    %c0_i32_1 = arith.constant 0 : i32
    return %arg0, %c0_i32, %c0_i32_0 : i32, i32, i32
  }
}

module attributes {stable_mosaic.version = 11 : i64} {
  func.func @_cross_attn_sublayer_kernel(%arg0: i32, %arg1: memref<1x8x32xf32, #tpu.memory_space<vmem>>, %arg2: memref<1x16x32xf32, #tpu.memory_space<vmem>>, %arg3: memref<1x1x16xf32, #tpu.memory_space<vmem>>, %arg4: memref<1x32xf32, #tpu.memory_space<vmem>>, %arg5: memref<1x32xf32, #tpu.memory_space<vmem>>, %arg6: memref<32x32xbf16, #tpu.memory_space<vmem>>, %arg7: memref<1x32xf32, #tpu.memory_space<vmem>>, %arg8: memref<32x64xbf16, #tpu.memory_space<vmem>>, %arg9: memref<1x64xf32, #tpu.memory_space<vmem>>, %arg10: memref<32x32xbf16, #tpu.memory_space<vmem>>, %arg11: memref<1x32xf32, #tpu.memory_space<vmem>>, %arg12: memref<1x8x32xf32, #tpu.memory_space<vmem>>) attributes {dimension_semantics = [#tpu.dimension_semantics<parallel>], iteration_bounds = array<i64: 2>, scalar_prefetch = 0 : i64, scratch_operands = 0 : i64, tpu.core_type = #tpu.core_type<tc>, window_params = [{transform_indices = @transform_0, window_bounds = array<i64: 1, 8, 32>}, {transform_indices = @transform_1, window_bounds = array<i64: 1, 16, 32>}, {transform_indices = @transform_2, window_bounds = array<i64: 1, 1, 16>}, {pipeline_mode = #tpu.pipeline_mode<synchronous>, transform_indices = @transform_3, window_bounds = array<i64: 1, 32>}, {pipeline_mode = #tpu.pipeline_mode<synchronous>, transform_indices = @transform_4, window_bounds = array<i64: 1, 32>}, {pipeline_mode = #tpu.pipeline_mode<synchronous>, transform_indices = @transform_5, window_bounds = array<i64: 32, 32>}, {pipeline_mode = #tpu.pipeline_mode<synchronous>, transform_indices = @transform_6, window_bounds = array<i64: 1, 32>}, {pipeline_mode = #tpu.pipeline_mode<synchronous>, transform_indices = @transform_7, window_bounds = array<i64: 32, 64>}, {pipeline_mode = #tpu.pipeline_mode<synchronous>, transform_indices = @transform_8, window_bounds = array<i64: 1, 64>}, {pipeline_mode = #tpu.pipeline_mode<synchronous>, transform_indices = @transform_9, window_bounds = array<i64: 32, 32>}, {pipeline_mode = #tpu.pipeline_mode<synchronous>, transform_indices = @transform_10, window_bounds = array<i64: 1, 32>}, {transform_indices = @transform_11, window_bounds = array<i64: 1, 8, 32>}]} {
    %c0 = arith.constant 0 : index
    %c0_0 = arith.constant 0 : index
    %c0_1 = arith.constant 0 : index
    %0 = vector.load %arg1[%c0, %c0_0, %c0_1] : memref<1x8x32xf32, #tpu.memory_space<vmem>>, vector<1x8x32xf32>
    %1 = vector.shape_cast %0 : vector<1x8x32xf32> to vector<8x32xf32>
    %c0_2 = arith.constant 0 : index
    %c0_3 = arith.constant 0 : index
    %c0_4 = arith.constant 0 : index
    %2 = vector.load %arg2[%c0_2, %c0_3, %c0_4] : memref<1x16x32xf32, #tpu.memory_space<vmem>>, vector<1x16x32xf32>
    %3 = vector.shape_cast %2 : vector<1x16x32xf32> to vector<16x32xf32>
    %c0_5 = arith.constant 0 : index
    %c0_6 = arith.constant 0 : index
    %4 = vector.load %arg4[%c0_5, %c0_6] : memref<1x32xf32, #tpu.memory_space<vmem>>, vector<1x32xf32>
    %c0_7 = arith.constant 0 : index
    %c0_8 = arith.constant 0 : index
    %5 = vector.load %arg5[%c0_7, %c0_8] : memref<1x32xf32, #tpu.memory_space<vmem>>, vector<1x32xf32>
    %cst = arith.constant dense<0.000000e+00> : vector<8xf32>
    %6 = vector.multi_reduction <add>, %1, %cst [1] : vector<8x32xf32> to vector<8xf32>
    %7 = vector.shape_cast %6 : vector<8xf32> to vector<8x1xf32>
    %cst_9 = arith.constant 3.200000e+01 : f32
    %8 = vector.broadcast %cst_9 : f32 to vector<8x1xf32>
    %9 = arith.divf %7, %8 : vector<8x1xf32>
    %10 = vector.broadcast %9 : vector<8x1xf32> to vector<8x32xf32>
    %11 = arith.subf %1, %10 : vector<8x32xf32>
    %12 = arith.mulf %11, %11 : vector<8x32xf32>
    %cst_10 = arith.constant dense<0.000000e+00> : vector<8xf32>
    %13 = vector.multi_reduction <add>, %12, %cst_10 [1] : vector<8x32xf32> to vector<8xf32>
    %14 = vector.shape_cast %13 : vector<8xf32> to vector<8x1xf32>
    %cst_11 = arith.constant 3.100000e+01 : f32
    %15 = vector.broadcast %cst_11 : f32 to vector<8x1xf32>
    %16 = arith.divf %14, %15 : vector<8x1xf32>
    %17 = vector.broadcast %4 : vector<1x32xf32> to vector<8x32xf32>
    %18 = arith.mulf %17, %11 : vector<8x32xf32>
    %19 = math.sqrt %16 : vector<8x1xf32>
    %cst_12 = arith.constant 9.99999997E-7 : f32
    %20 = vector.broadcast %cst_12 : f32 to vector<8x1xf32>
    %21 = arith.addf %19, %20 : vector<8x1xf32>
    %22 = vector.broadcast %21 : vector<8x1xf32> to vector<8x32xf32>
    %23 = arith.divf %18, %22 : vector<8x32xf32>
    %24 = vector.broadcast %5 : vector<1x32xf32> to vector<8x32xf32>
    %25 = arith.addf %23, %24 : vector<8x32xf32>
    %26 = arith.truncf %25 : vector<8x32xf32> to vector<8x32xbf16>
    %c0_13 = arith.constant 0 : index
    %c0_14 = arith.constant 0 : index
    %27 = vector.load %arg6[%c0_13, %c0_14] : memref<32x32xbf16, #tpu.memory_space<vmem>>, vector<32x32xbf16>
    %cst_15 = arith.constant dense<0.000000e+00> : vector<8x32xf32>
    %28 = tpu.matmul %26, %27, %cst_15 {dimension_numbers = #tpu.dot_dimension_numbers<[1], [0], [0], [1], [0, 0, 1, 1], [], []>} : vector<8x32xbf16>, vector<32x32xbf16>, vector<8x32xf32> -> vector<8x32xf32>
    %c0_16 = arith.constant 0 : index
    %c0_17 = arith.constant 0 : index
    %29 = vector.load %arg7[%c0_16, %c0_17] : memref<1x32xf32, #tpu.memory_space<vmem>>, vector<1x32xf32>
    %30 = vector.broadcast %29 : vector<1x32xf32> to vector<8x32xf32>
    %31 = arith.addf %28, %30 : vector<8x32xf32>
    %32 = arith.truncf %3 : vector<16x32xf32> to vector<16x32xbf16>
    %c0_18 = arith.constant 0 : index
    %c0_19 = arith.constant 0 : index
    %33 = vector.load %arg8[%c0_18, %c0_19] : memref<32x64xbf16, #tpu.memory_space<vmem>>, vector<32x64xbf16>
    %cst_20 = arith.constant dense<0.000000e+00> : vector<16x64xf32>
    %34 = tpu.matmul %32, %33, %cst_20 {dimension_numbers = #tpu.dot_dimension_numbers<[1], [0], [0], [1], [0, 0, 1, 1], [], []>} : vector<16x32xbf16>, vector<32x64xbf16>, vector<16x64xf32> -> vector<16x64xf32>
    %c0_21 = arith.constant 0 : index
    %c0_22 = arith.constant 0 : index
    %35 = vector.load %arg9[%c0_21, %c0_22] : memref<1x64xf32, #tpu.memory_space<vmem>>, vector<1x64xf32>
    %36 = vector.broadcast %35 : vector<1x64xf32> to vector<16x64xf32>
    %37 = arith.addf %34, %36 : vector<16x64xf32>
    %38 = vector.extract_strided_slice %37 {offsets = [0, 0], sizes = [16, 32], strides = [1, 1]} : vector<16x64xf32> to vector<16x32xf32>
    %39 = vector.extract_strided_slice %37 {offsets = [0, 32], sizes = [16, 32], strides = [1, 1]} : vector<16x64xf32> to vector<16x32xf32>
    %c0_23 = arith.constant 0 : index
    %c0_24 = arith.constant 0 : index
    %c0_25 = arith.constant 0 : index
    %40 = vector.load %arg3[%c0_23, %c0_24, %c0_25] : memref<1x1x16xf32, #tpu.memory_space<vmem>>, vector<1x1x16xf32>
    %41 = vector.shape_cast %40 : vector<1x1x16xf32> to vector<1x16xf32>
    %42 = vector.shape_cast %41 : vector<1x16xf32> to vector<1x1x16xf32>
    %43 = vector.extract_strided_slice %31 {offsets = [0, 0], sizes = [8, 8], strides = [1, 1]} : vector<8x32xf32> to vector<8x8xf32>
    %44 = vector.extract_strided_slice %31 {offsets = [0, 8], sizes = [8, 8], strides = [1, 1]} : vector<8x32xf32> to vector<8x8xf32>
    %45 = vector.extract_strided_slice %31 {offsets = [0, 16], sizes = [8, 8], strides = [1, 1]} : vector<8x32xf32> to vector<8x8xf32>
    %46 = vector.extract_strided_slice %31 {offsets = [0, 24], sizes = [8, 8], strides = [1, 1]} : vector<8x32xf32> to vector<8x8xf32>
    %47 = vector.shape_cast %43 : vector<8x8xf32> to vector<1x8x8xf32>
    %48 = vector.shape_cast %44 : vector<8x8xf32> to vector<1x8x8xf32>
    %49 = vector.shape_cast %45 : vector<8x8xf32> to vector<1x8x8xf32>
    %50 = vector.shape_cast %46 : vector<8x8xf32> to vector<1x8x8xf32>
    %51 = tpu.concatenate %47, %48, %49, %50 in 0 : vector<1x8x8xf32>, vector<1x8x8xf32>, vector<1x8x8xf32>, vector<1x8x8xf32> -> vector<4x8x8xf32>
    %52 = arith.truncf %51 : vector<4x8x8xf32> to vector<4x8x8xbf16>
    %53 = vector.extract_strided_slice %38 {offsets = [0, 0], sizes = [16, 8], strides = [1, 1]} : vector<16x32xf32> to vector<16x8xf32>
    %54 = vector.extract_strided_slice %38 {offsets = [0, 8], sizes = [16, 8], strides = [1, 1]} : vector<16x32xf32> to vector<16x8xf32>
    %55 = vector.extract_strided_slice %38 {offsets = [0, 16], sizes = [16, 8], strides = [1, 1]} : vector<16x32xf32> to vector<16x8xf32>
    %56 = vector.extract_strided_slice %38 {offsets = [0, 24], sizes = [16, 8], strides = [1, 1]} : vector<16x32xf32> to vector<16x8xf32>
    %57 = vector.shape_cast %53 : vector<16x8xf32> to vector<1x16x8xf32>
    %58 = vector.shape_cast %54 : vector<16x8xf32> to vector<1x16x8xf32>
    %59 = vector.shape_cast %55 : vector<16x8xf32> to vector<1x16x8xf32>
    %60 = vector.shape_cast %56 : vector<16x8xf32> to vector<1x16x8xf32>
    %61 = tpu.concatenate %57, %58, %59, %60 in 0 : vector<1x16x8xf32>, vector<1x16x8xf32>, vector<1x16x8xf32>, vector<1x16x8xf32> -> vector<4x16x8xf32>
    %62 = arith.truncf %61 : vector<4x16x8xf32> to vector<4x16x8xbf16>
    %63 = vector.extract_strided_slice %39 {offsets = [0, 0], sizes = [16, 8], strides = [1, 1]} : vector<16x32xf32> to vector<16x8xf32>
    %64 = vector.extract_strided_slice %39 {offsets = [0, 8], sizes = [16, 8], strides = [1, 1]} : vector<16x32xf32> to vector<16x8xf32>
    %65 = vector.extract_strided_slice %39 {offsets = [0, 16], sizes = [16, 8], strides = [1, 1]} : vector<16x32xf32> to vector<16x8xf32>
    %66 = vector.extract_strided_slice %39 {offsets = [0, 24], sizes = [16, 8], strides = [1, 1]} : vector<16x32xf32> to vector<16x8xf32>
    %67 = vector.shape_cast %63 : vector<16x8xf32> to vector<1x16x8xf32>
    %68 = vector.shape_cast %64 : vector<16x8xf32> to vector<1x16x8xf32>
    %69 = vector.shape_cast %65 : vector<16x8xf32> to vector<1x16x8xf32>
    %70 = vector.shape_cast %66 : vector<16x8xf32> to vector<1x16x8xf32>
    %71 = tpu.concatenate %67, %68, %69, %70 in 0 : vector<1x16x8xf32>, vector<1x16x8xf32>, vector<1x16x8xf32>, vector<1x16x8xf32> -> vector<4x16x8xf32>
    %72 = arith.truncf %71 : vector<4x16x8xf32> to vector<4x16x8xbf16>
    "tpu.trace_start"() <{level = 10 : i32, message = "hqd,hkd->hqk"}> : () -> ()
    %cst_26 = arith.constant dense<0.000000e+00> : vector<4x8x16xf32>
    %73 = tpu.matmul %52, %62, %cst_26 {dimension_numbers = #tpu.dot_dimension_numbers<[2], [2], [1], [1], [0, 0, 0, 1, 1, 1], [0], [0]>} : vector<4x8x8xbf16>, vector<4x16x8xbf16>, vector<4x8x16xf32> -> vector<4x8x16xf32>
    "tpu.trace_stop"() : () -> ()
    %cst_27 = arith.constant 0.353553385 : f32
    %74 = vector.broadcast %cst_27 : f32 to vector<4x8x16xf32>
    %75 = arith.mulf %73, %74 : vector<4x8x16xf32>
    %cst_28 = arith.constant 0.000000e+00 : f32
    %76 = vector.broadcast %cst_28 : f32 to vector<1x1x16xf32>
    %77 = arith.cmpf oeq, %42, %76 : vector<1x1x16xf32>
    %cst_29 = arith.constant -1.000000e+09 : f32
    %78 = vector.shape_cast %77 : vector<1x1x16xi1> to vector<1x1x16xi1>
    %79 = vector.broadcast %78 : vector<1x1x16xi1> to vector<4x8x16xi1>
    %80 = vector.broadcast %cst_29 : f32 to vector<4x8x16xf32>
    %81 = arith.select %79, %80, %75 : vector<4x8x16xi1>, vector<4x8x16xf32>
    %cst_30 = arith.constant dense<0xFF800000> : vector<4x8xf32>
    %82 = vector.multi_reduction <maximumf>, %81, %cst_30 [2] : vector<4x8x16xf32> to vector<4x8xf32>
    %83 = vector.shape_cast %82 : vector<4x8xf32> to vector<4x8x1xf32>
    %84 = vector.broadcast %83 : vector<4x8x1xf32> to vector<4x8x16xf32>
    %85 = arith.subf %81, %84 : vector<4x8x16xf32>
    %86 = math.exp %85 : vector<4x8x16xf32>
    %cst_31 = arith.constant dense<0.000000e+00> : vector<4x8xf32>
    %87 = vector.multi_reduction <add>, %86, %cst_31 [2] : vector<4x8x16xf32> to vector<4x8xf32>
    %88 = vector.shape_cast %87 : vector<4x8xf32> to vector<4x8x1xf32>
    %89 = tpu.reciprocal %88 {approx = true} : vector<4x8x1xf32> -> vector<4x8x1xf32>
    %90 = vector.broadcast %89 : vector<4x8x1xf32> to vector<4x8x16xf32>
    %91 = arith.mulf %86, %90 : vector<4x8x16xf32>
    %92 = arith.truncf %91 : vector<4x8x16xf32> to vector<4x8x16xbf16>
    "tpu.trace_start"() <{level = 10 : i32, message = "hqk,hkd->hqd"}> : () -> ()
    %cst_32 = arith.constant dense<0.000000e+00> : vector<4x8x8xf32>
    %93 = tpu.matmul %92, %72, %cst_32 {dimension_numbers = #tpu.dot_dimension_numbers<[2], [1], [1], [2], [0, 0, 0, 1, 1, 2], [0], [0]>} : vector<4x8x16xbf16>, vector<4x16x8xbf16>, vector<4x8x8xf32> -> vector<4x8x8xf32>
    "tpu.trace_stop"() : () -> ()
    %94 = vector.extract_strided_slice %93 {offsets = [0, 0, 0], sizes = [1, 8, 8], strides = [1, 1, 1]} : vector<4x8x8xf32> to vector<1x8x8xf32>
    %95 = vector.shape_cast %94 : vector<1x8x8xf32> to vector<8x8xf32>
    %96 = vector.extract_strided_slice %93 {offsets = [1, 0, 0], sizes = [1, 8, 8], strides = [1, 1, 1]} : vector<4x8x8xf32> to vector<1x8x8xf32>
    %97 = vector.shape_cast %96 : vector<1x8x8xf32> to vector<8x8xf32>
    %98 = vector.extract_strided_slice %93 {offsets = [2, 0, 0], sizes = [1, 8, 8], strides = [1, 1, 1]} : vector<4x8x8xf32> to vector<1x8x8xf32>
    %99 = vector.shape_cast %98 : vector<1x8x8xf32> to vector<8x8xf32>
    %100 = vector.extract_strided_slice %93 {offsets = [3, 0, 0], sizes = [1, 8, 8], strides = [1, 1, 1]} : vector<4x8x8xf32> to vector<1x8x8xf32>
    %101 = vector.shape_cast %100 : vector<1x8x8xf32> to vector<8x8xf32>
    %102 = tpu.concatenate %95, %97, %99, %101 in 1 : vector<8x8xf32>, vector<8x8xf32>, vector<8x8xf32>, vector<8x8xf32> -> vector<8x32xf32>
    %103 = arith.truncf %102 : vector<8x32xf32> to vector<8x32xbf16>
    %c0_33 = arith.constant 0 : index
    %c0_34 = arith.constant 0 : index
    %104 = vector.load %arg10[%c0_33, %c0_34] : memref<32x32xbf16, #tpu.memory_space<vmem>>, vector<32x32xbf16>
    %cst_35 = arith.constant dense<0.000000e+00> : vector<8x32xf32>
    %105 = tpu.matmul %103, %104, %cst_35 {dimension_numbers = #tpu.dot_dimension_numbers<[1], [0], [0], [1], [0, 0, 1, 1], [], []>} : vector<8x32xbf16>, vector<32x32xbf16>, vector<8x32xf32> -> vector<8x32xf32>
    %c0_36 = arith.constant 0 : index
    %c0_37 = arith.constant 0 : index
    %106 = vector.load %arg11[%c0_36, %c0_37] : memref<1x32xf32, #tpu.memory_space<vmem>>, vector<1x32xf32>
    %107 = vector.broadcast %106 : vector<1x32xf32> to vector<8x32xf32>
    %108 = arith.addf %105, %107 : vector<8x32xf32>
    %109 = arith.addf %1, %108 : vector<8x32xf32>
    %c0_38 = arith.constant 0 : index
    %c0_39 = arith.constant 0 : index
    %c0_40 = arith.constant 0 : index
    %110 = vector.load %arg12[%c0_38, %c0_39, %c0_40] : memref<1x8x32xf32, #tpu.memory_space<vmem>>, vector<1x8x32xf32>
    %111 = vector.shape_cast %110 : vector<1x8x32xf32> to vector<8x32xf32>
    %112 = vector.shape_cast %109 : vector<8x32xf32> to vector<1x8x32xf32>
    tpu.vector_store %arg12[%c0_38, %c0_39, %c0_40], %112 {strides = array<i32>} : memref<1x8x32xf32, #tpu.memory_space<vmem>>, vector<1x8x32xf32>,
    return
  }
  func.func @transform_0(%arg0: i32) -> (i32, i32, i32) {
    %c0_i32 = arith.constant 0 : i32
    %c0_i32_0 = arith.constant 0 : i32
    %c0_i32_1 = arith.constant 0 : i32
    return %arg0, %c0_i32, %c0_i32_0 : i32, i32, i32
  }
  func.func @transform_1(%arg0: i32) -> (i32, i32, i32) {
    %c0_i32 = arith.constant 0 : i32
    %c0_i32_0 = arith.constant 0 : i32
    %c0_i32_1 = arith.constant 0 : i32
    return %arg0, %c0_i32, %c0_i32_0 : i32, i32, i32
  }
  func.func @transform_2(%arg0: i32) -> (i32, i32, i32) {
    %c0_i32 = arith.constant 0 : i32
    %c0_i32_0 = arith.constant 0 : i32
    %c0_i32_1 = arith.constant 0 : i32
    return %arg0, %c0_i32, %c0_i32_0 : i32, i32, i32
  }
  func.func @transform_3(%arg0: i32) -> (i32, i32) {
    %c0_i32 = arith.constant 0 : i32
    %c0_i32_0 = arith.constant 0 : i32
    %c0_i32_1 = arith.constant 0 : i32
    return %c0_i32, %c0_i32_0 : i32, i32
  }
  func.func @transform_4(%arg0: i32) -> (i32, i32) {
    %c0_i32 = arith.constant 0 : i32
    %c0_i32_0 = arith.constant 0 : i32
    %c0_i32_1 = arith.constant 0 : i32
    return %c0_i32, %c0_i32_0 : i32, i32
  }
  func.func @transform_5(%arg0: i32) -> (i32, i32) {
    %c0_i32 = arith.constant 0 : i32
    %c0_i32_0 = arith.constant 0 : i32
    %c0_i32_1 = arith.constant 0 : i32
    return %c0_i32, %c0_i32_0 : i32, i32
  }
  func.func @transform_6(%arg0: i32) -> (i32, i32) {
    %c0_i32 = arith.constant 0 : i32
    %c0_i32_0 = arith.constant 0 : i32
    %c0_i32_1 = arith.constant 0 : i32
    return %c0_i32, %c0_i32_0 : i32, i32
  }
  func.func @transform_7(%arg0: i32) -> (i32, i32) {
    %c0_i32 = arith.constant 0 : i32
    %c0_i32_0 = arith.constant 0 : i32
    %c0_i32_1 = arith.constant 0 : i32
    return %c0_i32, %c0_i32_0 : i32, i32
  }
  func.func @transform_8(%arg0: i32) -> (i32, i32) {
    %c0_i32 = arith.constant 0 : i32
    %c0_i32_0 = arith.constant 0 : i32
    %c0_i32_1 = arith.constant 0 : i32
    return %c0_i32, %c0_i32_0 : i32, i32
  }
  func.func @transform_9(%arg0: i32) -> (i32, i32) {
    %c0_i32 = arith.constant 0 : i32
    %c0_i32_0 = arith.constant 0 : i32
    %c0_i32_1 = arith.constant 0 : i32
    return %c0_i32, %c0_i32_0 : i32, i32
  }
  func.func @transform_10(%arg0: i32) -> (i32, i32) {
    %c0_i32 = arith.constant 0 : i32
    %c0_i32_0 = arith.constant 0 : i32
    %c0_i32_1 = arith.constant 0 : i32
    return %c0_i32, %c0_i32_0 : i32, i32
  }
  func.func @transform_11(%arg0: i32) -> (i32, i32, i32) {
    %c0_i32 = arith.constant 0 : i32
    %c0_i32_0 = arith.constant 0 : i32
    %c0_i32_1 = arith.constant 0 : i32
    return %arg0, %c0_i32, %c0_i32_0 : i32, i32, i32
  }
}

module attributes {stable_mosaic.version = 11 : i64} {
  func.func @_ffn_sublayer_kernel(%arg0: i32, %arg1: memref<1x8x32xf32, #tpu.memory_space<vmem>>, %arg2: memref<1x32xf32, #tpu.memory_space<vmem>>, %arg3: memref<1x32xf32, #tpu.memory_space<vmem>>, %arg4: memref<32x64xbf16, #tpu.memory_space<vmem>>, %arg5: memref<1x64xf32, #tpu.memory_space<vmem>>, %arg6: memref<64x32xbf16, #tpu.memory_space<vmem>>, %arg7: memref<1x32xf32, #tpu.memory_space<vmem>>, %arg8: memref<1x8x32xf32, #tpu.memory_space<vmem>>) attributes {dimension_semantics = [#tpu.dimension_semantics<parallel>], iteration_bounds = array<i64: 2>, scalar_prefetch = 0 : i64, scratch_operands = 0 : i64, tpu.core_type = #tpu.core_type<tc>, window_params = [{transform_indices = @transform_0, window_bounds = array<i64: 1, 8, 32>}, {pipeline_mode = #tpu.pipeline_mode<synchronous>, transform_indices = @transform_1, window_bounds = array<i64: 1, 32>}, {pipeline_mode = #tpu.pipeline_mode<synchronous>, transform_indices = @transform_2, window_bounds = array<i64: 1, 32>}, {pipeline_mode = #tpu.pipeline_mode<synchronous>, transform_indices = @transform_3, window_bounds = array<i64: 32, 64>}, {pipeline_mode = #tpu.pipeline_mode<synchronous>, transform_indices = @transform_4, window_bounds = array<i64: 1, 64>}, {pipeline_mode = #tpu.pipeline_mode<synchronous>, transform_indices = @transform_5, window_bounds = array<i64: 64, 32>}, {pipeline_mode = #tpu.pipeline_mode<synchronous>, transform_indices = @transform_6, window_bounds = array<i64: 1, 32>}, {transform_indices = @transform_7, window_bounds = array<i64: 1, 8, 32>}]} {
    %c0 = arith.constant 0 : index
    %c0_0 = arith.constant 0 : index
    %c0_1 = arith.constant 0 : index
    %0 = vector.load %arg1[%c0, %c0_0, %c0_1] : memref<1x8x32xf32, #tpu.memory_space<vmem>>, vector<1x8x32xf32>
    %1 = vector.shape_cast %0 : vector<1x8x32xf32> to vector<8x32xf32>
    %c0_2 = arith.constant 0 : index
    %c0_3 = arith.constant 0 : index
    %2 = vector.load %arg2[%c0_2, %c0_3] : memref<1x32xf32, #tpu.memory_space<vmem>>, vector<1x32xf32>
    %c0_4 = arith.constant 0 : index
    %c0_5 = arith.constant 0 : index
    %3 = vector.load %arg3[%c0_4, %c0_5] : memref<1x32xf32, #tpu.memory_space<vmem>>, vector<1x32xf32>
    %cst = arith.constant dense<0.000000e+00> : vector<8xf32>
    %4 = vector.multi_reduction <add>, %1, %cst [1] : vector<8x32xf32> to vector<8xf32>
    %5 = vector.shape_cast %4 : vector<8xf32> to vector<8x1xf32>
    %cst_6 = arith.constant 3.200000e+01 : f32
    %6 = vector.broadcast %cst_6 : f32 to vector<8x1xf32>
    %7 = arith.divf %5, %6 : vector<8x1xf32>
    %8 = vector.broadcast %7 : vector<8x1xf32> to vector<8x32xf32>
    %9 = arith.subf %1, %8 : vector<8x32xf32>
    %10 = arith.mulf %9, %9 : vector<8x32xf32>
    %cst_7 = arith.constant dense<0.000000e+00> : vector<8xf32>
    %11 = vector.multi_reduction <add>, %10, %cst_7 [1] : vector<8x32xf32> to vector<8xf32>
    %12 = vector.shape_cast %11 : vector<8xf32> to vector<8x1xf32>
    %cst_8 = arith.constant 3.100000e+01 : f32
    %13 = vector.broadcast %cst_8 : f32 to vector<8x1xf32>
    %14 = arith.divf %12, %13 : vector<8x1xf32>
    %15 = vector.broadcast %2 : vector<1x32xf32> to vector<8x32xf32>
    %16 = arith.mulf %15, %9 : vector<8x32xf32>
    %17 = math.sqrt %14 : vector<8x1xf32>
    %cst_9 = arith.constant 9.99999997E-7 : f32
    %18 = vector.broadcast %cst_9 : f32 to vector<8x1xf32>
    %19 = arith.addf %17, %18 : vector<8x1xf32>
    %20 = vector.broadcast %19 : vector<8x1xf32> to vector<8x32xf32>
    %21 = arith.divf %16, %20 : vector<8x32xf32>
    %22 = vector.broadcast %3 : vector<1x32xf32> to vector<8x32xf32>
    %23 = arith.addf %21, %22 : vector<8x32xf32>
    %24 = arith.truncf %23 : vector<8x32xf32> to vector<8x32xbf16>
    %c0_10 = arith.constant 0 : index
    %c0_11 = arith.constant 0 : index
    %25 = vector.load %arg4[%c0_10, %c0_11] : memref<32x64xbf16, #tpu.memory_space<vmem>>, vector<32x64xbf16>
    %cst_12 = arith.constant dense<0.000000e+00> : vector<8x64xf32>
    %26 = tpu.matmul %24, %25, %cst_12 {dimension_numbers = #tpu.dot_dimension_numbers<[1], [0], [0], [1], [0, 0, 1, 1], [], []>} : vector<8x32xbf16>, vector<32x64xbf16>, vector<8x64xf32> -> vector<8x64xf32>
    %c0_13 = arith.constant 0 : index
    %c0_14 = arith.constant 0 : index
    %27 = vector.load %arg5[%c0_13, %c0_14] : memref<1x64xf32, #tpu.memory_space<vmem>>, vector<1x64xf32>
    %28 = vector.broadcast %27 : vector<1x64xf32> to vector<8x64xf32>
    %29 = arith.addf %26, %28 : vector<8x64xf32>
    %cst_15 = arith.constant 0.000000e+00 : f32
    %30 = vector.broadcast %cst_15 : f32 to vector<8x64xf32>
    %31 = arith.maximumf %29, %30 : vector<8x64xf32>
    %32 = arith.truncf %31 : vector<8x64xf32> to vector<8x64xbf16>
    %c0_16 = arith.constant 0 : index
    %c0_17 = arith.constant 0 : index
    %33 = vector.load %arg6[%c0_16, %c0_17] : memref<64x32xbf16, #tpu.memory_space<vmem>>, vector<64x32xbf16>
    %cst_18 = arith.constant dense<0.000000e+00> : vector<8x32xf32>
    %34 = tpu.matmul %32, %33, %cst_18 {dimension_numbers = #tpu.dot_dimension_numbers<[1], [0], [0], [1], [0, 0, 1, 1], [], []>} : vector<8x64xbf16>, vector<64x32xbf16>, vector<8x32xf32> -> vector<8x32xf32>
    %c0_19 = arith.constant 0 : index
    %c0_20 = arith.constant 0 : index
    %35 = vector.load %arg7[%c0_19, %c0_20] : memref<1x32xf32, #tpu.memory_space<vmem>>, vector<1x32xf32>
    %36 = vector.broadcast %35 : vector<1x32xf32> to vector<8x32xf32>
    %37 = arith.addf %34, %36 : vector<8x32xf32>
    %38 = arith.addf %1, %37 : vector<8x32xf32>
    %c0_21 = arith.constant 0 : index
    %c0_22 = arith.constant 0 : index
    %c0_23 = arith.constant 0 : index
    %39 = vector.load %arg8[%c0_21, %c0_22, %c0_23] : memref<1x8x32xf32, #tpu.memory_space<vmem>>, vector<1x8x32xf32>
    %40 = vector.shape_cast %39 : vector<1x8x32xf32> to vector<8x32xf32>
    %41 = vector.shape_cast %38 : vector<8x32xf32> to vector<1x8x32xf32>
    tpu.vector_store %arg8[%c0_21, %c0_22, %c0_23], %41 {strides = array<i32>} : memref<1x8x32xf32, #tpu.memory_space<vmem>>, vector<1x8x32xf32>,
    return
  }
  func.func @transform_0(%arg0: i32) -> (i32, i32, i32) {
    %c0_i32 = arith.constant 0 : i32
    %c0_i32_0 = arith.constant 0 : i32
    %c0_i32_1 = arith.constant 0 : i32
    return %arg0, %c0_i32, %c0_i32_0 : i32, i32, i32
  }
  func.func @transform_1(%arg0: i32) -> (i32, i32) {
    %c0_i32 = arith.constant 0 : i32
    %c0_i32_0 = arith.constant 0 : i32
    %c0_i32_1 = arith.constant 0 : i32
    return %c0_i32, %c0_i32_0 : i32, i32
  }
  func.func @transform_2(%arg0: i32) -> (i32, i32) {
    %c0_i32 = arith.constant 0 : i32
    %c0_i32_0 = arith.constant 0 : i32
    %c0_i32_1 = arith.constant 0 : i32
    return %c0_i32, %c0_i32_0 : i32, i32
  }
  func.func @transform_3(%arg0: i32) -> (i32, i32) {
    %c0_i32 = arith.constant 0 : i32
    %c0_i32_0 = arith.constant 0 : i32
    %c0_i32_1 = arith.constant 0 : i32
    return %c0_i32, %c0_i32_0 : i32, i32
  }
  func.func @transform_4(%arg0: i32) -> (i32, i32) {
    %c0_i32 = arith.constant 0 : i32
    %c0_i32_0 = arith.constant 0 : i32
    %c0_i32_1 = arith.constant 0 : i32
    return %c0_i32, %c0_i32_0 : i32, i32
  }
  func.func @transform_5(%arg0: i32) -> (i32, i32) {
    %c0_i32 = arith.constant 0 : i32
    %c0_i32_0 = arith.constant 0 : i32
    %c0_i32_1 = arith.constant 0 : i32
    return %c0_i32, %c0_i32_0 : i32, i32
  }
  func.func @transform_6(%arg0: i32) -> (i32, i32) {
    %c0_i32 = arith.constant 0 : i32
    %c0_i32_0 = arith.constant 0 : i32
    %c0_i32_1 = arith.constant 0 : i32
    return %c0_i32, %c0_i32_0 : i32, i32
  }
  func.func @transform_7(%arg0: i32) -> (i32, i32, i32) {
    %c0_i32 = arith.constant 0 : i32
    %c0_i32_0 = arith.constant 0 : i32
    %c0_i32_1 = arith.constant 0 : i32
    return %arg0, %c0_i32, %c0_i32_0 : i32, i32, i32
  }
}

module attributes {stable_mosaic.version = 11 : i64} {
  func.func @_final_ln_kernel(%arg0: i32, %arg1: memref<1x8x32xf32, #tpu.memory_space<vmem>>, %arg2: memref<1x32xf32, #tpu.memory_space<vmem>>, %arg3: memref<1x32xf32, #tpu.memory_space<vmem>>, %arg4: memref<1x8x32xf32, #tpu.memory_space<vmem>>) attributes {dimension_semantics = [#tpu.dimension_semantics<parallel>], iteration_bounds = array<i64: 2>, scalar_prefetch = 0 : i64, scratch_operands = 0 : i64, tpu.core_type = #tpu.core_type<tc>, window_params = [{transform_indices = @transform_0, window_bounds = array<i64: 1, 8, 32>}, {pipeline_mode = #tpu.pipeline_mode<synchronous>, transform_indices = @transform_1, window_bounds = array<i64: 1, 32>}, {pipeline_mode = #tpu.pipeline_mode<synchronous>, transform_indices = @transform_2, window_bounds = array<i64: 1, 32>}, {transform_indices = @transform_3, window_bounds = array<i64: 1, 8, 32>}]} {
    %c0 = arith.constant 0 : index
    %c0_0 = arith.constant 0 : index
    %c0_1 = arith.constant 0 : index
    %0 = vector.load %arg1[%c0, %c0_0, %c0_1] : memref<1x8x32xf32, #tpu.memory_space<vmem>>, vector<1x8x32xf32>
    %1 = vector.shape_cast %0 : vector<1x8x32xf32> to vector<8x32xf32>
    %c0_2 = arith.constant 0 : index
    %c0_3 = arith.constant 0 : index
    %2 = vector.load %arg2[%c0_2, %c0_3] : memref<1x32xf32, #tpu.memory_space<vmem>>, vector<1x32xf32>
    %c0_4 = arith.constant 0 : index
    %c0_5 = arith.constant 0 : index
    %3 = vector.load %arg3[%c0_4, %c0_5] : memref<1x32xf32, #tpu.memory_space<vmem>>, vector<1x32xf32>
    %cst = arith.constant dense<0.000000e+00> : vector<8xf32>
    %4 = vector.multi_reduction <add>, %1, %cst [1] : vector<8x32xf32> to vector<8xf32>
    %5 = vector.shape_cast %4 : vector<8xf32> to vector<8x1xf32>
    %cst_6 = arith.constant 3.200000e+01 : f32
    %6 = vector.broadcast %cst_6 : f32 to vector<8x1xf32>
    %7 = arith.divf %5, %6 : vector<8x1xf32>
    %8 = vector.broadcast %7 : vector<8x1xf32> to vector<8x32xf32>
    %9 = arith.subf %1, %8 : vector<8x32xf32>
    %10 = arith.mulf %9, %9 : vector<8x32xf32>
    %cst_7 = arith.constant dense<0.000000e+00> : vector<8xf32>
    %11 = vector.multi_reduction <add>, %10, %cst_7 [1] : vector<8x32xf32> to vector<8xf32>
    %12 = vector.shape_cast %11 : vector<8xf32> to vector<8x1xf32>
    %cst_8 = arith.constant 3.100000e+01 : f32
    %13 = vector.broadcast %cst_8 : f32 to vector<8x1xf32>
    %14 = arith.divf %12, %13 : vector<8x1xf32>
    %15 = vector.broadcast %2 : vector<1x32xf32> to vector<8x32xf32>
    %16 = arith.mulf %15, %9 : vector<8x32xf32>
    %17 = math.sqrt %14 : vector<8x1xf32>
    %cst_9 = arith.constant 9.99999997E-7 : f32
    %18 = vector.broadcast %cst_9 : f32 to vector<8x1xf32>
    %19 = arith.addf %17, %18 : vector<8x1xf32>
    %20 = vector.broadcast %19 : vector<8x1xf32> to vector<8x32xf32>
    %21 = arith.divf %16, %20 : vector<8x32xf32>
    %22 = vector.broadcast %3 : vector<1x32xf32> to vector<8x32xf32>
    %23 = arith.addf %21, %22 : vector<8x32xf32>
    %c0_10 = arith.constant 0 : index
    %c0_11 = arith.constant 0 : index
    %c0_12 = arith.constant 0 : index
    %24 = vector.load %arg4[%c0_10, %c0_11, %c0_12] : memref<1x8x32xf32, #tpu.memory_space<vmem>>, vector<1x8x32xf32>
    %25 = vector.shape_cast %24 : vector<1x8x32xf32> to vector<8x32xf32>
    %26 = vector.shape_cast %23 : vector<8x32xf32> to vector<1x8x32xf32>
    tpu.vector_store %arg4[%c0_10, %c0_11, %c0_12], %26 {strides = array<i32>} : memref<1x8x32xf32, #tpu.memory_space<vmem>>, vector<1x8x32xf32>,
    return
  }
  func.func @transform_0(%arg0: i32) -> (i32, i32, i32) {
    %c0_i32 = arith.constant 0 : i32
    %c0_i32_0 = arith.constant 0 : i32
    %c0_i32_1 = arith.constant 0 : i32
    return %arg0, %c0_i32, %c0_i32_0 : i32, i32, i32
  }
  func.func @transform_1(%arg0: i32) -> (i32, i32) {
    %c0_i32 = arith.constant 0 : i32
    %c0_i32_0 = arith.constant 0 : i32
    %c0_i32_1 = arith.constant 0 : i32
    return %c0_i32, %c0_i32_0 : i32, i32
  }
  func.func @transform_2(%arg0: i32) -> (i32, i32) {
    %c0_i32 = arith.constant 0 : i32
    %c0_i32_0 = arith.constant 0 : i32
    %c0_i32_1 = arith.constant 0 : i32
    return %c0_i32, %c0_i32_0 : i32, i32
  }
  func.func @transform_3(%arg0: i32) -> (i32, i32, i32) {
    %c0_i32 = arith.constant 0 : i32
    %c0_i32_0 = arith.constant 0 : i32
    %c0_i32_1 = arith.constant 0 : i32
    return %arg0, %c0_i32, %c0_i32_0 : i32, i32, i32
  }
}

</mosaic_0001>

<llo_original>
// kernel: decoder_forward.13
$region0: #{decoder_forward.13}
  #allocation0 [shape = 'u32[]', space=smem, size = 0x4, offset = 0x4, fixed_abs, tag = 'smem constant byte address 0x4 - core index']
  #allocation1 [shape = 'u32[144,128]{1,0:T(1,128)}', space=vmem, size = 0x12000, scoped, tag = 'internal scratch']
  %s0 = inlined_call_operand.vmem [shape: f32[2,8,32], index: 0, kind: input, shape index: {}]
  %s1 = inlined_call_operand.vmem [shape: f32[1,32], index: 1, kind: input, shape index: {}]
  %s2 = inlined_call_operand.vmem [shape: f32[1,32], index: 2, kind: input, shape index: {}]
  %s3 = inlined_call_operand.hbm [shape: f32[2,8,32], index: 3, kind: output, shape index: {}]
  %s4 = sld [smem:[#allocation0]]
  $region45: #{decoder_forward.13} parent=0
    _
  %s6 = ssub.s32 1, %s4
  %s7 = scalar_select 0, %s6, %s4
  $region1: #{decoder_forward.13} parent=0
    #allocation2 [shape = 'u8[8192]{0}', space=vmem, size = 0x2000, scoped, tag = 'output window, operand 0']
    #allocation3 [shape = 's32[2]{0}', space=sflag, size = 0x8, scoped, tag = 'scoped memory for decoder_forward.13']
    %8 = vsyncpa [#allocation3], 0
    %s9 = scalar_lea.sflag [#allocation3], 1
    %10 = vsyncpa %s9, 0
    loop: start=0, step=1, limit=4
    $region2: #{decoder_forward.13} parent=1 // loop_pre_header
      _
    $region3: #{decoder_forward.13} parent=1 // loop_header
      %s12 = sphi 0, %s16
      %p13 = scmp.ge.s32.totalorder %s12, 4
      %s22 = sphi 0, %s24
      %s25 = sphi 0, %s22
      %s26 = sphi 0, %s25
      %s42 = sphi 0, %s26
      %s46 = sphi 0, %s46
      %s48 = sphi 0, %s46
      %s49 = sphi 0, %s48
      %s63 = sphi 0, %s49
      %s67 = sphi 0, %s67
      %s69 = sphi 0, %s67
      %s70 = sphi 0, %s69
      %s84 = sphi 0, %s70
      %s90 = sphi 0, %s92
      %s93 = sphi 0, %s90
      %s94 = sphi 0, %s93
      %s110 = sphi 0, %s94
    $region4: #{decoder_forward.13} parent=1 // loop_header_branch
      %15 = sbr.rel (%p13) target = $region8
    $region5: #{decoder_forward.13} parent=1 // loop_body
      %s17 = ssub.s32 %s12, 1
      %s18 = ssub.s32 %s12, 2
      %s19 = sadd.s32 %s12, 1
      %s20 = ssub.s32 %s12, %s19
      %p21 = scmp.eq.s32.totalorder %s20, 0
      %s23 = sadd.s32 %s22, 1
      %s24 = scalar_select %p21, %s22, %s23
      %p27 = pneg %p21
      %p28 = scmp.eq.s32.totalorder %s12, 1
      %p29 = por %p27, %p28
      %p30 = scmp.ne.s32.totalorder %s22, %s25
      %p31 = scmp.eq.s32.totalorder %s12, 0
      %p32 = por %p30, %p31
      %p33 = scmp.ne.s32.totalorder %s22, %s25
      %p34 = scmp.eq.s32.totalorder %s17, 1
      %p35 = por %p33, %p34
      %p36 = scmp.ne.s32.totalorder %s25, %s26
      %p37 = scmp.eq.s32.totalorder %s17, 0
      %p38 = por %p36, %p37
      %p39 = scmp.ne.s32.totalorder %s25, %s26
      %p40 = scmp.eq.s32.totalorder %s18, 1
      %p41 = por %p39, %p40
      %p43 = scmp.ne.s32.totalorder %s26, %s42
      %p44 = scmp.eq.s32.totalorder %s18, 0
      %p45 = por %p43, %p44
      %s47 = sadd.s32 %s46, 1
      %p50 = scmp.eq.s32.totalorder %s12, 1
      %p51 = scmp.ne.s32.totalorder %s46, %s48
      %p52 = scmp.eq.s32.totalorder %s12, 0
      %p53 = por %p51, %p52
      %p54 = scmp.ne.s32.totalorder %s46, %s48
      %p55 = scmp.eq.s32.totalorder %s17, 1
      %p56 = por %p54, %p55
      %p57 = scmp.ne.s32.totalorder %s48, %s49
      %p58 = scmp.eq.s32.totalorder %s17, 0
      %p59 = por %p57, %p58
      %p60 = scmp.ne.s32.totalorder %s48, %s49
      %p61 = scmp.eq.s32.totalorder %s18, 1
      %p62 = por %p60, %p61
      %p64 = scmp.ne.s32.totalorder %s49, %s63
      %p65 = scmp.eq.s32.totalorder %s18, 0
      %p66 = por %p64, %p65
      %s68 = sadd.s32 %s67, 1
      %p71 = scmp.eq.s32.totalorder %s12, 1
      %p72 = scmp.ne.s32.totalorder %s67, %s69
      %p73 = scmp.eq.s32.totalorder %s12, 0
      %p74 = por %p72, %p73
      %p75 = scmp.ne.s32.totalorder %s67, %s69
      %p76 = scmp.eq.s32.totalorder %s17, 1
      %p77 = por %p75, %p76
      %p78 = scmp.ne.s32.totalorder %s69, %s70
      %p79 = scmp.eq.s32.totalorder %s17, 0
      %p80 = por %p78, %p79
      %p81 = scmp.ne.s32.totalorder %s69, %s70
      %p82 = scmp.eq.s32.totalorder %s18, 1
      %p83 = por %p81, %p82
      %p85 = scmp.ne.s32.totalorder %s70, %s84
      %p86 = scmp.eq.s32.totalorder %s18, 0
      %p87 = por %p85, %p86
      %s88 = ssub.s32 %s12, %s19
      %p89 = scmp.eq.s32.totalorder %s88, 0
      %s91 = sadd.s32 %s90, 1
      %s92 = scalar_select %p89, %s90, %s91
      %p95 = pneg %p89
      %p96 = scmp.eq.s32.totalorder %s12, 1
      %p97 = por %p95, %p96
      %p98 = scmp.ne.s32.totalorder %s90, %s93
      %p99 = scmp.eq.s32.totalorder %s12, 0
      %p100 = por %p98, %p99
      %p101 = scmp.ne.s32.totalorder %s90, %s93
      %p102 = scmp.eq.s32.totalorder %s17, 1
      %p103 = por %p101, %p102
      %p104 = scmp.ne.s32.totalorder %s93, %s94
      %p105 = scmp.eq.s32.totalorder %s17, 0
      %p106 = por %p104, %p105
      %p107 = scmp.ne.s32.totalorder %s93, %s94
      %p108 = scmp.eq.s32.totalorder %s18, 1
      %p109 = por %p107, %p108
      %p111 = scmp.ne.s32.totalorder %s94, %s110
      %p112 = scmp.eq.s32.totalorder %s18, 0
      %p113 = por %p111, %p112
      %p114 = scmp.le.s32.totalorder 1, %s12
      %p115 = scmp.lt.s32.totalorder %s12, 3
      %p116 = pnand %p114, %p115
      %p117 = pneg %p116
      // Predicated region
      $region9: #{decoder_forward.13} parent=5 // pred_check
        _
      $region10: #{decoder_forward.13} parent=5 // pred_check_branch
        %119 = sbr.rel (%p116) target = $region12
      $region11: #{decoder_forward.13} parent=5 // pred_region
        %s120 = ssub.s32 %s12, 1
        // Predicated region
        $region13: #{decoder_forward.13} parent=11 // pred_check
          %p121 = pneg %p59
        $region14: #{decoder_forward.13} parent=11 // pred_check_branch
          %123 = sbr.rel (%p121) target = $region16
        $region15: #{decoder_forward.13} parent=11 // pred_region
          _
        $region16: #{decoder_forward.13} parent=11 // pred_fallthru
          _
        // Predicated region
        $region17: #{decoder_forward.13} parent=11 // pred_check
          %p124 = pneg %p80
        $region18: #{decoder_forward.13} parent=11 // pred_check_branch
          %126 = sbr.rel (%p124) target = $region20
        $region19: #{decoder_forward.13} parent=11 // pred_region
          _
        $region20: #{decoder_forward.13} parent=11 // pred_fallthru
          _
      $region12: #{decoder_forward.13} parent=5 // pred_fallthru
        _
      %p127 = scmp.lt.s32.totalorder %s12, 2
      // Predicated region
      $region21: #{decoder_forward.13} parent=5 // pred_check
        %p128 = pneg %p127
      $region22: #{decoder_forward.13} parent=5 // pred_check_branch
        %130 = sbr.rel (%p128) target = $region24
      $region23: #{decoder_forward.13} parent=5 // pred_region
        // Predicated region
        $region25: #{decoder_forward.13} parent=23 // pred_check
          %p131 = pneg %p32
        $region26: #{decoder_forward.13} parent=23 // pred_check_branch
          %133 = sbr.rel (%p131) target = $region28
        $region27: #{decoder_forward.13} parent=23 // pred_region
          %p134 = scmp.lt.s32.totalorder %s12, 1
          %s135 = scalar_select %p134, %s12, 1
          %s136 = smul.addr %s135, 8
          %s137 = scalar_lea.vmem %s0, %s136
        $region28: #{decoder_forward.13} parent=23 // pred_fallthru
          _
      $region24: #{decoder_forward.13} parent=5 // pred_fallthru
        _
      %p138 = scmp.le.s32.totalorder 1, %s12
      %p139 = scmp.lt.s32.totalorder %s12, 3
      %p140 = pnand %p138, %p139
      %p141 = pneg %p140
      // Predicated region
      $region29: #{decoder_forward.13} parent=5 // pred_check
        _
      $region30: #{decoder_forward.13} parent=5 // pred_check_branch
        %143 = sbr.rel (%p140) target = $region32
      $region31: #{decoder_forward.13} parent=5 // pred_region
        %s144 = ssub.s32 %s12, 1
        %p145 = scmp.lt.s32.totalorder %s17, 1
        %s146 = scalar_select %p145, %s17, 1
        %s147 = smul.addr %s146, 8
        %s148 = scalar_lea.vmem %s0, %s147
        %p149 = pneg %p38
        %p150 = pneg %p35
        %p151 = pneg %p59
        %p152 = pneg %p56
        %p153 = pneg %p80
        %p154 = pneg %p77
        %p155 = pneg %p106
        %p156 = pneg %p103
        %s157 = sand.u32 %s93, 1
        %s158 = scalar_lea.sflag [#allocation3], %s157
        %s159 = sand.u32 %s93, 1
        %s160 = smul.addr %s159, 8
        %s161 = scalar_lea.vmem [#allocation2], %s160
        %p162 = scmp.lt.s32.totalorder %s17, 1
        %s163 = scalar_select %p162, %s17, 1
        %s164 = smul.addr %s163, 8
        %s165 = scalar_lea.vmem %s0, %s164
        %v166 = vld [vmem:[%s165] sm:$0xff]
        %v167 = vld [vmem:[%s1] sm:$0x1]
        %v168 = vld [vmem:[%s2] sm:$0x1]
        %vm169 = vcmask 261120
        %v170 = vsel %vm169, %v166, 0.0
        %171 = vadd.xlane.f32.xlu0 %v170
        %v172 = vpop.xlane.xlu0 %171
        %v173 = vrcp.pop 32.0
        %v174 = vmul.f32 %v172, %v173
        %v175 = vsub.f32 %v166, %v174
        %v176 = vmul.f32 %v175, %v175
        %v177 = vsel %vm169, %v176, 0.0
        %178 = vadd.xlane.f32.xlu0 %v177
        %v179 = vpop.xlane.xlu0 %178
        %v180 = vrcp.pop 31.0
        %v181 = vmul.f32 %v179, %v180
        %v183 = vlaneseq
        %v184 = vshrl.u32 %v183, 7
        %v185 = vsub.s32 0, %v184
        %v186 = vrot.slane %v167, %v185
        %v188 = vmul.f32 %v186, %v175
        %v189 = vrsqrt.pop %v181
        %v190 = vmul.f32 %v181, %v189
        %vm191 = vcmp.eq.f32.partialorder %v181, inf
        %v192 = vsel %vm191, %v181, %v190
        %vm193 = vcmp.eq.f32.partialorder %v181, 0.0
        %v194 = vand.u32 %v181, 2147483648
        %v195 = vsel %vm193, %v194, %v192
        %v196 = vadd.f32 %v195, 1e-06
        %v197 = vrcp.pop %v196
        %v198 = vmul.f32 %v188, %v197
        %v200 = vlaneseq
        %v201 = vshrl.u32 %v200, 7
        %v202 = vsub.s32 0, %v201
        %v203 = vrot.slane %v168, %v202
        %v205 = vadd.f32 %v198, %v203
        %206 = vst.msk [vmem:[%s161] sm:$0xff] %vm169, %v205
        %s207 = sand.u32 %s93, 1
        %s208 = scalar_lea.sflag [#allocation3], %s207
        %s209 = sand.u32 %s93, 1
        %s210 = smul.addr %s209, 8
        %s211 = scalar_lea.vmem [#allocation2], %s210
        // Predicated region
        $region33: #{decoder_forward.13} parent=31 // pred_check
          %p212 = pneg %p103
        $region34: #{decoder_forward.13} parent=31 // pred_check_branch
          %214 = sbr.rel (%p212) target = $region36
        $region35: #{decoder_forward.13} parent=31 // pred_region
          %s216 = ssub.s32 128, 128
          %217 = vsyncadd %s208, %s216
          %s218 = smul.addr %s17, 128
          %s219 = scalar_lea.hbm %s3, %s218
          %s221 = sshll.u32 %s211, 4
          %s222 = int_to_ptr.vmem [resolvable:$true] %s221
          %224 = dma.vmem_to_hbm [thread:$0]  %s222, 128, %s219, %s208
        $region36: #{decoder_forward.13} parent=31 // pred_fallthru
          _
      $region32: #{decoder_forward.13} parent=5 // pred_fallthru
        _
      %p225 = scmp.le.s32.totalorder 2, %s12
      // Predicated region
      $region37: #{decoder_forward.13} parent=5 // pred_check
        %p226 = pneg %p225
      $region38: #{decoder_forward.13} parent=5 // pred_check_branch
        %228 = sbr.rel (%p226) target = $region40
      $region39: #{decoder_forward.13} parent=5 // pred_region
        %s229 = ssub.s32 %s12, 2
        // Predicated region
        $region41: #{decoder_forward.13} parent=39 // pred_check
          %p230 = pneg %p109
        $region42: #{decoder_forward.13} parent=39 // pred_check_branch
          %232 = sbr.rel (%p230) target = $region44
        $region43: #{decoder_forward.13} parent=39 // pred_region
          %s233 = sand.u32 %s94, 1
          %s234 = scalar_lea.sflag [#allocation3], %s233
          %s235 = sand.u32 %s94, 1
          %s236 = smul.addr %s235, 8
          %s237 = scalar_lea.vmem [#allocation2], %s236
          %238 = dma.done %s234, 128
        $region44: #{decoder_forward.13} parent=39 // pred_fallthru
          _
      $region40: #{decoder_forward.13} parent=5 // pred_fallthru
        _
    $region6: #{decoder_forward.13} parent=1 // loop_footer
      %s16 = sadd.s32 1, %s12
    $region7: #{decoder_forward.13} parent=1 // loop_footer_branch
      %11 = sbr.rel target = $region3
    $region8: #{decoder_forward.13} parent=1 // loop_exit
      _
    %239 = vsyncpa [#allocation3], 1
    %s240 = scalar_lea.sflag [#allocation3], 1
    %241 = vsyncpa %s240, 1

// kernel: decoder_forward.9
$region0: #{decoder_forward.9}
  #allocation0 [shape = 'u32[]', space=smem, size = 0x4, offset = 0x4, fixed_abs, tag = 'smem constant byte address 0x4 - core index']
  #allocation1 [shape = 'u32[144,128]{1,0:T(1,128)}', space=vmem, size = 0x12000, scoped, tag = 'internal scratch']
  %s0 = inlined_call_operand.vmem [shape: f32[2,8,32], index: 0, kind: input, shape index: {}]
  %s1 = inlined_call_operand.vmem [shape: f32[1,32], index: 1, kind: input, shape index: {}]
  %s2 = inlined_call_operand.vmem [shape: f32[1,32], index: 2, kind: input, shape index: {}]
  %s3 = inlined_call_operand.vmem [shape: bf16[32,64], index: 3, kind: input, shape index: {}]
  %s4 = inlined_call_operand.vmem [shape: f32[1,64], index: 4, kind: input, shape index: {}]
  %s5 = inlined_call_operand.vmem [shape: bf16[64,32], index: 5, kind: input, shape index: {}]
  %s6 = inlined_call_operand.vmem [shape: f32[1,32], index: 6, kind: input, shape index: {}]
  %s7 = inlined_call_operand.vmem [shape: f32[2,8,32], index: 7, kind: output, shape index: {}]
  %s8 = sld [smem:[#allocation0]]
  $region61: #{decoder_forward.9} parent=0
    _
  %s10 = ssub.s32 1, %s8
  %s11 = scalar_select 0, %s10, %s8
  loop: start=0, step=1, limit=4
  $region2: #{decoder_forward.9} parent=0 // loop_pre_header
    _
  $region3: #{decoder_forward.9} parent=0 // loop_header
    %s13 = sphi 0, %s17
    %p14 = scmp.ge.s32.totalorder %s13, 4
    %s23 = sphi 0, %s25
    %s26 = sphi 0, %s23
    %s27 = sphi 0, %s26
    %s43 = sphi 0, %s27
    %s47 = sphi 0, %s47
    %s49 = sphi 0, %s47
    %s50 = sphi 0, %s49
    %s64 = sphi 0, %s50
    %s68 = sphi 0, %s68
    %s70 = sphi 0, %s68
    %s71 = sphi 0, %s70
    %s85 = sphi 0, %s71
    %s89 = sphi 0, %s89
    %s91 = sphi 0, %s89
    %s92 = sphi 0, %s91
    %s106 = sphi 0, %s92
    %s110 = sphi 0, %s110
    %s112 = sphi 0, %s110
    %s113 = sphi 0, %s112
    %s127 = sphi 0, %s113
    %s131 = sphi 0, %s131
    %s133 = sphi 0, %s131
    %s134 = sphi 0, %s133
    %s148 = sphi 0, %s134
    %s152 = sphi 0, %s152
    %s154 = sphi 0, %s152
    %s155 = sphi 0, %s154
    %s169 = sphi 0, %s155
    %s175 = sphi 0, %s177
    %s178 = sphi 0, %s175
    %s179 = sphi 0, %s178
    %s195 = sphi 0, %s179
  $region4: #{decoder_forward.9} parent=0 // loop_header_branch
    %16 = sbr.rel (%p14) target = $region8
  $region5: #{decoder_forward.9} parent=0 // loop_body
    %s18 = ssub.s32 %s13, 1
    %s19 = ssub.s32 %s13, 2
    %s20 = sadd.s32 %s13, 1
    %s21 = ssub.s32 %s13, %s20
    %p22 = scmp.eq.s32.totalorder %s21, 0
    %s24 = sadd.s32 %s23, 1
    %s25 = scalar_select %p22, %s23, %s24
    %p28 = pneg %p22
    %p29 = scmp.eq.s32.totalorder %s13, 1
    %p30 = por %p28, %p29
    %p31 = scmp.ne.s32.totalorder %s23, %s26
    %p32 = scmp.eq.s32.totalorder %s13, 0
    %p33 = por %p31, %p32
    %p34 = scmp.ne.s32.totalorder %s23, %s26
    %p35 = scmp.eq.s32.totalorder %s18, 1
    %p36 = por %p34, %p35
    %p37 = scmp.ne.s32.totalorder %s26, %s27
    %p38 = scmp.eq.s32.totalorder %s18, 0
    %p39 = por %p37, %p38
    %p40 = scmp.ne.s32.totalorder %s26, %s27
    %p41 = scmp.eq.s32.totalorder %s19, 1
    %p42 = por %p40, %p41
    %p44 = scmp.ne.s32.totalorder %s27, %s43
    %p45 = scmp.eq.s32.totalorder %s19, 0
    %p46 = por %p44, %p45
    %s48 = sadd.s32 %s47, 1
    %p51 = scmp.eq.s32.totalorder %s13, 1
    %p52 = scmp.ne.s32.totalorder %s47, %s49
    %p53 = scmp.eq.s32.totalorder %s13, 0
    %p54 = por %p52, %p53
    %p55 = scmp.ne.s32.totalorder %s47, %s49
    %p56 = scmp.eq.s32.totalorder %s18, 1
    %p57 = por %p55, %p56
    %p58 = scmp.ne.s32.totalorder %s49, %s50
    %p59 = scmp.eq.s32.totalorder %s18, 0
    %p60 = por %p58, %p59
    %p61 = scmp.ne.s32.totalorder %s49, %s50
    %p62 = scmp.eq.s32.totalorder %s19, 1
    %p63 = por %p61, %p62
    %p65 = scmp.ne.s32.totalorder %s50, %s64
    %p66 = scmp.eq.s32.totalorder %s19, 0
    %p67 = por %p65, %p66
    %s69 = sadd.s32 %s68, 1
    %p72 = scmp.eq.s32.totalorder %s13, 1
    %p73 = scmp.ne.s32.totalorder %s68, %s70
    %p74 = scmp.eq.s32.totalorder %s13, 0
    %p75 = por %p73, %p74
    %p76 = scmp.ne.s32.totalorder %s68, %s70
    %p77 = scmp.eq.s32.totalorder %s18, 1
    %p78 = por %p76, %p77
    %p79 = scmp.ne.s32.totalorder %s70, %s71
    %p80 = scmp.eq.s32.totalorder %s18, 0
    %p81 = por %p79, %p80
    %p82 = scmp.ne.s32.totalorder %s70, %s71
    %p83 = scmp.eq.s32.totalorder %s19, 1
    %p84 = por %p82, %p83
    %p86 = scmp.ne.s32.totalorder %s71, %s85
    %p87 = scmp.eq.s32.totalorder %s19, 0
    %p88 = por %p86, %p87
    %s90 = sadd.s32 %s89, 1
    %p93 = scmp.eq.s32.totalorder %s13, 1
    %p94 = scmp.ne.s32.totalorder %s89, %s91
    %p95 = scmp.eq.s32.totalorder %s13, 0
    %p96 = por %p94, %p95
    %p97 = scmp.ne.s32.totalorder %s89, %s91
    %p98 = scmp.eq.s32.totalorder %s18, 1
    %p99 = por %p97, %p98
    %p100 = scmp.ne.s32.totalorder %s91, %s92
    %p101 = scmp.eq.s32.totalorder %s18, 0
    %p102 = por %p100, %p101
    %p103 = scmp.ne.s32.totalorder %s91, %s92
    %p104 = scmp.eq.s32.totalorder %s19, 1
    %p105 = por %p103, %p104
    %p107 = scmp.ne.s32.totalorder %s92, %s106
    %p108 = scmp.eq.s32.totalorder %s19, 0
    %p109 = por %p107, %p108
    %s111 = sadd.s32 %s110, 1
    %p114 = scmp.eq.s32.totalorder %s13, 1
    %p115 = scmp.ne.s32.totalorder %s110, %s112
    %p116 = scmp.eq.s32.totalorder %s13, 0
    %p117 = por %p115, %p116
    %p118 = scmp.ne.s32.totalorder %s110, %s112
    %p119 = scmp.eq.s32.totalorder %s18, 1
    %p120 = por %p118, %p119
    %p121 = scmp.ne.s32.totalorder %s112, %s113
    %p122 = scmp.eq.s32.totalorder %s18, 0
    %p123 = por %p121, %p122
    %p124 = scmp.ne.s32.totalorder %s112, %s113
    %p125 = scmp.eq.s32.totalorder %s19, 1
    %p126 = por %p124, %p125
    %p128 = scmp.ne.s32.totalorder %s113, %s127
    %p129 = scmp.eq.s32.totalorder %s19, 0
    %p130 = por %p128, %p129
    %s132 = sadd.s32 %s131, 1
    %p135 = scmp.eq.s32.totalorder %s13, 1
    %p136 = scmp.ne.s32.totalorder %s131, %s133
    %p137 = scmp.eq.s32.totalorder %s13, 0
    %p138 = por %p136, %p137
    %p139 = scmp.ne.s32.totalorder %s131, %s133
    %p140 = scmp.eq.s32.totalorder %s18, 1
    %p141 = por %p139, %p140
    %p142 = scmp.ne.s32.totalorder %s133, %s134
    %p143 = scmp.eq.s32.totalorder %s18, 0
    %p144 = por %p142, %p143
    %p145 = scmp.ne.s32.totalorder %s133, %s134
    %p146 = scmp.eq.s32.totalorder %s19, 1
    %p147 = por %p145, %p146
    %p149 = scmp.ne.s32.totalorder %s134, %s148
    %p150 = scmp.eq.s32.totalorder %s19, 0
    %p151 = por %p149, %p150
    %s153 = sadd.s32 %s152, 1
    %p156 = scmp.eq.s32.totalorder %s13, 1
    %p157 = scmp.ne.s32.totalorder %s152, %s154
    %p158 = scmp.eq.s32.totalorder %s13, 0
    %p159 = por %p157, %p158
    %p160 = scmp.ne.s32.totalorder %s152, %s154
    %p161 = scmp.eq.s32.totalorder %s18, 1
    %p162 = por %p160, %p161
    %p163 = scmp.ne.s32.totalorder %s154, %s155
    %p164 = scmp.eq.s32.totalorder %s18, 0
    %p165 = por %p163, %p164
    %p166 = scmp.ne.s32.totalorder %s154, %s155
    %p167 = scmp.eq.s32.totalorder %s19, 1
    %p168 = por %p166, %p167
    %p170 = scmp.ne.s32.totalorder %s155, %s169
    %p171 = scmp.eq.s32.totalorder %s19, 0
    %p172 = por %p170, %p171
    %s173 = ssub.s32 %s13, %s20
    %p174 = scmp.eq.s32.totalorder %s173, 0
    %s176 = sadd.s32 %s175, 1
    %s177 = scalar_select %p174, %s175, %s176
    %p180 = pneg %p174
    %p181 = scmp.eq.s32.totalorder %s13, 1
    %p182 = por %p180, %p181
    %p183 = scmp.ne.s32.totalorder %s175, %s178
    %p184 = scmp.eq.s32.totalorder %s13, 0
    %p185 = por %p183, %p184
    %p186 = scmp.ne.s32.totalorder %s175, %s178
    %p187 = scmp.eq.s32.totalorder %s18, 1
    %p188 = por %p186, %p187
    %p189 = scmp.ne.s32.totalorder %s178, %s179
    %p190 = scmp.eq.s32.totalorder %s18, 0
    %p191 = por %p189, %p190
    %p192 = scmp.ne.s32.totalorder %s178, %s179
    %p193 = scmp.eq.s32.totalorder %s19, 1
    %p194 = por %p192, %p193
    %p196 = scmp.ne.s32.totalorder %s179, %s195
    %p197 = scmp.eq.s32.totalorder %s19, 0
    %p198 = por %p196, %p197
    %p199 = scmp.le.s32.totalorder 1, %s13
    %p200 = scmp.lt.s32.totalorder %s13, 3
    %p201 = pnand %p199, %p200
    %p202 = pneg %p201
    // Predicated region
    $region9: #{decoder_forward.9} parent=5 // pred_check
      _
    $region10: #{decoder_forward.9} parent=5 // pred_check_branch
      %204 = sbr.rel (%p201) target = $region12
    $region11: #{decoder_forward.9} parent=5 // pred_region
      %s205 = ssub.s32 %s13, 1
      // Predicated region
      $region13: #{decoder_forward.9} parent=11 // pred_check
        %p206 = pneg %p60
      $region14: #{decoder_forward.9} parent=11 // pred_check_branch
        %208 = sbr.rel (%p206) target = $region16
      $region15: #{decoder_forward.9} parent=11 // pred_region
        _
      $region16: #{decoder_forward.9} parent=11 // pred_fallthru
        _
      // Predicated region
      $region17: #{decoder_forward.9} parent=11 // pred_check
        %p209 = pneg %p81
      $region18: #{decoder_forward.9} parent=11 // pred_check_branch
        %211 = sbr.rel (%p209) target = $region20
      $region19: #{decoder_forward.9} parent=11 // pred_region
        _
      $region20: #{decoder_forward.9} parent=11 // pred_fallthru
        _
      // Predicated region
      $region21: #{decoder_forward.9} parent=11 // pred_check
        %p212 = pneg %p102
      $region22: #{decoder_forward.9} parent=11 // pred_check_branch
        %214 = sbr.rel (%p212) target = $region24
      $region23: #{decoder_forward.9} parent=11 // pred_region
        _
      $region24: #{decoder_forward.9} parent=11 // pred_fallthru
        _
      // Predicated region
      $region25: #{decoder_forward.9} parent=11 // pred_check
        %p215 = pneg %p123
      $region26: #{decoder_forward.9} parent=11 // pred_check_branch
        %217 = sbr.rel (%p215) target = $region28
      $region27: #{decoder_forward.9} parent=11 // pred_region
        _
      $region28: #{decoder_forward.9} parent=11 // pred_fallthru
        _
      // Predicated region
      $region29: #{decoder_forward.9} parent=11 // pred_check
        %p218 = pneg %p144
      $region30: #{decoder_forward.9} parent=11 // pred_check_branch
        %220 = sbr.rel (%p218) target = $region32
      $region31: #{decoder_forward.9} parent=11 // pred_region
        _
      $region32: #{decoder_forward.9} parent=11 // pred_fallthru
        _
      // Predicated region
      $region33: #{decoder_forward.9} parent=11 // pred_check
        %p221 = pneg %p165
      $region34: #{decoder_forward.9} parent=11 // pred_check_branch
        %223 = sbr.rel (%p221) target = $region36
      $region35: #{decoder_forward.9} parent=11 // pred_region
        _
      $region36: #{decoder_forward.9} parent=11 // pred_fallthru
        _
    $region12: #{decoder_forward.9} parent=5 // pred_fallthru
      _
    %p224 = scmp.lt.s32.totalorder %s13, 2
    // Predicated region
    $region37: #{decoder_forward.9} parent=5 // pred_check
      %p225 = pneg %p224
    $region38: #{decoder_forward.9} parent=5 // pred_check_branch
      %227 = sbr.rel (%p225) target = $region40
    $region39: #{decoder_forward.9} parent=5 // pred_region
      // Predicated region
      $region41: #{decoder_forward.9} parent=39 // pred_check
        %p228 = pneg %p33
      $region42: #{decoder_forward.9} parent=39 // pred_check_branch
        %230 = sbr.rel (%p228) target = $region44
      $region43: #{decoder_forward.9} parent=39 // pred_region
        %p231 = scmp.lt.s32.totalorder %s13, 1
        %s232 = scalar_select %p231, %s13, 1
        %s233 = smul.addr %s232, 8
        %s234 = scalar_lea.vmem %s0, %s233
      $region44: #{decoder_forward.9} parent=39 // pred_fallthru
        _
    $region40: #{decoder_forward.9} parent=5 // pred_fallthru
      _
    %p235 = scmp.le.s32.totalorder 1, %s13
    %p236 = scmp.lt.s32.totalorder %s13, 3
    %p237 = pnand %p235, %p236
    %p238 = pneg %p237
    // Predicated region
    $region45: #{decoder_forward.9} parent=5 // pred_check
      _
    $region46: #{decoder_forward.9} parent=5 // pred_check_branch
      %240 = sbr.rel (%p237) target = $region48
    $region47: #{decoder_forward.9} parent=5 // pred_region
      %s241 = ssub.s32 %s13, 1
      %p242 = scmp.lt.s32.totalorder %s18, 1
      %s243 = scalar_select %p242, %s18, 1
      %s244 = smul.addr %s243, 8
      %s245 = scalar_lea.vmem %s0, %s244
      %p246 = pneg %p39
      %p247 = pneg %p36
      %p248 = pneg %p60
      %p249 = pneg %p57
      %p250 = pneg %p81
      %p251 = pneg %p78
      %p252 = pneg %p102
      %p253 = pneg %p99
      %p254 = pneg %p123
      %p255 = pneg %p120
      %p256 = pneg %p144
      %p257 = pneg %p141
      %p258 = pneg %p165
      %p259 = pneg %p162
      %p260 = pneg %p191
      %p261 = pneg %p188
      %p262 = scmp.lt.s32.totalorder %s18, 1
      %s263 = scalar_select %p262, %s18, 1
      %s264 = smul.addr %s263, 8
      %s265 = scalar_lea.vmem %s7, %s264
      %p266 = scmp.lt.s32.totalorder %s18, 1
      %s267 = scalar_select %p266, %s18, 1
      %s268 = smul.addr %s267, 8
      %s269 = scalar_lea.vmem %s0, %s268
      %p270 = scmp.lt.s32.totalorder %s18, 1
      %s271 = scalar_select %p270, %s18, 1
      %s272 = smul.addr %s271, 8
      %s273 = scalar_lea.vmem %s7, %s272
      %v275 = vld [vmem:[%s269] sm:$0xff]
      %v276 = vld [vmem:[%s1] sm:$0x1]
      %v277 = vld [vmem:[%s2] sm:$0x1]
      %vm278 = vcmask 261120
      %v279 = vsel %vm278, %v275, 0.0
      %280 = vadd.xlane.f32.xlu0 %v279
      %v281 = vpop.xlane.xlu0 %280
      %v282 = vrcp.pop 32.0
      %v283 = vmul.f32 %v281, %v282
      %v284 = vsub.f32 %v275, %v283
      %v285 = vmul.f32 %v284, %v284
      %v286 = vsel %vm278, %v285, 0.0
      %287 = vadd.xlane.f32.xlu0 %v286
      %v288 = vpop.xlane.xlu0 %287
      %v289 = vrcp.pop 31.0
      %v290 = vmul.f32 %v288, %v289
      %v292 = vlaneseq
      %v293 = vshrl.u32 %v292, 7
      %v294 = vsub.s32 0, %v293
      %v295 = vrot.slane %v276, %v294
      %v297 = vmul.f32 %v295, %v284
      %v298 = vrsqrt.pop %v290
      %v299 = vmul.f32 %v290, %v298
      %vm300 = vcmp.eq.f32.partialorder %v290, inf
      %v301 = vsel %vm300, %v290, %v299
      %vm302 = vcmp.eq.f32.partialorder %v290, 0.0
      %v303 = vand.u32 %v290, 2147483648
      %v304 = vsel %vm302, %v303, %v301
      %v305 = vadd.f32 %v304, 1e-06
      %v306 = vrcp.pop %v305
      %v307 = vmul.f32 %v297, %v306
      %v309 = vlaneseq
      %v310 = vshrl.u32 %v309, 7
      %v311 = vsub.s32 0, %v310
      %v312 = vrot.slane %v277, %v311
      %v314 = vadd.f32 %v307, %v312
      %v315 = vpack.c.bf16 %v314, %v314
      %v316 = vld [vmem:[%s3] sm:$0xf]
      %v317 = vld [vmem:[%s3 + $0x4] sm:$0xf]
      %v318 = vld [vmem:[%s3 + $0x8] sm:$0xf]
      %v319 = vld [vmem:[%s3 + $0xc] sm:$0xf]
      %v320 = vld [vmem:[%s4] sm:$0x1]
      %v322 = vlaneseq
      %v323 = vshrl.u32 %v322, 7
      %v324 = vsub.s32 0, %v323
      %v325 = vrot.slane %v320, %v324
      %v331 = vunpack.c.l.b16 %v316
      %v332 = vunpack.c.l.b16 %v317
      %v333 = vunpack.c.l.b16 %v318
      %v334 = vunpack.c.l.b16 %v319
      %v335 = vpack.c.b16 %v332, %v331
      %v336 = vpack.c.b16 %v334, %v333
      %v340 = vsel %vm278, %v315, 0
      %342 = vmatprep.subr.bf16.mxu0 0
      %343 = vmatpush1.bf16.msra.mxu0 %v335
      %344 = vmatprep.subr.bf16.mxu0 0
      %345 = vmatpush1.bf16.msra.mxu0 %v336
      %346 = vmatprep.subr.bf16.mxu0 0
      %347 = vmatpush1.bf16.msra.mxu0 0
      %348 = vmatprep.subr.bf16.mxu0 0
      %349 = vmatpush1.bf16.msra.mxu0 0
      %350 = vmatprep.subr.bf16.mxu0 0
      %351 = vmatpush1.bf16.msra.mxu0 0
      %352 = vmatprep.subr.bf16.mxu0 0
      %353 = vmatpush1.bf16.msra.mxu0 0
      %354 = vmatprep.subr.bf16.mxu0 0
      %355 = vmatpush1.bf16.msra.mxu0 0
      %356 = vmatprep.subr.bf16.mxu0 0
      %357 = vmatpush1.bf16.msra.mxu0 0
      %358 = vmatprep.subr.bf16.mxu0 0
      %359 = vmatpush1.bf16.msra.mxu0 0
      %360 = vmatprep.subr.bf16.mxu0 0
      %361 = vmatpush1.bf16.msra.mxu0 0
      %362 = vmatprep.subr.bf16.mxu0 0
      %363 = vmatpush1.bf16.msra.mxu0 0
      %364 = vmatprep.subr.bf16.mxu0 0
      %365 = vmatpush1.bf16.msra.mxu0 0
      %366 = vmatprep.subr.bf16.mxu0 0
      %367 = vmatpush1.bf16.msra.mxu0 0
      %368 = vmatprep.subr.bf16.mxu0 0
      %369 = vmatpush1.bf16.msra.mxu0 0
      %370 = vmatprep.subr.bf16.mxu0 0
      %371 = vmatpush1.bf16.msra.mxu0 0
      %372 = vmatprep.subr.bf16.mxu0 0
      %373 = vmatpush1.bf16.msra.mxu0 0
      %374 = vmatprep.mubr.bf16.mxu0 0
      %375 = vmatmul.mubr.bf16.gmra.mrb[0].mxu0 %v340
      %v376 = vpop.f32.mrb[0].mxu0
      %v377 = vadd.f32 %v325, %v376
      %v378 = vpop.f32.mrb[0].mxu0
      %v379 = vpop.f32.mrb[0].mxu0
      %v380 = vpop.f32.mrb[0].mxu0
      %381 = vdwg.mxu0
      %v382 = vmax.f32 %v377, 0.0
      %v383 = vpack.c.bf16 %v382, %v382
      %v384 = vld [vmem:[%s5] sm:$0xf]
      %v385 = vld [vmem:[%s5 + $0x4] sm:$0xf]
      %v386 = vld [vmem:[%s5 + $0x8] sm:$0xf]
      %v387 = vld [vmem:[%s5 + $0xc] sm:$0xf]
      %v388 = vld [vmem:[%s5 + $0x10] sm:$0xf]
      %v389 = vld [vmem:[%s5 + $0x14] sm:$0xf]
      %v390 = vld [vmem:[%s5 + $0x18] sm:$0xf]
      %v391 = vld [vmem:[%s5 + $0x1c] sm:$0xf]
      %v392 = vld [vmem:[%s6] sm:$0x1]
      %v394 = vlaneseq
      %v395 = vshrl.u32 %v394, 7
      %v396 = vsub.s32 0, %v395
      %v397 = vrot.slane %v392, %v396
      %v407 = vunpack.c.l.b16 %v384
      %v408 = vunpack.c.l.b16 %v385
      %v409 = vunpack.c.l.b16 %v386
      %v410 = vunpack.c.l.b16 %v387
      %v411 = vunpack.c.l.b16 %v388
      %v412 = vunpack.c.l.b16 %v389
      %v413 = vunpack.c.l.b16 %v390
      %v414 = vunpack.c.l.b16 %v391
      %v415 = vpack.c.b16 %v408, %v407
      %v416 = vpack.c.b16 %v410, %v409
      %v417 = vpack.c.b16 %v412, %v411
      %v418 = vpack.c.b16 %v414, %v413
      %vm423 = vcmask 523264
      %v425 = vsel %vm423, %v383, 0
      %427 = vmatprep.subr.bf16.mxu0 0
      %428 = vmatpush1.bf16.msra.mxu0 %v415
      %429 = vmatprep.subr.bf16.mxu0 0
      %430 = vmatpush1.bf16.msra.mxu0 %v416
      %431 = vmatprep.subr.bf16.mxu0 0
      %432 = vmatpush1.bf16.msra.mxu0 %v417
      %433 = vmatprep.subr.bf16.mxu0 0
      %434 = vmatpush1.bf16.msra.mxu0 %v418
      %435 = vmatprep.subr.bf16.mxu0 0
      %436 = vmatpush1.bf16.msra.mxu0 0
      %437 = vmatprep.subr.bf16.mxu0 0
      %438 = vmatpush1.bf16.msra.mxu0 0
      %439 = vmatprep.subr.bf16.mxu0 0
      %440 = vmatpush1.bf16.msra.mxu0 0
      %441 = vmatprep.subr.bf16.mxu0 0
      %442 = vmatpush1.bf16.msra.mxu0 0
      %443 = vmatprep.subr.bf16.mxu0 0
      %444 = vmatpush1.bf16.msra.mxu0 0
      %445 = vmatprep.subr.bf16.mxu0 0
      %446 = vmatpush1.bf16.msra.mxu0 0
      %447 = vmatprep.subr.bf16.mxu0 0
      %448 = vmatpush1.bf16.msra.mxu0 0
      %449 = vmatprep.subr.bf16.mxu0 0
      %450 = vmatpush1.bf16.msra.mxu0 0
      %451 = vmatprep.subr.bf16.mxu0 0
      %452 = vmatpush1.bf16.msra.mxu0 0
      %453 = vmatprep.subr.bf16.mxu0 0
      %454 = vmatpush1.bf16.msra.mxu0 0
      %455 = vmatprep.subr.bf16.mxu0 0
      %456 = vmatpush1.bf16.msra.mxu0 0
      %457 = vmatprep.subr.bf16.mxu0 0
      %458 = vmatpush1.bf16.msra.mxu0 0
      %459 = vmatprep.mubr.bf16.mxu0 0
      %460 = vmatmul.mubr.bf16.gmra.mrb[0].mxu0 %v425
      %v461 = vpop.f32.mrb[0].mxu0
      %v462 = vadd.f32 %v397, %v461
      %v463 = vpop.f32.mrb[0].mxu0
      %v464 = vpop.f32.mrb[0].mxu0
      %v465 = vpop.f32.mrb[0].mxu0
      %466 = vdwg.mxu0
      %v467 = vadd.f32 %v275, %v462
      %468 = vst.msk [vmem:[%s273] sm:$0xff] %vm278, %v467
      %p469 = scmp.lt.s32.totalorder %s18, 1
      %s470 = scalar_select %p469, %s18, 1
      %s471 = smul.addr %s470, 8
      %s472 = scalar_lea.vmem %s7, %s471
      // Predicated region
      $region49: #{decoder_forward.9} parent=47 // pred_check
        %p473 = pneg %p188
      $region50: #{decoder_forward.9} parent=47 // pred_check_branch
        %475 = sbr.rel (%p473) target = $region52
      $region51: #{decoder_forward.9} parent=47 // pred_region
        _
      $region52: #{decoder_forward.9} parent=47 // pred_fallthru
        _
    $region48: #{decoder_forward.9} parent=5 // pred_fallthru
      _
    %p476 = scmp.le.s32.totalorder 2, %s13
    // Predicated region
    $region53: #{decoder_forward.9} parent=5 // pred_check
      %p477 = pneg %p476
    $region54: #{decoder_forward.9} parent=5 // pred_check_branch
      %479 = sbr.rel (%p477) target = $region56
    $region55: #{decoder_forward.9} parent=5 // pred_region
      %s480 = ssub.s32 %s13, 2
      // Predicated region
      $region57: #{decoder_forward.9} parent=55 // pred_check
        %p481 = pneg %p194
      $region58: #{decoder_forward.9} parent=55 // pred_check_branch
        %483 = sbr.rel (%p481) target = $region60
      $region59: #{decoder_forward.9} parent=55 // pred_region
        %p484 = scmp.lt.s32.totalorder %s19, 1
        %s485 = scalar_select %p484, %s19, 1
        %s486 = smul.addr %s485, 8
        %s487 = scalar_lea.vmem %s7, %s486
      $region60: #{decoder_forward.9} parent=55 // pred_fallthru
        _
    $region56: #{decoder_forward.9} parent=5 // pred_fallthru
      _
  $region6: #{decoder_forward.9} parent=0 // loop_footer
    %s17 = sadd.s32 1, %s13
  $region7: #{decoder_forward.9} parent=0 // loop_footer_branch
    %12 = sbr.rel target = $region3
  $region8: #{decoder_forward.9} parent=0 // loop_exit
    _

// kernel: decoder_forward.7
$region0: #{decoder_forward.7}
  #allocation0 [shape = 'u32[]', space=smem, size = 0x4, offset = 0x4, fixed_abs, tag = 'smem constant byte address 0x4 - core index']
  #allocation1 [shape = 'u32[144,128]{1,0:T(1,128)}', space=vmem, size = 0x12000, scoped, tag = 'internal scratch']
  %s0 = inlined_call_operand.vmem [shape: f32[2,8,32], index: 0, kind: input, shape index: {}]
  %s1 = inlined_call_operand.vmem [shape: f32[2,8,8], index: 1, kind: input, shape index: {}]
  %s2 = inlined_call_operand.vmem [shape: f32[1,32], index: 2, kind: input, shape index: {}]
  %s3 = inlined_call_operand.vmem [shape: f32[1,32], index: 3, kind: input, shape index: {}]
  %s4 = inlined_call_operand.vmem [shape: bf16[32,96], index: 4, kind: input, shape index: {}]
  %s5 = inlined_call_operand.vmem [shape: f32[1,96], index: 5, kind: input, shape index: {}]
  %s6 = inlined_call_operand.vmem [shape: bf16[32,32], index: 6, kind: input, shape index: {}]
  %s7 = inlined_call_operand.vmem [shape: f32[1,32], index: 7, kind: input, shape index: {}]
  %s8 = inlined_call_operand.vmem [shape: f32[2,8,32], index: 8, kind: output, shape index: {}]
  %s9 = sld [smem:[#allocation0]]
  $region65: #{decoder_forward.7} parent=0
    _
  %s11 = ssub.s32 1, %s9
  %s12 = scalar_select 0, %s11, %s9
  loop: start=0, step=1, limit=4
  $region2: #{decoder_forward.7} parent=0 // loop_pre_header
    _
  $region3: #{decoder_forward.7} parent=0 // loop_header
    %s14 = sphi 0, %s18
    %p15 = scmp.ge.s32.totalorder %s14, 4
    %s24 = sphi 0, %s26
    %s27 = sphi 0, %s24
    %s28 = sphi 0, %s27
    %s44 = sphi 0, %s28
    %s50 = sphi 0, %s52
    %s53 = sphi 0, %s50
    %s54 = sphi 0, %s53
    %s70 = sphi 0, %s54
    %s74 = sphi 0, %s74
    %s76 = sphi 0, %s74
    %s77 = sphi 0, %s76
    %s91 = sphi 0, %s77
    %s95 = sphi 0, %s95
    %s97 = sphi 0, %s95
    %s98 = sphi 0, %s97
    %s112 = sphi 0, %s98
    %s116 = sphi 0, %s116
    %s118 = sphi 0, %s116
    %s119 = sphi 0, %s118
    %s133 = sphi 0, %s119
    %s137 = sphi 0, %s137
    %s139 = sphi 0, %s137
    %s140 = sphi 0, %s139
    %s154 = sphi 0, %s140
    %s158 = sphi 0, %s158
    %s160 = sphi 0, %s158
    %s161 = sphi 0, %s160
    %s175 = sphi 0, %s161
    %s179 = sphi 0, %s179
    %s181 = sphi 0, %s179
    %s182 = sphi 0, %s181
    %s196 = sphi 0, %s182
    %s202 = sphi 0, %s204
    %s205 = sphi 0, %s202
    %s206 = sphi 0, %s205
    %s222 = sphi 0, %s206
  $region4: #{decoder_forward.7} parent=0 // loop_header_branch
    %17 = sbr.rel (%p15) target = $region8
  $region5: #{decoder_forward.7} parent=0 // loop_body
    %s19 = ssub.s32 %s14, 1
    %s20 = ssub.s32 %s14, 2
    %s21 = sadd.s32 %s14, 1
    %s22 = ssub.s32 %s14, %s21
    %p23 = scmp.eq.s32.totalorder %s22, 0
    %s25 = sadd.s32 %s24, 1
    %s26 = scalar_select %p23, %s24, %s25
    %p29 = pneg %p23
    %p30 = scmp.eq.s32.totalorder %s14, 1
    %p31 = por %p29, %p30
    %p32 = scmp.ne.s32.totalorder %s24, %s27
    %p33 = scmp.eq.s32.totalorder %s14, 0
    %p34 = por %p32, %p33
    %p35 = scmp.ne.s32.totalorder %s24, %s27
    %p36 = scmp.eq.s32.totalorder %s19, 1
    %p37 = por %p35, %p36
    %p38 = scmp.ne.s32.totalorder %s27, %s28
    %p39 = scmp.eq.s32.totalorder %s19, 0
    %p40 = por %p38, %p39
    %p41 = scmp.ne.s32.totalorder %s27, %s28
    %p42 = scmp.eq.s32.totalorder %s20, 1
    %p43 = por %p41, %p42
    %p45 = scmp.ne.s32.totalorder %s28, %s44
    %p46 = scmp.eq.s32.totalorder %s20, 0
    %p47 = por %p45, %p46
    %s48 = ssub.s32 %s14, %s21
    %p49 = scmp.eq.s32.totalorder %s48, 0
    %s51 = sadd.s32 %s50, 1
    %s52 = scalar_select %p49, %s50, %s51
    %p55 = pneg %p49
    %p56 = scmp.eq.s32.totalorder %s14, 1
    %p57 = por %p55, %p56
    %p58 = scmp.ne.s32.totalorder %s50, %s53
    %p59 = scmp.eq.s32.totalorder %s14, 0
    %p60 = por %p58, %p59
    %p61 = scmp.ne.s32.totalorder %s50, %s53
    %p62 = scmp.eq.s32.totalorder %s19, 1
    %p63 = por %p61, %p62
    %p64 = scmp.ne.s32.totalorder %s53, %s54
    %p65 = scmp.eq.s32.totalorder %s19, 0
    %p66 = por %p64, %p65
    %p67 = scmp.ne.s32.totalorder %s53, %s54
    %p68 = scmp.eq.s32.totalorder %s20, 1
    %p69 = por %p67, %p68
    %p71 = scmp.ne.s32.totalorder %s54, %s70
    %p72 = scmp.eq.s32.totalorder %s20, 0
    %p73 = por %p71, %p72
    %s75 = sadd.s32 %s74, 1
    %p78 = scmp.eq.s32.totalorder %s14, 1
    %p79 = scmp.ne.s32.totalorder %s74, %s76
    %p80 = scmp.eq.s32.totalorder %s14, 0
    %p81 = por %p79, %p80
    %p82 = scmp.ne.s32.totalorder %s74, %s76
    %p83 = scmp.eq.s32.totalorder %s19, 1
    %p84 = por %p82, %p83
    %p85 = scmp.ne.s32.totalorder %s76, %s77
    %p86 = scmp.eq.s32.totalorder %s19, 0
    %p87 = por %p85, %p86
    %p88 = scmp.ne.s32.totalorder %s76, %s77
    %p89 = scmp.eq.s32.totalorder %s20, 1
    %p90 = por %p88, %p89
    %p92 = scmp.ne.s32.totalorder %s77, %s91
    %p93 = scmp.eq.s32.totalorder %s20, 0
    %p94 = por %p92, %p93
    %s96 = sadd.s32 %s95, 1
    %p99 = scmp.eq.s32.totalorder %s14, 1
    %p100 = scmp.ne.s32.totalorder %s95, %s97
    %p101 = scmp.eq.s32.totalorder %s14, 0
    %p102 = por %p100, %p101
    %p103 = scmp.ne.s32.totalorder %s95, %s97
    %p104 = scmp.eq.s32.totalorder %s19, 1
    %p105 = por %p103, %p104
    %p106 = scmp.ne.s32.totalorder %s97, %s98
    %p107 = scmp.eq.s32.totalorder %s19, 0
    %p108 = por %p106, %p107
    %p109 = scmp.ne.s32.totalorder %s97, %s98
    %p110 = scmp.eq.s32.totalorder %s20, 1
    %p111 = por %p109, %p110
    %p113 = scmp.ne.s32.totalorder %s98, %s112
    %p114 = scmp.eq.s32.totalorder %s20, 0
    %p115 = por %p113, %p114
    %s117 = sadd.s32 %s116, 1
    %p120 = scmp.eq.s32.totalorder %s14, 1
    %p121 = scmp.ne.s32.totalorder %s116, %s118
    %p122 = scmp.eq.s32.totalorder %s14, 0
    %p123 = por %p121, %p122
    %p124 = scmp.ne.s32.totalorder %s116, %s118
    %p125 = scmp.eq.s32.totalorder %s19, 1
    %p126 = por %p124, %p125
    %p127 = scmp.ne.s32.totalorder %s118, %s119
    %p128 = scmp.eq.s32.totalorder %s19, 0
    %p129 = por %p127, %p128
    %p130 = scmp.ne.s32.totalorder %s118, %s119
    %p131 = scmp.eq.s32.totalorder %s20, 1
    %p132 = por %p130, %p131
    %p134 = scmp.ne.s32.totalorder %s119, %s133
    %p135 = scmp.eq.s32.totalorder %s20, 0
    %p136 = por %p134, %p135
    %s138 = sadd.s32 %s137, 1
    %p141 = scmp.eq.s32.totalorder %s14, 1
    %p142 = scmp.ne.s32.totalorder %s137, %s139
    %p143 = scmp.eq.s32.totalorder %s14, 0
    %p144 = por %p142, %p143
    %p145 = scmp.ne.s32.totalorder %s137, %s139
    %p146 = scmp.eq.s32.totalorder %s19, 1
    %p147 = por %p145, %p146
    %p148 = scmp.ne.s32.totalorder %s139, %s140
    %p149 = scmp.eq.s32.totalorder %s19, 0
    %p150 = por %p148, %p149
    %p151 = scmp.ne.s32.totalorder %s139, %s140
    %p152 = scmp.eq.s32.totalorder %s20, 1
    %p153 = por %p151, %p152
    %p155 = scmp.ne.s32.totalorder %s140, %s154
    %p156 = scmp.eq.s32.totalorder %s20, 0
    %p157 = por %p155, %p156
    %s159 = sadd.s32 %s158, 1
    %p162 = scmp.eq.s32.totalorder %s14, 1
    %p163 = scmp.ne.s32.totalorder %s158, %s160
    %p164 = scmp.eq.s32.totalorder %s14, 0
    %p165 = por %p163, %p164
    %p166 = scmp.ne.s32.totalorder %s158, %s160
    %p167 = scmp.eq.s32.totalorder %s19, 1
    %p168 = por %p166, %p167
    %p169 = scmp.ne.s32.totalorder %s160, %s161
    %p170 = scmp.eq.s32.totalorder %s19, 0
    %p171 = por %p169, %p170
    %p172 = scmp.ne.s32.totalorder %s160, %s161
    %p173 = scmp.eq.s32.totalorder %s20, 1
    %p174 = por %p172, %p173
    %p176 = scmp.ne.s32.totalorder %s161, %s175
    %p177 = scmp.eq.s32.totalorder %s20, 0
    %p178 = por %p176, %p177
    %s180 = sadd.s32 %s179, 1
    %p183 = scmp.eq.s32.totalorder %s14, 1
    %p184 = scmp.ne.s32.totalorder %s179, %s181
    %p185 = scmp.eq.s32.totalorder %s14, 0
    %p186 = por %p184, %p185
    %p187 = scmp.ne.s32.totalorder %s179, %s181
    %p188 = scmp.eq.s32.totalorder %s19, 1
    %p189 = por %p187, %p188
    %p190 = scmp.ne.s32.totalorder %s181, %s182
    %p191 = scmp.eq.s32.totalorder %s19, 0
    %p192 = por %p190, %p191
    %p193 = scmp.ne.s32.totalorder %s181, %s182
    %p194 = scmp.eq.s32.totalorder %s20, 1
    %p195 = por %p193, %p194
    %p197 = scmp.ne.s32.totalorder %s182, %s196
    %p198 = scmp.eq.s32.totalorder %s20, 0
    %p199 = por %p197, %p198
    %s200 = ssub.s32 %s14, %s21
    %p201 = scmp.eq.s32.totalorder %s200, 0
    %s203 = sadd.s32 %s202, 1
    %s204 = scalar_select %p201, %s202, %s203
    %p207 = pneg %p201
    %p208 = scmp.eq.s32.totalorder %s14, 1
    %p209 = por %p207, %p208
    %p210 = scmp.ne.s32.totalorder %s202, %s205
    %p211 = scmp.eq.s32.totalorder %s14, 0
    %p212 = por %p210, %p211
    %p213 = scmp.ne.s32.totalorder %s202, %s205
    %p214 = scmp.eq.s32.totalorder %s19, 1
    %p215 = por %p213, %p214
    %p216 = scmp.ne.s32.totalorder %s205, %s206
    %p217 = scmp.eq.s32.totalorder %s19, 0
    %p218 = por %p216, %p217
    %p219 = scmp.ne.s32.totalorder %s205, %s206
    %p220 = scmp.eq.s32.totalorder %s20, 1
    %p221 = por %p219, %p220
    %p223 = scmp.ne.s32.totalorder %s206, %s222
    %p224 = scmp.eq.s32.totalorder %s20, 0
    %p225 = por %p223, %p224
    %p226 = scmp.le.s32.totalorder 1, %s14
    %p227 = scmp.lt.s32.totalorder %s14, 3
    %p228 = pnand %p226, %p227
    %p229 = pneg %p228
    // Predicated region
    $region9: #{decoder_forward.7} parent=5 // pred_check
      _
    $region10: #{decoder_forward.7} parent=5 // pred_check_branch
      %231 = sbr.rel (%p228) target = $region12
    $region11: #{decoder_forward.7} parent=5 // pred_region
      %s232 = ssub.s32 %s14, 1
      // Predicated region
      $region13: #{decoder_forward.7} parent=11 // pred_check
        %p233 = pneg %p87
      $region14: #{decoder_forward.7} parent=11 // pred_check_branch
        %235 = sbr.rel (%p233) target = $region16
      $region15: #{decoder_forward.7} parent=11 // pred_region
        _
      $region16: #{decoder_forward.7} parent=11 // pred_fallthru
        _
      // Predicated region
      $region17: #{decoder_forward.7} parent=11 // pred_check
        %p236 = pneg %p108
      $region18: #{decoder_forward.7} parent=11 // pred_check_branch
        %238 = sbr.rel (%p236) target = $region20
      $region19: #{decoder_forward.7} parent=11 // pred_region
        _
      $region20: #{decoder_forward.7} parent=11 // pred_fallthru
        _
      // Predicated region
      $region21: #{decoder_forward.7} parent=11 // pred_check
        %p239 = pneg %p129
      $region22: #{decoder_forward.7} parent=11 // pred_check_branch
        %241 = sbr.rel (%p239) target = $region24
      $region23: #{decoder_forward.7} parent=11 // pred_region
        _
      $region24: #{decoder_forward.7} parent=11 // pred_fallthru
        _
      // Predicated region
      $region25: #{decoder_forward.7} parent=11 // pred_check
        %p242 = pneg %p150
      $region26: #{decoder_forward.7} parent=11 // pred_check_branch
        %244 = sbr.rel (%p242) target = $region28
      $region27: #{decoder_forward.7} parent=11 // pred_region
        _
      $region28: #{decoder_forward.7} parent=11 // pred_fallthru
        _
      // Predicated region
      $region29: #{decoder_forward.7} parent=11 // pred_check
        %p245 = pneg %p171
      $region30: #{decoder_forward.7} parent=11 // pred_check_branch
        %247 = sbr.rel (%p245) target = $region32
      $region31: #{decoder_forward.7} parent=11 // pred_region
        _
      $region32: #{decoder_forward.7} parent=11 // pred_fallthru
        _
      // Predicated region
      $region33: #{decoder_forward.7} parent=11 // pred_check
        %p248 = pneg %p192
      $region34: #{decoder_forward.7} parent=11 // pred_check_branch
        %250 = sbr.rel (%p248) target = $region36
      $region35: #{decoder_forward.7} parent=11 // pred_region
        _
      $region36: #{decoder_forward.7} parent=11 // pred_fallthru
        _
    $region12: #{decoder_forward.7} parent=5 // pred_fallthru
      _
    %p251 = scmp.lt.s32.totalorder %s14, 2
    // Predicated region
    $region37: #{decoder_forward.7} parent=5 // pred_check
      %p252 = pneg %p251
    $region38: #{decoder_forward.7} parent=5 // pred_check_branch
      %254 = sbr.rel (%p252) target = $region40
    $region39: #{decoder_forward.7} parent=5 // pred_region
      // Predicated region
      $region41: #{decoder_forward.7} parent=39 // pred_check
        %p255 = pneg %p34
      $region42: #{decoder_forward.7} parent=39 // pred_check_branch
        %257 = sbr.rel (%p255) target = $region44
      $region43: #{decoder_forward.7} parent=39 // pred_region
        %p258 = scmp.lt.s32.totalorder %s14, 1
        %s259 = scalar_select %p258, %s14, 1
        %s260 = smul.addr %s259, 8
        %s261 = scalar_lea.vmem %s0, %s260
      $region44: #{decoder_forward.7} parent=39 // pred_fallthru
        _
      // Predicated region
      $region45: #{decoder_forward.7} parent=39 // pred_check
        %p262 = pneg %p60
      $region46: #{decoder_forward.7} parent=39 // pred_check_branch
        %264 = sbr.rel (%p262) target = $region48
      $region47: #{decoder_forward.7} parent=39 // pred_region
        %p265 = scmp.lt.s32.totalorder %s14, 1
        %s266 = scalar_select %p265, %s14, 1
        %s267 = smul.addr %s266, 8
        %s268 = scalar_lea.vmem %s1, %s267
      $region48: #{decoder_forward.7} parent=39 // pred_fallthru
        _
    $region40: #{decoder_forward.7} parent=5 // pred_fallthru
      _
    %p269 = scmp.le.s32.totalorder 1, %s14
    %p270 = scmp.lt.s32.totalorder %s14, 3
    %p271 = pnand %p269, %p270
    %p272 = pneg %p271
    // Predicated region
    $region49: #{decoder_forward.7} parent=5 // pred_check
      _
    $region50: #{decoder_forward.7} parent=5 // pred_check_branch
      %274 = sbr.rel (%p271) target = $region52
    $region51: #{decoder_forward.7} parent=5 // pred_region
      %s275 = ssub.s32 %s14, 1
      %p276 = scmp.lt.s32.totalorder %s19, 1
      %s277 = scalar_select %p276, %s19, 1
      %s278 = smul.addr %s277, 8
      %s279 = scalar_lea.vmem %s0, %s278
      %p280 = pneg %p40
      %p281 = pneg %p37
      %p282 = scmp.lt.s32.totalorder %s19, 1
      %s283 = scalar_select %p282, %s19, 1
      %s284 = smul.addr %s283, 8
      %s285 = scalar_lea.vmem %s1, %s284
      %p286 = pneg %p66
      %p287 = pneg %p63
      %p288 = pneg %p87
      %p289 = pneg %p84
      %p290 = pneg %p108
      %p291 = pneg %p105
      %p292 = pneg %p129
      %p293 = pneg %p126
      %p294 = pneg %p150
      %p295 = pneg %p147
      %p296 = pneg %p171
      %p297 = pneg %p168
      %p298 = pneg %p192
      %p299 = pneg %p189
      %p300 = pneg %p218
      %p301 = pneg %p215
      %p302 = scmp.lt.s32.totalorder %s19, 1
      %s303 = scalar_select %p302, %s19, 1
      %s304 = smul.addr %s303, 8
      %s305 = scalar_lea.vmem %s8, %s304
      %p306 = scmp.lt.s32.totalorder %s19, 1
      %s307 = scalar_select %p306, %s19, 1
      %s308 = smul.addr %s307, 8
      %s309 = scalar_lea.vmem %s0, %s308
      %p310 = scmp.lt.s32.totalorder %s19, 1
      %s311 = scalar_select %p310, %s19, 1
      %s312 = smul.addr %s311, 8
      %s313 = scalar_lea.vmem %s1, %s312
      %p314 = scmp.lt.s32.totalorder %s19, 1
      %s315 = scalar_select %p314, %s19, 1
      %s316 = smul.addr %s315, 8
      %s317 = scalar_lea.vmem %s8, %s316
      %v319 = vld [vmem:[%s309] sm:$0xff]
      %v320 = vld [vmem:[%s2] sm:$0x1]
      %v321 = vld [vmem:[%s3] sm:$0x1]
      %vm322 = vcmask 261120
      %v323 = vsel %vm322, %v319, 0.0
      %324 = vadd.xlane.f32.xlu0 %v323
      %v325 = vpop.xlane.xlu0 %324
      %v326 = vrcp.pop 32.0
      %v327 = vmul.f32 %v325, %v326
      %v328 = vsub.f32 %v319, %v327
      %v329 = vmul.f32 %v328, %v328
      %v330 = vsel %vm322, %v329, 0.0
      %331 = vadd.xlane.f32.xlu0 %v330
      %v332 = vpop.xlane.xlu0 %331
      %v333 = vrcp.pop 31.0
      %v334 = vmul.f32 %v332, %v333
      %v336 = vlaneseq
      %v337 = vshrl.u32 %v336, 7
      %v338 = vsub.s32 0, %v337
      %v339 = vrot.slane %v320, %v338
      %v341 = vmul.f32 %v339, %v328
      %v342 = vrsqrt.pop %v334
      %v343 = vmul.f32 %v334, %v342
      %vm344 = vcmp.eq.f32.partialorder %v334, inf
      %v345 = vsel %vm344, %v334, %v343
      %vm346 = vcmp.eq.f32.partialorder %v334, 0.0
      %v347 = vand.u32 %v334, 2147483648
      %v348 = vsel %vm346, %v347, %v345
      %v349 = vadd.f32 %v348, 1e-06
      %v350 = vrcp.pop %v349
      %v351 = vmul.f32 %v341, %v350
      %v353 = vlaneseq
      %v354 = vshrl.u32 %v353, 7
      %v355 = vsub.s32 0, %v354
      %v356 = vrot.slane %v321, %v355
      %v358 = vadd.f32 %v351, %v356
      %v359 = vpack.c.bf16 %v358, %v358
      %v360 = vld [vmem:[%s4] sm:$0xf]
      %v361 = vld [vmem:[%s4 + $0x4] sm:$0xf]
      %v362 = vld [vmem:[%s4 + $0x8] sm:$0xf]
      %v363 = vld [vmem:[%s4 + $0xc] sm:$0xf]
      %v364 = vld [vmem:[%s5] sm:$0x1]
      %v366 = vlaneseq
      %v367 = vshrl.u32 %v366, 7
      %v368 = vsub.s32 0, %v367
      %v369 = vrot.slane %v364, %v368
      %v375 = vunpack.c.l.b16 %v360
      %v376 = vunpack.c.l.b16 %v361
      %v377 = vunpack.c.l.b16 %v362
      %v378 = vunpack.c.l.b16 %v363
      %v379 = vpack.c.b16 %v376, %v375
      %v380 = vpack.c.b16 %v378, %v377
      %v384 = vsel %vm322, %v359, 0
      %386 = vmatprep.subr.bf16.mxu0 0
      %387 = vmatpush1.bf16.msra.mxu0 %v379
      %388 = vmatprep.subr.bf16.mxu0 0
      %389 = vmatpush1.bf16.msra.mxu0 %v380
      %390 = vmatprep.subr.bf16.mxu0 0
      %391 = vmatpush1.bf16.msra.mxu0 0
      %392 = vmatprep.subr.bf16.mxu0 0
      %393 = vmatpush1.bf16.msra.mxu0 0
      %394 = vmatprep.subr.bf16.mxu0 0
      %395 = vmatpush1.bf16.msra.mxu0 0
      %396 = vmatprep.subr.bf16.mxu0 0
      %397 = vmatpush1.bf16.msra.mxu0 0
      %398 = vmatprep.subr.bf16.mxu0 0
      %399 = vmatpush1.bf16.msra.mxu0 0
      %400 = vmatprep.subr.bf16.mxu0 0
      %401 = vmatpush1.bf16.msra.mxu0 0
      %402 = vmatprep.subr.bf16.mxu0 0
      %403 = vmatpush1.bf16.msra.mxu0 0
      %404 = vmatprep.subr.bf16.mxu0 0
      %405 = vmatpush1.bf16.msra.mxu0 0
      %406 = vmatprep.subr.bf16.mxu0 0
      %407 = vmatpush1.bf16.msra.mxu0 0
      %408 = vmatprep.subr.bf16.mxu0 0
      %409 = vmatpush1.bf16.msra.mxu0 0
      %410 = vmatprep.subr.bf16.mxu0 0
      %411 = vmatpush1.bf16.msra.mxu0 0
      %412 = vmatprep.subr.bf16.mxu0 0
      %413 = vmatpush1.bf16.msra.mxu0 0
      %414 = vmatprep.subr.bf16.mxu0 0
      %415 = vmatpush1.bf16.msra.mxu0 0
      %416 = vmatprep.subr.bf16.mxu0 0
      %417 = vmatpush1.bf16.msra.mxu0 0
      %418 = vmatprep.mubr.bf16.mxu0 0
      %419 = vmatmul.mubr.bf16.gmra.mrb[0].mxu0 %v384
      %v420 = vpop.f32.mrb[0].mxu0
      %v421 = vadd.f32 %v369, %v420
      %v422 = vpop.f32.mrb[0].mxu0
      %v423 = vpop.f32.mrb[0].mxu0
      %v424 = vpop.f32.mrb[0].mxu0
      %425 = vdwg.mxu0
      %v426 = vld [vmem:[%s313] sm:$0xff]
      %428 = vrot.lane.b32.xlu0 %v421, 120
      %v429 = vpop.permute.xlu0 %428
      %431 = vrot.lane.b32.xlu0 %v421, 112
      %v432 = vpop.permute.xlu0 %431
      %434 = vrot.lane.b32.xlu0 %v421, 104
      %v435 = vpop.permute.xlu0 %434
      %v437 = vpack.c.bf16 %v421, %v421
      %v438 = vpack.c.bf16 %v429, %v429
      %v439 = vpack.c.bf16 %v432, %v432
      %v440 = vpack.c.bf16 %v435, %v435
      %442 = vrot.lane.b32.xlu0 %v437, 96
      %v443 = vpop.permute.xlu0 %442
      %vm444 = vcmask 64512
      %v446 = vsel %vm444, %v437, 0
      %v449 = vsel %vm444, %v443, 0
      %451 = vmatprep.subr.bf16.mxu0 0
      %452 = vmatpush1.bf16.xpose.msra.mxu0 %v449
      %453 = vmatprep.subr.bf16.mxu0 0
      %454 = vmatpush1.bf16.xpose.msra.mxu0 0
      %455 = vmatprep.subr.bf16.mxu0 0
      %456 = vmatpush1.bf16.xpose.msra.mxu0 0
      %457 = vmatprep.subr.bf16.mxu0 0
      %458 = vmatpush1.bf16.xpose.msra.mxu0 0
      %459 = vmatprep.subr.bf16.mxu0 0
      %460 = vmatpush1.bf16.xpose.msra.mxu0 0
      %461 = vmatprep.subr.bf16.mxu0 0
      %462 = vmatpush1.bf16.xpose.msra.mxu0 0
      %463 = vmatprep.subr.bf16.mxu0 0
      %464 = vmatpush1.bf16.xpose.msra.mxu0 0
      %465 = vmatprep.subr.bf16.mxu0 0
      %466 = vmatpush1.bf16.xpose.msra.mxu0 0
      %467 = vmatprep.subr.bf16.mxu0 0
      %468 = vmatpush1.bf16.xpose.msra.mxu0 0
      %469 = vmatprep.subr.bf16.mxu0 0
      %470 = vmatpush1.bf16.xpose.msra.mxu0 0
      %471 = vmatprep.subr.bf16.mxu0 0
      %472 = vmatpush1.bf16.xpose.msra.mxu0 0
      %473 = vmatprep.subr.bf16.mxu0 0
      %474 = vmatpush1.bf16.xpose.msra.mxu0 0
      %475 = vmatprep.subr.bf16.mxu0 0
      %476 = vmatpush1.bf16.xpose.msra.mxu0 0
      %477 = vmatprep.subr.bf16.mxu0 0
      %478 = vmatpush1.bf16.xpose.msra.mxu0 0
      %479 = vmatprep.subr.bf16.mxu0 0
      %480 = vmatpush1.bf16.xpose.msra.mxu0 0
      %481 = vmatprep.subr.bf16.mxu0 0
      %482 = vmatpush1.bf16.xpose.msra.mxu0 0
      %483 = vmatprep.mubr.bf16.mxu0 0
      %484 = vmatmul.mubr.bf16.gmra.mrb[0].mxu0 %v446
      %v485 = vpop.f32.mrb[0].mxu0
      %v486 = vadd.f32 0.0, %v485
      %v487 = vpop.f32.mrb[0].mxu0
      %v488 = vpop.f32.mrb[0].mxu0
      %v489 = vpop.f32.mrb[0].mxu0
      %490 = vdwg.mxu0
      %492 = vrot.lane.b32.xlu0 %v438, 96
      %v493 = vpop.permute.xlu0 %492
      %v495 = vsel %vm444, %v438, 0
      %v498 = vsel %vm444, %v493, 0
      %500 = vmatprep.subr.bf16.mxu0 0
      %501 = vmatpush1.bf16.xpose.msra.mxu0 %v498
      %502 = vmatprep.subr.bf16.mxu0 0
      %503 = vmatpush1.bf16.xpose.msra.mxu0 0
      %504 = vmatprep.subr.bf16.mxu0 0
      %505 = vmatpush1.bf16.xpose.msra.mxu0 0
      %506 = vmatprep.subr.bf16.mxu0 0
      %507 = vmatpush1.bf16.xpose.msra.mxu0 0
      %508 = vmatprep.subr.bf16.mxu0 0
      %509 = vmatpush1.bf16.xpose.msra.mxu0 0
      %510 = vmatprep.subr.bf16.mxu0 0
      %511 = vmatpush1.bf16.xpose.msra.mxu0 0
      %512 = vmatprep.subr.bf16.mxu0 0
      %513 = vmatpush1.bf16.xpose.msra.mxu0 0
      %514 = vmatprep.subr.bf16.mxu0 0
      %515 = vmatpush1.bf16.xpose.msra.mxu0 0
      %516 = vmatprep.subr.bf16.mxu0 0
      %517 = vmatpush1.bf16.xpose.msra.mxu0 0
      %518 = vmatprep.subr.bf16.mxu0 0
      %519 = vmatpush1.bf16.xpose.msra.mxu0 0
      %520 = vmatprep.subr.bf16.mxu0 0
      %521 = vmatpush1.bf16.xpose.msra.mxu0 0
      %522 = vmatprep.subr.bf16.mxu0 0
      %523 = vmatpush1.bf16.xpose.msra.mxu0 0
      %524 = vmatprep.subr.bf16.mxu0 0
      %525 = vmatpush1.bf16.xpose.msra.mxu0 0
      %526 = vmatprep.subr.bf16.mxu0 0
      %527 = vmatpush1.bf16.xpose.msra.mxu0 0
      %528 = vmatprep.subr.bf16.mxu0 0
      %529 = vmatpush1.bf16.xpose.msra.mxu0 0
      %530 = vmatprep.subr.bf16.mxu0 0
      %531 = vmatpush1.bf16.xpose.msra.mxu0 0
      %532 = vmatprep.mubr.bf16.mxu0 0
      %533 = vmatmul.mubr.bf16.gmra.mrb[0].mxu0 %v495
      %v534 = vpop.f32.mrb[0].mxu0
      %v535 = vadd.f32 0.0, %v534
      %v536 = vpop.f32.mrb[0].mxu0
      %v537 = vpop.f32.mrb[0].mxu0
      %v538 = vpop.f32.mrb[0].mxu0
      %539 = vdwg.mxu0
      %541 = vrot.lane.b32.xlu0 %v439, 96
      %v542 = vpop.permute.xlu0 %541
      %v544 = vsel %vm444, %v439, 0
      %v547 = vsel %vm444, %v542, 0
      %549 = vmatprep.subr.bf16.mxu0 0
      %550 = vmatpush1.bf16.xpose.msra.mxu0 %v547
      %551 = vmatprep.subr.bf16.mxu0 0
      %552 = vmatpush1.bf16.xpose.msra.mxu0 0
      %553 = vmatprep.subr.bf16.mxu0 0
      %554 = vmatpush1.bf16.xpose.msra.mxu0 0
      %555 = vmatprep.subr.bf16.mxu0 0
      %556 = vmatpush1.bf16.xpose.msra.mxu0 0
      %557 = vmatprep.subr.bf16.mxu0 0
      %558 = vmatpush1.bf16.xpose.msra.mxu0 0
      %559 = vmatprep.subr.bf16.mxu0 0
      %560 = vmatpush1.bf16.xpose.msra.mxu0 0
      %561 = vmatprep.subr.bf16.mxu0 0
      %562 = vmatpush1.bf16.xpose.msra.mxu0 0
      %563 = vmatprep.subr.bf16.mxu0 0
      %564 = vmatpush1.bf16.xpose.msra.mxu0 0
      %565 = vmatprep.subr.bf16.mxu0 0
      %566 = vmatpush1.bf16.xpose.msra.mxu0 0
      %567 = vmatprep.subr.bf16.mxu0 0
      %568 = vmatpush1.bf16.xpose.msra.mxu0 0
      %569 = vmatprep.subr.bf16.mxu0 0
      %570 = vmatpush1.bf16.xpose.msra.mxu0 0
      %571 = vmatprep.subr.bf16.mxu0 0
      %572 = vmatpush1.bf16.xpose.msra.mxu0 0
      %573 = vmatprep.subr.bf16.mxu0 0
      %574 = vmatpush1.bf16.xpose.msra.mxu0 0
      %575 = vmatprep.subr.bf16.mxu0 0
      %576 = vmatpush1.bf16.xpose.msra.mxu0 0
      %577 = vmatprep.subr.bf16.mxu0 0
      %578 = vmatpush1.bf16.xpose.msra.mxu0 0
      %579 = vmatprep.subr.bf16.mxu0 0
      %580 = vmatpush1.bf16.xpose.msra.mxu0 0
      %581 = vmatprep.mubr.bf16.mxu0 0
      %582 = vmatmul.mubr.bf16.gmra.mrb[0].mxu0 %v544
      %v583 = vpop.f32.mrb[0].mxu0
      %v584 = vadd.f32 0.0, %v583
      %v585 = vpop.f32.mrb[0].mxu0
      %v586 = vpop.f32.mrb[0].mxu0
      %v587 = vpop.f32.mrb[0].mxu0
      %588 = vdwg.mxu0
      %590 = vrot.lane.b32.xlu0 %v440, 96
      %v591 = vpop.permute.xlu0 %590
      %v593 = vsel %vm444, %v440, 0
      %v596 = vsel %vm444, %v591, 0
      %598 = vmatprep.subr.bf16.mxu0 0
      %599 = vmatpush1.bf16.xpose.msra.mxu0 %v596
      %600 = vmatprep.subr.bf16.mxu0 0
      %601 = vmatpush1.bf16.xpose.msra.mxu0 0
      %602 = vmatprep.subr.bf16.mxu0 0
      %603 = vmatpush1.bf16.xpose.msra.mxu0 0
      %604 = vmatprep.subr.bf16.mxu0 0
      %605 = vmatpush1.bf16.xpose.msra.mxu0 0
      %606 = vmatprep.subr.bf16.mxu0 0
      %607 = vmatpush1.bf16.xpose.msra.mxu0 0
      %608 = vmatprep.subr.bf16.mxu0 0
      %609 = vmatpush1.bf16.xpose.msra.mxu0 0
      %610 = vmatprep.subr.bf16.mxu0 0
      %611 = vmatpush1.bf16.xpose.msra.mxu0 0
      %612 = vmatprep.subr.bf16.mxu0 0
      %613 = vmatpush1.bf16.xpose.msra.mxu0 0
      %614 = vmatprep.subr.bf16.mxu0 0
      %615 = vmatpush1.bf16.xpose.msra.mxu0 0
      %616 = vmatprep.subr.bf16.mxu0 0
      %617 = vmatpush1.bf16.xpose.msra.mxu0 0
      %618 = vmatprep.subr.bf16.mxu0 0
      %619 = vmatpush1.bf16.xpose.msra.mxu0 0
      %620 = vmatprep.subr.bf16.mxu0 0
      %621 = vmatpush1.bf16.xpose.msra.mxu0 0
      %622 = vmatprep.subr.bf16.mxu0 0
      %623 = vmatpush1.bf16.xpose.msra.mxu0 0
      %624 = vmatprep.subr.bf16.mxu0 0
      %625 = vmatpush1.bf16.xpose.msra.mxu0 0
      %626 = vmatprep.subr.bf16.mxu0 0
      %627 = vmatpush1.bf16.xpose.msra.mxu0 0
      %628 = vmatprep.subr.bf16.mxu0 0
      %629 = vmatpush1.bf16.xpose.msra.mxu0 0
      %630 = vmatprep.mubr.bf16.mxu0 0
      %631 = vmatmul.mubr.bf16.gmra.mrb[0].mxu0 %v593
      %v632 = vpop.f32.mrb[0].mxu0
      %v633 = vadd.f32 0.0, %v632
      %v634 = vpop.f32.mrb[0].mxu0
      %v635 = vpop.f32.mrb[0].mxu0
      %v636 = vpop.f32.mrb[0].mxu0
      %637 = vdwg.mxu0
      %v638 = vmul.f32 %v486, 0.35355338
      %v639 = vmul.f32 %v535, 0.35355338
      %v640 = vmul.f32 %v584, 0.35355338
      %v641 = vmul.f32 %v633, 0.35355338
      %vm642 = vcmp.eq.f32.partialorder %v426, 0.0
      %v643 = vsel %vm642, 1, 0
      %vm644 = vcmp.eq.s32.totalorder %v643, 1
      %v645 = vsel %vm644, -1e+09, %v638
      %v646 = vsel %vm644, -1e+09, %v639
      %v647 = vsel %vm644, -1e+09, %v640
      %v648 = vsel %vm644, -1e+09, %v641
      %v649 = vsel %vm444, %v645, -inf
      %650 = vmax.xlane.f32.xlu0 %v649
      %v651 = vpop.xlane.xlu0 %650
      %v652 = vsel %vm444, %v646, -inf
      %653 = vmax.xlane.f32.xlu0 %v652
      %v654 = vpop.xlane.xlu0 %653
      %v655 = vsel %vm444, %v647, -inf
      %656 = vmax.xlane.f32.xlu0 %v655
      %v657 = vpop.xlane.xlu0 %656
      %v658 = vsel %vm444, %v648, -inf
      %659 = vmax.xlane.f32.xlu0 %v658
      %v660 = vpop.xlane.xlu0 %659
      %v661 = vsub.f32 %v645, %v651
      %v662 = vsub.f32 %v646, %v654
      %v663 = vsub.f32 %v647, %v657
      %v664 = vsub.f32 %v648, %v660
      %v665 = vmul.f32 %v661, 1.442695
      %v666 = vpow.pop %v665
      %v667 = vmul.f32 %v662, 1.442695
      %v668 = vpow.pop %v667
      %v669 = vmul.f32 %v663, 1.442695
      %v670 = vpow.pop %v669
      %v671 = vmul.f32 %v664, 1.442695
      %v672 = vpow.pop %v671
      %v673 = vsel %vm444, %v666, 0.0
      %674 = vadd.xlane.f32.xlu0 %v673
      %v675 = vpop.xlane.xlu0 %674
      %v676 = vsel %vm444, %v668, 0.0
      %677 = vadd.xlane.f32.xlu0 %v676
      %v678 = vpop.xlane.xlu0 %677
      %v679 = vsel %vm444, %v670, 0.0
      %680 = vadd.xlane.f32.xlu0 %v679
      %v681 = vpop.xlane.xlu0 %680
      %v682 = vsel %vm444, %v672, 0.0
      %683 = vadd.xlane.f32.xlu0 %v682
      %v684 = vpop.xlane.xlu0 %683
      %v685 = vrcp.pop %v675
      %v686 = vrcp.pop %v678
      %v687 = vrcp.pop %v681
      %v688 = vrcp.pop %v684
      %v689 = vmul.f32 %v666, %v685
      %v690 = vmul.f32 %v668, %v686
      %v691 = vmul.f32 %v670, %v687
      %v692 = vmul.f32 %v672, %v688
      %v693 = vpack.c.bf16 %v689, %v689
      %v694 = vpack.c.bf16 %v690, %v690
      %v695 = vpack.c.bf16 %v691, %v691
      %v696 = vpack.c.bf16 %v692, %v692
      %697 = vrot.lane.b32.xlu0 %v437, 64
      %v698 = vpop.permute.xlu0 %697
      %v700 = vsel %vm444, %v693, 0
      %vm702 = vcmask 1043456
      %v704 = vsel %vm702, %v698, 0
      %706 = vmatprep.subr.bf16.mxu0 0
      %707 = vmatpush1.bf16.msra.mxu0 %v704
      %708 = vmatprep.subr.bf16.mxu0 0
      %709 = vmatpush1.bf16.msra.mxu0 0
      %710 = vmatprep.subr.bf16.mxu0 0
      %711 = vmatpush1.bf16.msra.mxu0 0
      %712 = vmatprep.subr.bf16.mxu0 0
      %713 = vmatpush1.bf16.msra.mxu0 0
      %714 = vmatprep.subr.bf16.mxu0 0
      %715 = vmatpush1.bf16.msra.mxu0 0
      %716 = vmatprep.subr.bf16.mxu0 0
      %717 = vmatpush1.bf16.msra.mxu0 0
      %718 = vmatprep.subr.bf16.mxu0 0
      %719 = vmatpush1.bf16.msra.mxu0 0
      %720 = vmatprep.subr.bf16.mxu0 0
      %721 = vmatpush1.bf16.msra.mxu0 0
      %722 = vmatprep.subr.bf16.mxu0 0
      %723 = vmatpush1.bf16.msra.mxu0 0
      %724 = vmatprep.subr.bf16.mxu0 0
      %725 = vmatpush1.bf16.msra.mxu0 0
      %726 = vmatprep.subr.bf16.mxu0 0
      %727 = vmatpush1.bf16.msra.mxu0 0
      %728 = vmatprep.subr.bf16.mxu0 0
      %729 = vmatpush1.bf16.msra.mxu0 0
      %730 = vmatprep.subr.bf16.mxu0 0
      %731 = vmatpush1.bf16.msra.mxu0 0
      %732 = vmatprep.subr.bf16.mxu0 0
      %733 = vmatpush1.bf16.msra.mxu0 0
      %734 = vmatprep.subr.bf16.mxu0 0
      %735 = vmatpush1.bf16.msra.mxu0 0
      %736 = vmatprep.subr.bf16.mxu0 0
      %737 = vmatpush1.bf16.msra.mxu0 0
      %738 = vmatprep.mubr.bf16.mxu0 0
      %739 = vmatmul.mubr.bf16.gmra.mrb[0].mxu0 %v700
      %v740 = vpop.f32.mrb[0].mxu0
      %v741 = vadd.f32 0.0, %v740
      %v742 = vpop.f32.mrb[0].mxu0
      %v743 = vpop.f32.mrb[0].mxu0
      %v744 = vpop.f32.mrb[0].mxu0
      %745 = vdwg.mxu0
      %746 = vrot.lane.b32.xlu0 %v438, 64
      %v747 = vpop.permute.xlu0 %746
      %v749 = vsel %vm444, %v694, 0
      %v752 = vsel %vm702, %v747, 0
      %754 = vmatprep.subr.bf16.mxu0 0
      %755 = vmatpush1.bf16.msra.mxu0 %v752
      %756 = vmatprep.subr.bf16.mxu0 0
      %757 = vmatpush1.bf16.msra.mxu0 0
      %758 = vmatprep.subr.bf16.mxu0 0
      %759 = vmatpush1.bf16.msra.mxu0 0
      %760 = vmatprep.subr.bf16.mxu0 0
      %761 = vmatpush1.bf16.msra.mxu0 0
      %762 = vmatprep.subr.bf16.mxu0 0
      %763 = vmatpush1.bf16.msra.mxu0 0
      %764 = vmatprep.subr.bf16.mxu0 0
      %765 = vmatpush1.bf16.msra.mxu0 0
      %766 = vmatprep.subr.bf16.mxu0 0
      %767 = vmatpush1.bf16.msra.mxu0 0
      %768 = vmatprep.subr.bf16.mxu0 0
      %769 = vmatpush1.bf16.msra.mxu0 0
      %770 = vmatprep.subr.bf16.mxu0 0
      %771 = vmatpush1.bf16.msra.mxu0 0
      %772 = vmatprep.subr.bf16.mxu0 0
      %773 = vmatpush1.bf16.msra.mxu0 0
      %774 = vmatprep.subr.bf16.mxu0 0
      %775 = vmatpush1.bf16.msra.mxu0 0
      %776 = vmatprep.subr.bf16.mxu0 0
      %777 = vmatpush1.bf16.msra.mxu0 0
      %778 = vmatprep.subr.bf16.mxu0 0
      %779 = vmatpush1.bf16.msra.mxu0 0
      %780 = vmatprep.subr.bf16.mxu0 0
      %781 = vmatpush1.bf16.msra.mxu0 0
      %782 = vmatprep.subr.bf16.mxu0 0
      %783 = vmatpush1.bf16.msra.mxu0 0
      %784 = vmatprep.subr.bf16.mxu0 0
      %785 = vmatpush1.bf16.msra.mxu0 0
      %786 = vmatprep.mubr.bf16.mxu0 0
      %787 = vmatmul.mubr.bf16.gmra.mrb[0].mxu0 %v749
      %v788 = vpop.f32.mrb[0].mxu0
      %v789 = vadd.f32 0.0, %v788
      %v790 = vpop.f32.mrb[0].mxu0
      %v791 = vpop.f32.mrb[0].mxu0
      %v792 = vpop.f32.mrb[0].mxu0
      %793 = vdwg.mxu0
      %794 = vrot.lane.b32.xlu0 %v439, 64
      %v795 = vpop.permute.xlu0 %794
      %v797 = vsel %vm444, %v695, 0
      %v800 = vsel %vm702, %v795, 0
      %802 = vmatprep.subr.bf16.mxu0 0
      %803 = vmatpush1.bf16.msra.mxu0 %v800
      %804 = vmatprep.subr.bf16.mxu0 0
      %805 = vmatpush1.bf16.msra.mxu0 0
      %806 = vmatprep.subr.bf16.mxu0 0
      %807 = vmatpush1.bf16.msra.mxu0 0
      %808 = vmatprep.subr.bf16.mxu0 0
      %809 = vmatpush1.bf16.msra.mxu0 0
      %810 = vmatprep.subr.bf16.mxu0 0
      %811 = vmatpush1.bf16.msra.mxu0 0
      %812 = vmatprep.subr.bf16.mxu0 0
      %813 = vmatpush1.bf16.msra.mxu0 0
      %814 = vmatprep.subr.bf16.mxu0 0
      %815 = vmatpush1.bf16.msra.mxu0 0
      %816 = vmatprep.subr.bf16.mxu0 0
      %817 = vmatpush1.bf16.msra.mxu0 0
      %818 = vmatprep.subr.bf16.mxu0 0
      %819 = vmatpush1.bf16.msra.mxu0 0
      %820 = vmatprep.subr.bf16.mxu0 0
      %821 = vmatpush1.bf16.msra.mxu0 0
      %822 = vmatprep.subr.bf16.mxu0 0
      %823 = vmatpush1.bf16.msra.mxu0 0
      %824 = vmatprep.subr.bf16.mxu0 0
      %825 = vmatpush1.bf16.msra.mxu0 0
      %826 = vmatprep.subr.bf16.mxu0 0
      %827 = vmatpush1.bf16.msra.mxu0 0
      %828 = vmatprep.subr.bf16.mxu0 0
      %829 = vmatpush1.bf16.msra.mxu0 0
      %830 = vmatprep.subr.bf16.mxu0 0
      %831 = vmatpush1.bf16.msra.mxu0 0
      %832 = vmatprep.subr.bf16.mxu0 0
      %833 = vmatpush1.bf16.msra.mxu0 0
      %834 = vmatprep.mubr.bf16.mxu0 0
      %835 = vmatmul.mubr.bf16.gmra.mrb[0].mxu0 %v797
      %v836 = vpop.f32.mrb[0].mxu0
      %v837 = vadd.f32 0.0, %v836
      %v838 = vpop.f32.mrb[0].mxu0
      %v839 = vpop.f32.mrb[0].mxu0
      %v840 = vpop.f32.mrb[0].mxu0
      %841 = vdwg.mxu0
      %842 = vrot.lane.b32.xlu0 %v440, 64
      %v843 = vpop.permute.xlu0 %842
      %v845 = vsel %vm444, %v696, 0
      %v848 = vsel %vm702, %v843, 0
      %850 = vmatprep.subr.bf16.mxu0 0
      %851 = vmatpush1.bf16.msra.mxu0 %v848
      %852 = vmatprep.subr.bf16.mxu0 0
      %853 = vmatpush1.bf16.msra.mxu0 0
      %854 = vmatprep.subr.bf16.mxu0 0
      %855 = vmatpush1.bf16.msra.mxu0 0
      %856 = vmatprep.subr.bf16.mxu0 0
      %857 = vmatpush1.bf16.msra.mxu0 0
      %858 = vmatprep.subr.bf16.mxu0 0
      %859 = vmatpush1.bf16.msra.mxu0 0
      %860 = vmatprep.subr.bf16.mxu0 0
      %861 = vmatpush1.bf16.msra.mxu0 0
      %862 = vmatprep.subr.bf16.mxu0 0
      %863 = vmatpush1.bf16.msra.mxu0 0
      %864 = vmatprep.subr.bf16.mxu0 0
      %865 = vmatpush1.bf16.msra.mxu0 0
      %866 = vmatprep.subr.bf16.mxu0 0
      %867 = vmatpush1.bf16.msra.mxu0 0
      %868 = vmatprep.subr.bf16.mxu0 0
      %869 = vmatpush1.bf16.msra.mxu0 0
      %870 = vmatprep.subr.bf16.mxu0 0
      %871 = vmatpush1.bf16.msra.mxu0 0
      %872 = vmatprep.subr.bf16.mxu0 0
      %873 = vmatpush1.bf16.msra.mxu0 0
      %874 = vmatprep.subr.bf16.mxu0 0
      %875 = vmatpush1.bf16.msra.mxu0 0
      %876 = vmatprep.subr.bf16.mxu0 0
      %877 = vmatpush1.bf16.msra.mxu0 0
      %878 = vmatprep.subr.bf16.mxu0 0
      %879 = vmatpush1.bf16.msra.mxu0 0
      %880 = vmatprep.subr.bf16.mxu0 0
      %881 = vmatpush1.bf16.msra.mxu0 0
      %882 = vmatprep.mubr.bf16.mxu0 0
      %883 = vmatmul.mubr.bf16.gmra.mrb[0].mxu0 %v845
      %v884 = vpop.f32.mrb[0].mxu0
      %v885 = vadd.f32 0.0, %v884
      %v886 = vpop.f32.mrb[0].mxu0
      %v887 = vpop.f32.mrb[0].mxu0
      %v888 = vpop.f32.mrb[0].mxu0
      %889 = vdwg.mxu0
      %891 = vrot.lane.b32.xlu0 %v789, 8
      %v892 = vpop.permute.xlu0 %891
      %895 = vrot.lane.b32.xlu0 %v837, 16
      %v896 = vpop.permute.xlu0 %895
      %899 = vrot.lane.b32.xlu0 %v885, 24
      %v900 = vpop.permute.xlu0 %899
      %v902 = vsel %vm444, %v741, %v892
      %vm903 = vcmask 130048
      %v904 = vsel %vm903, %v902, %v896
      %vm905 = vcmask 195584
      %v906 = vsel %vm905, %v904, %v900
      %v907 = vpack.c.bf16 %v906, %v906
      %v908 = vld [vmem:[%s6] sm:$0xf]
      %v909 = vld [vmem:[%s6 + $0x4] sm:$0xf]
      %v910 = vld [vmem:[%s6 + $0x8] sm:$0xf]
      %v911 = vld [vmem:[%s6 + $0xc] sm:$0xf]
      %v912 = vld [vmem:[%s7] sm:$0x1]
      %v914 = vlaneseq
      %v915 = vshrl.u32 %v914, 7
      %v916 = vsub.s32 0, %v915
      %v917 = vrot.slane %v912, %v916
      %v923 = vunpack.c.l.b16 %v908
      %v924 = vunpack.c.l.b16 %v909
      %v925 = vunpack.c.l.b16 %v910
      %v926 = vunpack.c.l.b16 %v911
      %v927 = vpack.c.b16 %v924, %v923
      %v928 = vpack.c.b16 %v926, %v925
      %v932 = vsel %vm322, %v907, 0
      %934 = vmatprep.subr.bf16.mxu0 0
      %935 = vmatpush1.bf16.msra.mxu0 %v927
      %936 = vmatprep.subr.bf16.mxu0 0
      %937 = vmatpush1.bf16.msra.mxu0 %v928
      %938 = vmatprep.subr.bf16.mxu0 0
      %939 = vmatpush1.bf16.msra.mxu0 0
      %940 = vmatprep.subr.bf16.mxu0 0
      %941 = vmatpush1.bf16.msra.mxu0 0
      %942 = vmatprep.subr.bf16.mxu0 0
      %943 = vmatpush1.bf16.msra.mxu0 0
      %944 = vmatprep.subr.bf16.mxu0 0
      %945 = vmatpush1.bf16.msra.mxu0 0
      %946 = vmatprep.subr.bf16.mxu0 0
      %947 = vmatpush1.bf16.msra.mxu0 0
      %948 = vmatprep.subr.bf16.mxu0 0
      %949 = vmatpush1.bf16.msra.mxu0 0
      %950 = vmatprep.subr.bf16.mxu0 0
      %951 = vmatpush1.bf16.msra.mxu0 0
      %952 = vmatprep.subr.bf16.mxu0 0
      %953 = vmatpush1.bf16.msra.mxu0 0
      %954 = vmatprep.subr.bf16.mxu0 0
      %955 = vmatpush1.bf16.msra.mxu0 0
      %956 = vmatprep.subr.bf16.mxu0 0
      %957 = vmatpush1.bf16.msra.mxu0 0
      %958 = vmatprep.subr.bf16.mxu0 0
      %959 = vmatpush1.bf16.msra.mxu0 0
      %960 = vmatprep.subr.bf16.mxu0 0
      %961 = vmatpush1.bf16.msra.mxu0 0
      %962 = vmatprep.subr.bf16.mxu0 0
      %963 = vmatpush1.bf16.msra.mxu0 0
      %964 = vmatprep.subr.bf16.mxu0 0
      %965 = vmatpush1.bf16.msra.mxu0 0
      %966 = vmatprep.mubr.bf16.mxu0 0
      %967 = vmatmul.mubr.bf16.gmra.mrb[0].mxu0 %v932
      %v968 = vpop.f32.mrb[0].mxu0
      %v969 = vadd.f32 %v917, %v968
      %v970 = vpop.f32.mrb[0].mxu0
      %v971 = vpop.f32.mrb[0].mxu0
      %v972 = vpop.f32.mrb[0].mxu0
      %973 = vdwg.mxu0
      %v974 = vadd.f32 %v319, %v969
      %975 = vst.msk [vmem:[%s317] sm:$0xff] %vm322, %v974
      %p976 = scmp.lt.s32.totalorder %s19, 1
      %s977 = scalar_select %p976, %s19, 1
      %s978 = smul.addr %s977, 8
      %s979 = scalar_lea.vmem %s8, %s978
      // Predicated region
      $region53: #{decoder_forward.7} parent=51 // pred_check
        %p980 = pneg %p215
      $region54: #{decoder_forward.7} parent=51 // pred_check_branch
        %982 = sbr.rel (%p980) target = $region56
      $region55: #{decoder_forward.7} parent=51 // pred_region
        _
      $region56: #{decoder_forward.7} parent=51 // pred_fallthru
        _
    $region52: #{decoder_forward.7} parent=5 // pred_fallthru
      _
    %p983 = scmp.le.s32.totalorder 2, %s14
    // Predicated region
    $region57: #{decoder_forward.7} parent=5 // pred_check
      %p984 = pneg %p983
    $region58: #{decoder_forward.7} parent=5 // pred_check_branch
      %986 = sbr.rel (%p984) target = $region60
    $region59: #{decoder_forward.7} parent=5 // pred_region
      %s987 = ssub.s32 %s14, 2
      // Predicated region
      $region61: #{decoder_forward.7} parent=59 // pred_check
        %p988 = pneg %p221
      $region62: #{decoder_forward.7} parent=59 // pred_check_branch
        %990 = sbr.rel (%p988) target = $region64
      $region63: #{decoder_forward.7} parent=59 // pred_region
        %p991 = scmp.lt.s32.totalorder %s20, 1
        %s992 = scalar_select %p991, %s20, 1
        %s993 = smul.addr %s992, 8
        %s994 = scalar_lea.vmem %s8, %s993
      $region64: #{decoder_forward.7} parent=59 // pred_fallthru
        _
    $region60: #{decoder_forward.7} parent=5 // pred_fallthru
      _
  $region6: #{decoder_forward.7} parent=0 // loop_footer
    %s18 = sadd.s32 1, %s14
  $region7: #{decoder_forward.7} parent=0 // loop_footer_branch
    %13 = sbr.rel target = $region3
  $region8: #{decoder_forward.7} parent=0 // loop_exit
    _

// kernel: decoder_forward.8
$region0: #{decoder_forward.8}
  #allocation0 [shape = 'u32[]', space=smem, size = 0x4, offset = 0x4, fixed_abs, tag = 'smem constant byte address 0x4 - core index']
  #allocation1 [shape = 'u32[144,128]{1,0:T(1,128)}', space=vmem, size = 0x12000, scoped, tag = 'internal scratch']
  %s0 = inlined_call_operand.vmem [shape: f32[2,8,32], index: 0, kind: input, shape index: {}]
  %s1 = inlined_call_operand.vmem [shape: f32[2,16,32], index: 1, kind: input, shape index: {}]
  %s2 = inlined_call_operand.vmem [shape: f32[2,1,16], index: 2, kind: input, shape index: {}]
  %s3 = inlined_call_operand.vmem [shape: f32[1,32], index: 3, kind: input, shape index: {}]
  %s4 = inlined_call_operand.vmem [shape: f32[1,32], index: 4, kind: input, shape index: {}]
  %s5 = inlined_call_operand.vmem [shape: bf16[32,32], index: 5, kind: input, shape index: {}]
  %s6 = inlined_call_operand.vmem [shape: f32[1,32], index: 6, kind: input, shape index: {}]
  %s7 = inlined_call_operand.vmem [shape: bf16[32,64], index: 7, kind: input, shape index: {}]
  %s8 = inlined_call_operand.vmem [shape: f32[1,64], index: 8, kind: input, shape index: {}]
  %s9 = inlined_call_operand.vmem [shape: bf16[32,32], index: 9, kind: input, shape index: {}]
  %s10 = inlined_call_operand.vmem [shape: f32[1,32], index: 10, kind: input, shape index: {}]
  %s11 = inlined_call_operand.vmem [shape: f32[2,8,32], index: 11, kind: output, shape index: {}]
  %s12 = sld [smem:[#allocation0]]
  $region77: #{decoder_forward.8} parent=0
    _
  %s14 = ssub.s32 1, %s12
  %s15 = scalar_select 0, %s14, %s12
  loop: start=0, step=1, limit=4
  $region2: #{decoder_forward.8} parent=0 // loop_pre_header
    _
  $region3: #{decoder_forward.8} parent=0 // loop_header
    %s17 = sphi 0, %s21
    %p18 = scmp.ge.s32.totalorder %s17, 4
    %s27 = sphi 0, %s29
    %s30 = sphi 0, %s27
    %s31 = sphi 0, %s30
    %s47 = sphi 0, %s31
    %s53 = sphi 0, %s55
    %s56 = sphi 0, %s53
    %s57 = sphi 0, %s56
    %s73 = sphi 0, %s57
    %s79 = sphi 0, %s81
    %s82 = sphi 0, %s79
    %s83 = sphi 0, %s82
    %s99 = sphi 0, %s83
    %s103 = sphi 0, %s103
    %s105 = sphi 0, %s103
    %s106 = sphi 0, %s105
    %s120 = sphi 0, %s106
    %s124 = sphi 0, %s124
    %s126 = sphi 0, %s124
    %s127 = sphi 0, %s126
    %s141 = sphi 0, %s127
    %s145 = sphi 0, %s145
    %s147 = sphi 0, %s145
    %s148 = sphi 0, %s147
    %s162 = sphi 0, %s148
    %s166 = sphi 0, %s166
    %s168 = sphi 0, %s166
    %s169 = sphi 0, %s168
    %s183 = sphi 0, %s169
    %s187 = sphi 0, %s187
    %s189 = sphi 0, %s187
    %s190 = sphi 0, %s189
    %s204 = sphi 0, %s190
    %s208 = sphi 0, %s208
    %s210 = sphi 0, %s208
    %s211 = sphi 0, %s210
    %s225 = sphi 0, %s211
    %s229 = sphi 0, %s229
    %s231 = sphi 0, %s229
    %s232 = sphi 0, %s231
    %s246 = sphi 0, %s232
    %s250 = sphi 0, %s250
    %s252 = sphi 0, %s250
    %s253 = sphi 0, %s252
    %s267 = sphi 0, %s253
    %s273 = sphi 0, %s275
    %s276 = sphi 0, %s273
    %s277 = sphi 0, %s276
    %s293 = sphi 0, %s277
  $region4: #{decoder_forward.8} parent=0 // loop_header_branch
    %20 = sbr.rel (%p18) target = $region8
  $region5: #{decoder_forward.8} parent=0 // loop_body
    %s22 = ssub.s32 %s17, 1
    %s23 = ssub.s32 %s17, 2
    %s24 = sadd.s32 %s17, 1
    %s25 = ssub.s32 %s17, %s24
    %p26 = scmp.eq.s32.totalorder %s25, 0
    %s28 = sadd.s32 %s27, 1
    %s29 = scalar_select %p26, %s27, %s28
    %p32 = pneg %p26
    %p33 = scmp.eq.s32.totalorder %s17, 1
    %p34 = por %p32, %p33
    %p35 = scmp.ne.s32.totalorder %s27, %s30
    %p36 = scmp.eq.s32.totalorder %s17, 0
    %p37 = por %p35, %p36
    %p38 = scmp.ne.s32.totalorder %s27, %s30
    %p39 = scmp.eq.s32.totalorder %s22, 1
    %p40 = por %p38, %p39
    %p41 = scmp.ne.s32.totalorder %s30, %s31
    %p42 = scmp.eq.s32.totalorder %s22, 0
    %p43 = por %p41, %p42
    %p44 = scmp.ne.s32.totalorder %s30, %s31
    %p45 = scmp.eq.s32.totalorder %s23, 1
    %p46 = por %p44, %p45
    %p48 = scmp.ne.s32.totalorder %s31, %s47
    %p49 = scmp.eq.s32.totalorder %s23, 0
    %p50 = por %p48, %p49
    %s51 = ssub.s32 %s17, %s24
    %p52 = scmp.eq.s32.totalorder %s51, 0
    %s54 = sadd.s32 %s53, 1
    %s55 = scalar_select %p52, %s53, %s54
    %p58 = pneg %p52
    %p59 = scmp.eq.s32.totalorder %s17, 1
    %p60 = por %p58, %p59
    %p61 = scmp.ne.s32.totalorder %s53, %s56
    %p62 = scmp.eq.s32.totalorder %s17, 0
    %p63 = por %p61, %p62
    %p64 = scmp.ne.s32.totalorder %s53, %s56
    %p65 = scmp.eq.s32.totalorder %s22, 1
    %p66 = por %p64, %p65
    %p67 = scmp.ne.s32.totalorder %s56, %s57
    %p68 = scmp.eq.s32.totalorder %s22, 0
    %p69 = por %p67, %p68
    %p70 = scmp.ne.s32.totalorder %s56, %s57
    %p71 = scmp.eq.s32.totalorder %s23, 1
    %p72 = por %p70, %p71
    %p74 = scmp.ne.s32.totalorder %s57, %s73
    %p75 = scmp.eq.s32.totalorder %s23, 0
    %p76 = por %p74, %p75
    %s77 = ssub.s32 %s17, %s24
    %p78 = scmp.eq.s32.totalorder %s77, 0
    %s80 = sadd.s32 %s79, 1
    %s81 = scalar_select %p78, %s79, %s80
    %p84 = pneg %p78
    %p85 = scmp.eq.s32.totalorder %s17, 1
    %p86 = por %p84, %p85
    %p87 = scmp.ne.s32.totalorder %s79, %s82
    %p88 = scmp.eq.s32.totalorder %s17, 0
    %p89 = por %p87, %p88
    %p90 = scmp.ne.s32.totalorder %s79, %s82
    %p91 = scmp.eq.s32.totalorder %s22, 1
    %p92 = por %p90, %p91
    %p93 = scmp.ne.s32.totalorder %s82, %s83
    %p94 = scmp.eq.s32.totalorder %s22, 0
    %p95 = por %p93, %p94
    %p96 = scmp.ne.s32.totalorder %s82, %s83
    %p97 = scmp.eq.s32.totalorder %s23, 1
    %p98 = por %p96, %p97
    %p100 = scmp.ne.s32.totalorder %s83, %s99
    %p101 = scmp.eq.s32.totalorder %s23, 0
    %p102 = por %p100, %p101
    %s104 = sadd.s32 %s103, 1
    %p107 = scmp.eq.s32.totalorder %s17, 1
    %p108 = scmp.ne.s32.totalorder %s103, %s105
    %p109 = scmp.eq.s32.totalorder %s17, 0
    %p110 = por %p108, %p109
    %p111 = scmp.ne.s32.totalorder %s103, %s105
    %p112 = scmp.eq.s32.totalorder %s22, 1
    %p113 = por %p111, %p112
    %p114 = scmp.ne.s32.totalorder %s105, %s106
    %p115 = scmp.eq.s32.totalorder %s22, 0
    %p116 = por %p114, %p115
    %p117 = scmp.ne.s32.totalorder %s105, %s106
    %p118 = scmp.eq.s32.totalorder %s23, 1
    %p119 = por %p117, %p118
    %p121 = scmp.ne.s32.totalorder %s106, %s120
    %p122 = scmp.eq.s32.totalorder %s23, 0
    %p123 = por %p121, %p122
    %s125 = sadd.s32 %s124, 1
    %p128 = scmp.eq.s32.totalorder %s17, 1
    %p129 = scmp.ne.s32.totalorder %s124, %s126
    %p130 = scmp.eq.s32.totalorder %s17, 0
    %p131 = por %p129, %p130
    %p132 = scmp.ne.s32.totalorder %s124, %s126
    %p133 = scmp.eq.s32.totalorder %s22, 1
    %p134 = por %p132, %p133
    %p135 = scmp.ne.s32.totalorder %s126, %s127
    %p136 = scmp.eq.s32.totalorder %s22, 0
    %p137 = por %p135, %p136
    %p138 = scmp.ne.s32.totalorder %s126, %s127
    %p139 = scmp.eq.s32.totalorder %s23, 1
    %p140 = por %p138, %p139
    %p142 = scmp.ne.s32.totalorder %s127, %s141
    %p143 = scmp.eq.s32.totalorder %s23, 0
    %p144 = por %p142, %p143
    %s146 = sadd.s32 %s145, 1
    %p149 = scmp.eq.s32.totalorder %s17, 1
    %p150 = scmp.ne.s32.totalorder %s145, %s147
    %p151 = scmp.eq.s32.totalorder %s17, 0
    %p152 = por %p150, %p151
    %p153 = scmp.ne.s32.totalorder %s145, %s147
    %p154 = scmp.eq.s32.totalorder %s22, 1
    %p155 = por %p153, %p154
    %p156 = scmp.ne.s32.totalorder %s147, %s148
    %p157 = scmp.eq.s32.totalorder %s22, 0
    %p158 = por %p156, %p157
    %p159 = scmp.ne.s32.totalorder %s147, %s148
    %p160 = scmp.eq.s32.totalorder %s23, 1
    %p161 = por %p159, %p160
    %p163 = scmp.ne.s32.totalorder %s148, %s162
    %p164 = scmp.eq.s32.totalorder %s23, 0
    %p165 = por %p163, %p164
    %s167 = sadd.s32 %s166, 1
    %p170 = scmp.eq.s32.totalorder %s17, 1
    %p171 = scmp.ne.s32.totalorder %s166, %s168
    %p172 = scmp.eq.s32.totalorder %s17, 0
    %p173 = por %p171, %p172
    %p174 = scmp.ne.s32.totalorder %s166, %s168
    %p175 = scmp.eq.s32.totalorder %s22, 1
    %p176 = por %p174, %p175
    %p177 = scmp.ne.s32.totalorder %s168, %s169
    %p178 = scmp.eq.s32.totalorder %s22, 0
    %p179 = por %p177, %p178
    %p180 = scmp.ne.s32.totalorder %s168, %s169
    %p181 = scmp.eq.s32.totalorder %s23, 1
    %p182 = por %p180, %p181
    %p184 = scmp.ne.s32.totalorder %s169, %s183
    %p185 = scmp.eq.s32.totalorder %s23, 0
    %p186 = por %p184, %p185
    %s188 = sadd.s32 %s187, 1
    %p191 = scmp.eq.s32.totalorder %s17, 1
    %p192 = scmp.ne.s32.totalorder %s187, %s189
    %p193 = scmp.eq.s32.totalorder %s17, 0
    %p194 = por %p192, %p193
    %p195 = scmp.ne.s32.totalorder %s187, %s189
    %p196 = scmp.eq.s32.totalorder %s22, 1
    %p197 = por %p195, %p196
    %p198 = scmp.ne.s32.totalorder %s189, %s190
    %p199 = scmp.eq.s32.totalorder %s22, 0
    %p200 = por %p198, %p199
    %p201 = scmp.ne.s32.totalorder %s189, %s190
    %p202 = scmp.eq.s32.totalorder %s23, 1
    %p203 = por %p201, %p202
    %p205 = scmp.ne.s32.totalorder %s190, %s204
    %p206 = scmp.eq.s32.totalorder %s23, 0
    %p207 = por %p205, %p206
    %s209 = sadd.s32 %s208, 1
    %p212 = scmp.eq.s32.totalorder %s17, 1
    %p213 = scmp.ne.s32.totalorder %s208, %s210
    %p214 = scmp.eq.s32.totalorder %s17, 0
    %p215 = por %p213, %p214
    %p216 = scmp.ne.s32.totalorder %s208, %s210
    %p217 = scmp.eq.s32.totalorder %s22, 1
    %p218 = por %p216, %p217
    %p219 = scmp.ne.s32.totalorder %s210, %s211
    %p220 = scmp.eq.s32.totalorder %s22, 0
    %p221 = por %p219, %p220
    %p222 = scmp.ne.s32.totalorder %s210, %s211
    %p223 = scmp.eq.s32.totalorder %s23, 1
    %p224 = por %p222, %p223
    %p226 = scmp.ne.s32.totalorder %s211, %s225
    %p227 = scmp.eq.s32.totalorder %s23, 0
    %p228 = por %p226, %p227
    %s230 = sadd.s32 %s229, 1
    %p233 = scmp.eq.s32.totalorder %s17, 1
    %p234 = scmp.ne.s32.totalorder %s229, %s231
    %p235 = scmp.eq.s32.totalorder %s17, 0
    %p236 = por %p234, %p235
    %p237 = scmp.ne.s32.totalorder %s229, %s231
    %p238 = scmp.eq.s32.totalorder %s22, 1
    %p239 = por %p237, %p238
    %p240 = scmp.ne.s32.totalorder %s231, %s232
    %p241 = scmp.eq.s32.totalorder %s22, 0
    %p242 = por %p240, %p241
    %p243 = scmp.ne.s32.totalorder %s231, %s232
    %p244 = scmp.eq.s32.totalorder %s23, 1
    %p245 = por %p243, %p244
    %p247 = scmp.ne.s32.totalorder %s232, %s246
    %p248 = scmp.eq.s32.totalorder %s23, 0
    %p249 = por %p247, %p248
    %s251 = sadd.s32 %s250, 1
    %p254 = scmp.eq.s32.totalorder %s17, 1
    %p255 = scmp.ne.s32.totalorder %s250, %s252
    %p256 = scmp.eq.s32.totalorder %s17, 0
    %p257 = por %p255, %p256
    %p258 = scmp.ne.s32.totalorder %s250, %s252
    %p259 = scmp.eq.s32.totalorder %s22, 1
    %p260 = por %p258, %p259
    %p261 = scmp.ne.s32.totalorder %s252, %s253
    %p262 = scmp.eq.s32.totalorder %s22, 0
    %p263 = por %p261, %p262
    %p264 = scmp.ne.s32.totalorder %s252, %s253
    %p265 = scmp.eq.s32.totalorder %s23, 1
    %p266 = por %p264, %p265
    %p268 = scmp.ne.s32.totalorder %s253, %s267
    %p269 = scmp.eq.s32.totalorder %s23, 0
    %p270 = por %p268, %p269
    %s271 = ssub.s32 %s17, %s24
    %p272 = scmp.eq.s32.totalorder %s271, 0
    %s274 = sadd.s32 %s273, 1
    %s275 = scalar_select %p272, %s273, %s274
    %p278 = pneg %p272
    %p279 = scmp.eq.s32.totalorder %s17, 1
    %p280 = por %p278, %p279
    %p281 = scmp.ne.s32.totalorder %s273, %s276
    %p282 = scmp.eq.s32.totalorder %s17, 0
    %p283 = por %p281, %p282
    %p284 = scmp.ne.s32.totalorder %s273, %s276
    %p285 = scmp.eq.s32.totalorder %s22, 1
    %p286 = por %p284, %p285
    %p287 = scmp.ne.s32.totalorder %s276, %s277
    %p288 = scmp.eq.s32.totalorder %s22, 0
    %p289 = por %p287, %p288
    %p290 = scmp.ne.s32.totalorder %s276, %s277
    %p291 = scmp.eq.s32.totalorder %s23, 1
    %p292 = por %p290, %p291
    %p294 = scmp.ne.s32.totalorder %s277, %s293
    %p295 = scmp.eq.s32.totalorder %s23, 0
    %p296 = por %p294, %p295
    %p297 = scmp.le.s32.totalorder 1, %s17
    %p298 = scmp.lt.s32.totalorder %s17, 3
    %p299 = pnand %p297, %p298
    %p300 = pneg %p299
    // Predicated region
    $region9: #{decoder_forward.8} parent=5 // pred_check
      _
    $region10: #{decoder_forward.8} parent=5 // pred_check_branch
      %302 = sbr.rel (%p299) target = $region12
    $region11: #{decoder_forward.8} parent=5 // pred_region
      %s303 = ssub.s32 %s17, 1
      // Predicated region
      $region13: #{decoder_forward.8} parent=11 // pred_check
        %p304 = pneg %p116
      $region14: #{decoder_forward.8} parent=11 // pred_check_branch
        %306 = sbr.rel (%p304) target = $region16
      $region15: #{decoder_forward.8} parent=11 // pred_region
        _
      $region16: #{decoder_forward.8} parent=11 // pred_fallthru
        _
      // Predicated region
      $region17: #{decoder_forward.8} parent=11 // pred_check
        %p307 = pneg %p137
      $region18: #{decoder_forward.8} parent=11 // pred_check_branch
        %309 = sbr.rel (%p307) target = $region20
      $region19: #{decoder_forward.8} parent=11 // pred_region
        _
      $region20: #{decoder_forward.8} parent=11 // pred_fallthru
        _
      // Predicated region
      $region21: #{decoder_forward.8} parent=11 // pred_check
        %p310 = pneg %p158
      $region22: #{decoder_forward.8} parent=11 // pred_check_branch
        %312 = sbr.rel (%p310) target = $region24
      $region23: #{decoder_forward.8} parent=11 // pred_region
        _
      $region24: #{decoder_forward.8} parent=11 // pred_fallthru
        _
      // Predicated region
      $region25: #{decoder_forward.8} parent=11 // pred_check
        %p313 = pneg %p179
      $region26: #{decoder_forward.8} parent=11 // pred_check_branch
        %315 = sbr.rel (%p313) target = $region28
      $region27: #{decoder_forward.8} parent=11 // pred_region
        _
      $region28: #{decoder_forward.8} parent=11 // pred_fallthru
        _
      // Predicated region
      $region29: #{decoder_forward.8} parent=11 // pred_check
        %p316 = pneg %p200
      $region30: #{decoder_forward.8} parent=11 // pred_check_branch
        %318 = sbr.rel (%p316) target = $region32
      $region31: #{decoder_forward.8} parent=11 // pred_region
        _
      $region32: #{decoder_forward.8} parent=11 // pred_fallthru
        _
      // Predicated region
      $region33: #{decoder_forward.8} parent=11 // pred_check
        %p319 = pneg %p221
      $region34: #{decoder_forward.8} parent=11 // pred_check_branch
        %321 = sbr.rel (%p319) target = $region36
      $region35: #{decoder_forward.8} parent=11 // pred_region
        _
      $region36: #{decoder_forward.8} parent=11 // pred_fallthru
        _
      // Predicated region
      $region37: #{decoder_forward.8} parent=11 // pred_check
        %p322 = pneg %p242
      $region38: #{decoder_forward.8} parent=11 // pred_check_branch
        %324 = sbr.rel (%p322) target = $region40
      $region39: #{decoder_forward.8} parent=11 // pred_region
        _
      $region40: #{decoder_forward.8} parent=11 // pred_fallthru
        _
      // Predicated region
      $region41: #{decoder_forward.8} parent=11 // pred_check
        %p325 = pneg %p263
      $region42: #{decoder_forward.8} parent=11 // pred_check_branch
        %327 = sbr.rel (%p325) target = $region44
      $region43: #{decoder_forward.8} parent=11 // pred_region
        _
      $region44: #{decoder_forward.8} parent=11 // pred_fallthru
        _
    $region12: #{decoder_forward.8} parent=5 // pred_fallthru
      _
    %p328 = scmp.lt.s32.totalorder %s17, 2
    // Predicated region
    $region45: #{decoder_forward.8} parent=5 // pred_check
      %p329 = pneg %p328
    $region46: #{decoder_forward.8} parent=5 // pred_check_branch
      %331 = sbr.rel (%p329) target = $region48
    $region47: #{decoder_forward.8} parent=5 // pred_region
      // Predicated region
      $region49: #{decoder_forward.8} parent=47 // pred_check
        %p332 = pneg %p37
      $region50: #{decoder_forward.8} parent=47 // pred_check_branch
        %334 = sbr.rel (%p332) target = $region52
      $region51: #{decoder_forward.8} parent=47 // pred_region
        %p335 = scmp.lt.s32.totalorder %s17, 1
        %s336 = scalar_select %p335, %s17, 1
        %s337 = smul.addr %s336, 8
        %s338 = scalar_lea.vmem %s0, %s337
      $region52: #{decoder_forward.8} parent=47 // pred_fallthru
        _
      // Predicated region
      $region53: #{decoder_forward.8} parent=47 // pred_check
        %p339 = pneg %p63
      $region54: #{decoder_forward.8} parent=47 // pred_check_branch
        %341 = sbr.rel (%p339) target = $region56
      $region55: #{decoder_forward.8} parent=47 // pred_region
        %p342 = scmp.lt.s32.totalorder %s17, 1
        %s343 = scalar_select %p342, %s17, 1
        %s344 = smul.addr %s343, 2
        %s345 = smul.addr %s344, 8
        %s346 = scalar_lea.vmem %s1, %s345
      $region56: #{decoder_forward.8} parent=47 // pred_fallthru
        _
      // Predicated region
      $region57: #{decoder_forward.8} parent=47 // pred_check
        %p347 = pneg %p89
      $region58: #{decoder_forward.8} parent=47 // pred_check_branch
        %349 = sbr.rel (%p347) target = $region60
      $region59: #{decoder_forward.8} parent=47 // pred_region
        %p350 = scmp.lt.s32.totalorder %s17, 1
        %s351 = scalar_select %p350, %s17, 1
        %s352 = scalar_lea.vmem %s2, %s351
      $region60: #{decoder_forward.8} parent=47 // pred_fallthru
        _
    $region48: #{decoder_forward.8} parent=5 // pred_fallthru
      _
    %p353 = scmp.le.s32.totalorder 1, %s17
    %p354 = scmp.lt.s32.totalorder %s17, 3
    %p355 = pnand %p353, %p354
    %p356 = pneg %p355
    // Predicated region
    $region61: #{decoder_forward.8} parent=5 // pred_check
      _
    $region62: #{decoder_forward.8} parent=5 // pred_check_branch
      %358 = sbr.rel (%p355) target = $region64
    $region63: #{decoder_forward.8} parent=5 // pred_region
      %s359 = ssub.s32 %s17, 1
      %p360 = scmp.lt.s32.totalorder %s22, 1
      %s361 = scalar_select %p360, %s22, 1
      %s362 = smul.addr %s361, 8
      %s363 = scalar_lea.vmem %s0, %s362
      %p364 = pneg %p43
      %p365 = pneg %p40
      %p366 = scmp.lt.s32.totalorder %s22, 1
      %s367 = scalar_select %p366, %s22, 1
      %s368 = smul.addr %s367, 2
      %s369 = smul.addr %s368, 8
      %s370 = scalar_lea.vmem %s1, %s369
      %p371 = pneg %p69
      %p372 = pneg %p66
      %p373 = scmp.lt.s32.totalorder %s22, 1
      %s374 = scalar_select %p373, %s22, 1
      %s375 = scalar_lea.vmem %s2, %s374
      %p376 = pneg %p95
      %p377 = pneg %p92
      %p378 = pneg %p116
      %p379 = pneg %p113
      %p380 = pneg %p137
      %p381 = pneg %p134
      %p382 = pneg %p158
      %p383 = pneg %p155
      %p384 = pneg %p179
      %p385 = pneg %p176
      %p386 = pneg %p200
      %p387 = pneg %p197
      %p388 = pneg %p221
      %p389 = pneg %p218
      %p390 = pneg %p242
      %p391 = pneg %p239
      %p392 = pneg %p263
      %p393 = pneg %p260
      %p394 = pneg %p289
      %p395 = pneg %p286
      %p396 = scmp.lt.s32.totalorder %s22, 1
      %s397 = scalar_select %p396, %s22, 1
      %s398 = smul.addr %s397, 8
      %s399 = scalar_lea.vmem %s11, %s398
      %p400 = scmp.lt.s32.totalorder %s22, 1
      %s401 = scalar_select %p400, %s22, 1
      %s402 = smul.addr %s401, 8
      %s403 = scalar_lea.vmem %s0, %s402
      %p404 = scmp.lt.s32.totalorder %s22, 1
      %s405 = scalar_select %p404, %s22, 1
      %s406 = smul.addr %s405, 2
      %s407 = smul.addr %s406, 8
      %s408 = scalar_lea.vmem %s1, %s407
      %p409 = scmp.lt.s32.totalorder %s22, 1
      %s410 = scalar_select %p409, %s22, 1
      %s411 = scalar_lea.vmem %s2, %s410
      %p412 = scmp.lt.s32.totalorder %s22, 1
      %s413 = scalar_select %p412, %s22, 1
      %s414 = smul.addr %s413, 8
      %s415 = scalar_lea.vmem %s11, %s414
      %v417 = vld [vmem:[%s403] sm:$0xff]
      %v418 = vld [vmem:[%s408] sm:$0xff]
      %v419 = vld [vmem:[%s408 + $0x8] sm:$0xff]
      %v420 = vld [vmem:[%s3] sm:$0x1]
      %v421 = vld [vmem:[%s4] sm:$0x1]
      %vm422 = vcmask 261120
      %v423 = vsel %vm422, %v417, 0.0
      %424 = vadd.xlane.f32.xlu0 %v423
      %v425 = vpop.xlane.xlu0 %424
      %v426 = vrcp.pop 32.0
      %v427 = vmul.f32 %v425, %v426
      %v428 = vsub.f32 %v417, %v427
      %v429 = vmul.f32 %v428, %v428
      %v430 = vsel %vm422, %v429, 0.0
      %431 = vadd.xlane.f32.xlu0 %v430
      %v432 = vpop.xlane.xlu0 %431
      %v433 = vrcp.pop 31.0
      %v434 = vmul.f32 %v432, %v433
      %v436 = vlaneseq
      %v437 = vshrl.u32 %v436, 7
      %v438 = vsub.s32 0, %v437
      %v439 = vrot.slane %v420, %v438
      %v441 = vmul.f32 %v439, %v428
      %v442 = vrsqrt.pop %v434
      %v443 = vmul.f32 %v434, %v442
      %vm444 = vcmp.eq.f32.partialorder %v434, inf
      %v445 = vsel %vm444, %v434, %v443
      %vm446 = vcmp.eq.f32.partialorder %v434, 0.0
      %v447 = vand.u32 %v434, 2147483648
      %v448 = vsel %vm446, %v447, %v445
      %v449 = vadd.f32 %v448, 1e-06
      %v450 = vrcp.pop %v449
      %v451 = vmul.f32 %v441, %v450
      %v453 = vlaneseq
      %v454 = vshrl.u32 %v453, 7
      %v455 = vsub.s32 0, %v454
      %v456 = vrot.slane %v421, %v455
      %v458 = vadd.f32 %v451, %v456
      %v459 = vpack.c.bf16 %v458, %v458
      %v460 = vld [vmem:[%s5] sm:$0xf]
      %v461 = vld [vmem:[%s5 + $0x4] sm:$0xf]
      %v462 = vld [vmem:[%s5 + $0x8] sm:$0xf]
      %v463 = vld [vmem:[%s5 + $0xc] sm:$0xf]
      %v464 = vld [vmem:[%s6] sm:$0x1]
      %v466 = vlaneseq
      %v467 = vshrl.u32 %v466, 7
      %v468 = vsub.s32 0, %v467
      %v469 = vrot.slane %v464, %v468
      %v475 = vunpack.c.l.b16 %v460
      %v476 = vunpack.c.l.b16 %v461
      %v477 = vunpack.c.l.b16 %v462
      %v478 = vunpack.c.l.b16 %v463
      %v479 = vpack.c.b16 %v476, %v475
      %v480 = vpack.c.b16 %v478, %v477
      %v484 = vsel %vm422, %v459, 0
      %486 = vmatprep.subr.bf16.mxu0 0
      %487 = vmatpush1.bf16.msra.mxu0 %v479
      %488 = vmatprep.subr.bf16.mxu0 0
      %489 = vmatpush1.bf16.msra.mxu0 %v480
      %490 = vmatprep.subr.bf16.mxu0 0
      %491 = vmatpush1.bf16.msra.mxu0 0
      %492 = vmatprep.subr.bf16.mxu0 0
      %493 = vmatpush1.bf16.msra.mxu0 0
      %494 = vmatprep.subr.bf16.mxu0 0
      %495 = vmatpush1.bf16.msra.mxu0 0
      %496 = vmatprep.subr.bf16.mxu0 0
      %497 = vmatpush1.bf16.msra.mxu0 0
      %498 = vmatprep.subr.bf16.mxu0 0
      %499 = vmatpush1.bf16.msra.mxu0 0
      %500 = vmatprep.subr.bf16.mxu0 0
      %501 = vmatpush1.bf16.msra.mxu0 0
      %502 = vmatprep.subr.bf16.mxu0 0
      %503 = vmatpush1.bf16.msra.mxu0 0
      %504 = vmatprep.subr.bf16.mxu0 0
      %505 = vmatpush1.bf16.msra.mxu0 0
      %506 = vmatprep.subr.bf16.mxu0 0
      %507 = vmatpush1.bf16.msra.mxu0 0
      %508 = vmatprep.subr.bf16.mxu0 0
      %509 = vmatpush1.bf16.msra.mxu0 0
      %510 = vmatprep.subr.bf16.mxu0 0
      %511 = vmatpush1.bf16.msra.mxu0 0
      %512 = vmatprep.subr.bf16.mxu0 0
      %513 = vmatpush1.bf16.msra.mxu0 0
      %514 = vmatprep.subr.bf16.mxu0 0
      %515 = vmatpush1.bf16.msra.mxu0 0
      %516 = vmatprep.subr.bf16.mxu0 0
      %517 = vmatpush1.bf16.msra.mxu0 0
      %518 = vmatprep.mubr.bf16.mxu0 0
      %519 = vmatmul.mubr.bf16.gmra.mrb[0].mxu0 %v484
      %v520 = vpop.f32.mrb[0].mxu0
      %v521 = vadd.f32 %v469, %v520
      %v522 = vpop.f32.mrb[0].mxu0
      %v523 = vpop.f32.mrb[0].mxu0
      %v524 = vpop.f32.mrb[0].mxu0
      %525 = vdwg.mxu0
      %v526 = vpack.c.bf16 %v419, %v418
      %v527 = vld [vmem:[%s7] sm:$0xf]
      %v528 = vld [vmem:[%s7 + $0x4] sm:$0xf]
      %v529 = vld [vmem:[%s7 + $0x8] sm:$0xf]
      %v530 = vld [vmem:[%s7 + $0xc] sm:$0xf]
      %v531 = vld [vmem:[%s8] sm:$0x1]
      %v533 = vlaneseq
      %v534 = vshrl.u32 %v533, 7
      %v535 = vsub.s32 0, %v534
      %v536 = vrot.slane %v531, %v535
      %v542 = vunpack.c.l.b16 %v527
      %v543 = vunpack.c.l.b16 %v528
      %v544 = vunpack.c.l.b16 %v529
      %v545 = vunpack.c.l.b16 %v530
      %v546 = vpack.c.b16 %v543, %v542
      %v547 = vpack.c.b16 %v545, %v544
      %v551 = vsel %vm422, %v526, 0
      %553 = vmatprep.subr.bf16.mxu0 0
      %554 = vmatpush1.bf16.msra.mxu0 %v546
      %555 = vmatprep.subr.bf16.mxu0 0
      %556 = vmatpush1.bf16.msra.mxu0 %v547
      %557 = vmatprep.subr.bf16.mxu0 0
      %558 = vmatpush1.bf16.msra.mxu0 0
      %559 = vmatprep.subr.bf16.mxu0 0
      %560 = vmatpush1.bf16.msra.mxu0 0
      %561 = vmatprep.subr.bf16.mxu0 0
      %562 = vmatpush1.bf16.msra.mxu0 0
      %563 = vmatprep.subr.bf16.mxu0 0
      %564 = vmatpush1.bf16.msra.mxu0 0
      %565 = vmatprep.subr.bf16.mxu0 0
      %566 = vmatpush1.bf16.msra.mxu0 0
      %567 = vmatprep.subr.bf16.mxu0 0
      %568 = vmatpush1.bf16.msra.mxu0 0
      %569 = vmatprep.subr.bf16.mxu0 0
      %570 = vmatpush1.bf16.msra.mxu0 0
      %571 = vmatprep.subr.bf16.mxu0 0
      %572 = vmatpush1.bf16.msra.mxu0 0
      %573 = vmatprep.subr.bf16.mxu0 0
      %574 = vmatpush1.bf16.msra.mxu0 0
      %575 = vmatprep.subr.bf16.mxu0 0
      %576 = vmatpush1.bf16.msra.mxu0 0
      %577 = vmatprep.subr.bf16.mxu0 0
      %578 = vmatpush1.bf16.msra.mxu0 0
      %579 = vmatprep.subr.bf16.mxu0 0
      %580 = vmatpush1.bf16.msra.mxu0 0
      %581 = vmatprep.subr.bf16.mxu0 0
      %582 = vmatpush1.bf16.msra.mxu0 0
      %583 = vmatprep.subr.bf16.mxu0 0
      %584 = vmatpush1.bf16.msra.mxu0 0
      %585 = vmatprep.mubr.bf16.mxu0 0
      %586 = vmatmul.mubr.bf16.gmra.mrb[0].mxu0 %v551
      %v587 = vpop.f32.mrb[0].mxu0
      %v588 = vadd.f32 %v536, %v587
      %v589 = vpop.f32.mrb[0].mxu0
      %v590 = vpop.f32.mrb[0].mxu0
      %v591 = vadd.f32 %v536, %v590
      %v592 = vpop.f32.mrb[0].mxu0
      %593 = vdwg.mxu0
      %v594 = vld [vmem:[%s411] sm:$0x1]
      %596 = vrot.lane.b32.xlu0 %v521, 120
      %v597 = vpop.permute.xlu0 %596
      %599 = vrot.lane.b32.xlu0 %v521, 112
      %v600 = vpop.permute.xlu0 %599
      %602 = vrot.lane.b32.xlu0 %v521, 104
      %v603 = vpop.permute.xlu0 %602
      %v605 = vpack.c.bf16 %v521, %v521
      %v606 = vpack.c.bf16 %v597, %v597
      %v607 = vpack.c.bf16 %v600, %v600
      %v608 = vpack.c.bf16 %v603, %v603
      %611 = vrot.lane.b32.xlu0 %v588, 120
      %v612 = vpop.permute.xlu0 %611
      %613 = vrot.lane.b32.xlu0 %v591, 120
      %v614 = vpop.permute.xlu0 %613
      %617 = vrot.lane.b32.xlu0 %v588, 112
      %v618 = vpop.permute.xlu0 %617
      %619 = vrot.lane.b32.xlu0 %v591, 112
      %v620 = vpop.permute.xlu0 %619
      %623 = vrot.lane.b32.xlu0 %v588, 104
      %v624 = vpop.permute.xlu0 %623
      %625 = vrot.lane.b32.xlu0 %v591, 104
      %v626 = vpop.permute.xlu0 %625
      %v629 = vpack.c.bf16 %v591, %v588
      %v630 = vpack.c.bf16 %v614, %v612
      %v631 = vpack.c.bf16 %v620, %v618
      %v632 = vpack.c.bf16 %v626, %v624
      %vm633 = vcmask 64512
      %v635 = vsel %vm633, %v605, 0
      %v638 = vsel %vm633, %v629, 0
      %640 = vmatprep.subr.bf16.mxu0 0
      %641 = vmatpush1.bf16.xpose.msra.mxu0 %v638
      %642 = vmatprep.subr.bf16.mxu0 0
      %643 = vmatpush1.bf16.xpose.msra.mxu0 0
      %644 = vmatprep.subr.bf16.mxu0 0
      %645 = vmatpush1.bf16.xpose.msra.mxu0 0
      %646 = vmatprep.subr.bf16.mxu0 0
      %647 = vmatpush1.bf16.xpose.msra.mxu0 0
      %648 = vmatprep.subr.bf16.mxu0 0
      %649 = vmatpush1.bf16.xpose.msra.mxu0 0
      %650 = vmatprep.subr.bf16.mxu0 0
      %651 = vmatpush1.bf16.xpose.msra.mxu0 0
      %652 = vmatprep.subr.bf16.mxu0 0
      %653 = vmatpush1.bf16.xpose.msra.mxu0 0
      %654 = vmatprep.subr.bf16.mxu0 0
      %655 = vmatpush1.bf16.xpose.msra.mxu0 0
      %656 = vmatprep.subr.bf16.mxu0 0
      %657 = vmatpush1.bf16.xpose.msra.mxu0 0
      %658 = vmatprep.subr.bf16.mxu0 0
      %659 = vmatpush1.bf16.xpose.msra.mxu0 0
      %660 = vmatprep.subr.bf16.mxu0 0
      %661 = vmatpush1.bf16.xpose.msra.mxu0 0
      %662 = vmatprep.subr.bf16.mxu0 0
      %663 = vmatpush1.bf16.xpose.msra.mxu0 0
      %664 = vmatprep.subr.bf16.mxu0 0
      %665 = vmatpush1.bf16.xpose.msra.mxu0 0
      %666 = vmatprep.subr.bf16.mxu0 0
      %667 = vmatpush1.bf16.xpose.msra.mxu0 0
      %668 = vmatprep.subr.bf16.mxu0 0
      %669 = vmatpush1.bf16.xpose.msra.mxu0 0
      %670 = vmatprep.subr.bf16.mxu0 0
      %671 = vmatpush1.bf16.xpose.msra.mxu0 0
      %672 = vmatprep.mubr.bf16.mxu0 0
      %673 = vmatmul.mubr.bf16.gmra.mrb[0].mxu0 %v635
      %v674 = vpop.f32.mrb[0].mxu0
      %v675 = vadd.f32 0.0, %v674
      %v676 = vpop.f32.mrb[0].mxu0
      %v677 = vpop.f32.mrb[0].mxu0
      %v678 = vpop.f32.mrb[0].mxu0
      %679 = vdwg.mxu0
      %v681 = vsel %vm633, %v606, 0
      %v684 = vsel %vm633, %v630, 0
      %686 = vmatprep.subr.bf16.mxu0 0
      %687 = vmatpush1.bf16.xpose.msra.mxu0 %v684
      %688 = vmatprep.subr.bf16.mxu0 0
      %689 = vmatpush1.bf16.xpose.msra.mxu0 0
      %690 = vmatprep.subr.bf16.mxu0 0
      %691 = vmatpush1.bf16.xpose.msra.mxu0 0
      %692 = vmatprep.subr.bf16.mxu0 0
      %693 = vmatpush1.bf16.xpose.msra.mxu0 0
      %694 = vmatprep.subr.bf16.mxu0 0
      %695 = vmatpush1.bf16.xpose.msra.mxu0 0
      %696 = vmatprep.subr.bf16.mxu0 0
      %697 = vmatpush1.bf16.xpose.msra.mxu0 0
      %698 = vmatprep.subr.bf16.mxu0 0
      %699 = vmatpush1.bf16.xpose.msra.mxu0 0
      %700 = vmatprep.subr.bf16.mxu0 0
      %701 = vmatpush1.bf16.xpose.msra.mxu0 0
      %702 = vmatprep.subr.bf16.mxu0 0
      %703 = vmatpush1.bf16.xpose.msra.mxu0 0
      %704 = vmatprep.subr.bf16.mxu0 0
      %705 = vmatpush1.bf16.xpose.msra.mxu0 0
      %706 = vmatprep.subr.bf16.mxu0 0
      %707 = vmatpush1.bf16.xpose.msra.mxu0 0
      %708 = vmatprep.subr.bf16.mxu0 0
      %709 = vmatpush1.bf16.xpose.msra.mxu0 0
      %710 = vmatprep.subr.bf16.mxu0 0
      %711 = vmatpush1.bf16.xpose.msra.mxu0 0
      %712 = vmatprep.subr.bf16.mxu0 0
      %713 = vmatpush1.bf16.xpose.msra.mxu0 0
      %714 = vmatprep.subr.bf16.mxu0 0
      %715 = vmatpush1.bf16.xpose.msra.mxu0 0
      %716 = vmatprep.subr.bf16.mxu0 0
      %717 = vmatpush1.bf16.xpose.msra.mxu0 0
      %718 = vmatprep.mubr.bf16.mxu0 0
      %719 = vmatmul.mubr.bf16.gmra.mrb[0].mxu0 %v681
      %v720 = vpop.f32.mrb[0].mxu0
      %v721 = vadd.f32 0.0, %v720
      %v722 = vpop.f32.mrb[0].mxu0
      %v723 = vpop.f32.mrb[0].mxu0
      %v724 = vpop.f32.mrb[0].mxu0
      %725 = vdwg.mxu0
      %v727 = vsel %vm633, %v607, 0
      %v730 = vsel %vm633, %v631, 0
      %732 = vmatprep.subr.bf16.mxu0 0
      %733 = vmatpush1.bf16.xpose.msra.mxu0 %v730
      %734 = vmatprep.subr.bf16.mxu0 0
      %735 = vmatpush1.bf16.xpose.msra.mxu0 0
      %736 = vmatprep.subr.bf16.mxu0 0
      %737 = vmatpush1.bf16.xpose.msra.mxu0 0
      %738 = vmatprep.subr.bf16.mxu0 0
      %739 = vmatpush1.bf16.xpose.msra.mxu0 0
      %740 = vmatprep.subr.bf16.mxu0 0
      %741 = vmatpush1.bf16.xpose.msra.mxu0 0
      %742 = vmatprep.subr.bf16.mxu0 0
      %743 = vmatpush1.bf16.xpose.msra.mxu0 0
      %744 = vmatprep.subr.bf16.mxu0 0
      %745 = vmatpush1.bf16.xpose.msra.mxu0 0
      %746 = vmatprep.subr.bf16.mxu0 0
      %747 = vmatpush1.bf16.xpose.msra.mxu0 0
      %748 = vmatprep.subr.bf16.mxu0 0
      %749 = vmatpush1.bf16.xpose.msra.mxu0 0
      %750 = vmatprep.subr.bf16.mxu0 0
      %751 = vmatpush1.bf16.xpose.msra.mxu0 0
      %752 = vmatprep.subr.bf16.mxu0 0
      %753 = vmatpush1.bf16.xpose.msra.mxu0 0
      %754 = vmatprep.subr.bf16.mxu0 0
      %755 = vmatpush1.bf16.xpose.msra.mxu0 0
      %756 = vmatprep.subr.bf16.mxu0 0
      %757 = vmatpush1.bf16.xpose.msra.mxu0 0
      %758 = vmatprep.subr.bf16.mxu0 0
      %759 = vmatpush1.bf16.xpose.msra.mxu0 0
      %760 = vmatprep.subr.bf16.mxu0 0
      %761 = vmatpush1.bf16.xpose.msra.mxu0 0
      %762 = vmatprep.subr.bf16.mxu0 0
      %763 = vmatpush1.bf16.xpose.msra.mxu0 0
      %764 = vmatprep.mubr.bf16.mxu0 0
      %765 = vmatmul.mubr.bf16.gmra.mrb[0].mxu0 %v727
      %v766 = vpop.f32.mrb[0].mxu0
      %v767 = vadd.f32 0.0, %v766
      %v768 = vpop.f32.mrb[0].mxu0
      %v769 = vpop.f32.mrb[0].mxu0
      %v770 = vpop.f32.mrb[0].mxu0
      %771 = vdwg.mxu0
      %v773 = vsel %vm633, %v608, 0
      %v776 = vsel %vm633, %v632, 0
      %778 = vmatprep.subr.bf16.mxu0 0
      %779 = vmatpush1.bf16.xpose.msra.mxu0 %v776
      %780 = vmatprep.subr.bf16.mxu0 0
      %781 = vmatpush1.bf16.xpose.msra.mxu0 0
      %782 = vmatprep.subr.bf16.mxu0 0
      %783 = vmatpush1.bf16.xpose.msra.mxu0 0
      %784 = vmatprep.subr.bf16.mxu0 0
      %785 = vmatpush1.bf16.xpose.msra.mxu0 0
      %786 = vmatprep.subr.bf16.mxu0 0
      %787 = vmatpush1.bf16.xpose.msra.mxu0 0
      %788 = vmatprep.subr.bf16.mxu0 0
      %789 = vmatpush1.bf16.xpose.msra.mxu0 0
      %790 = vmatprep.subr.bf16.mxu0 0
      %791 = vmatpush1.bf16.xpose.msra.mxu0 0
      %792 = vmatprep.subr.bf16.mxu0 0
      %793 = vmatpush1.bf16.xpose.msra.mxu0 0
      %794 = vmatprep.subr.bf16.mxu0 0
      %795 = vmatpush1.bf16.xpose.msra.mxu0 0
      %796 = vmatprep.subr.bf16.mxu0 0
      %797 = vmatpush1.bf16.xpose.msra.mxu0 0
      %798 = vmatprep.subr.bf16.mxu0 0
      %799 = vmatpush1.bf16.xpose.msra.mxu0 0
      %800 = vmatprep.subr.bf16.mxu0 0
      %801 = vmatpush1.bf16.xpose.msra.mxu0 0
      %802 = vmatprep.subr.bf16.mxu0 0
      %803 = vmatpush1.bf16.xpose.msra.mxu0 0
      %804 = vmatprep.subr.bf16.mxu0 0
      %805 = vmatpush1.bf16.xpose.msra.mxu0 0
      %806 = vmatprep.subr.bf16.mxu0 0
      %807 = vmatpush1.bf16.xpose.msra.mxu0 0
      %808 = vmatprep.subr.bf16.mxu0 0
      %809 = vmatpush1.bf16.xpose.msra.mxu0 0
      %810 = vmatprep.mubr.bf16.mxu0 0
      %811 = vmatmul.mubr.bf16.gmra.mrb[0].mxu0 %v773
      %v812 = vpop.f32.mrb[0].mxu0
      %v813 = vadd.f32 0.0, %v812
      %v814 = vpop.f32.mrb[0].mxu0
      %v815 = vpop.f32.mrb[0].mxu0
      %v816 = vpop.f32.mrb[0].mxu0
      %817 = vdwg.mxu0
      %v818 = vmul.f32 %v675, 0.35355338
      %v819 = vmul.f32 %v721, 0.35355338
      %v820 = vmul.f32 %v767, 0.35355338
      %v821 = vmul.f32 %v813, 0.35355338
      %vm822 = vcmp.eq.f32.partialorder %v594, 0.0
      %v823 = vsel %vm822, 1, 0
      %v824 = vlaneseq
      %v825 = vshrl.u32 %v824, 7
      %v826 = vsub.s32 0, %v825
      %v827 = vrot.slane %v823, %v826
      %vm828 = vcmp.eq.s32.totalorder %v827, 1
      %v829 = vsel %vm828, -1e+09, %v818
      %v830 = vsel %vm828, -1e+09, %v819
      %v831 = vsel %vm828, -1e+09, %v820
      %v832 = vsel %vm828, -1e+09, %v821
      %vm833 = vcmask 130048
      %v834 = vsel %vm833, %v829, -inf
      %835 = vmax.xlane.f32.xlu0 %v834
      %v836 = vpop.xlane.xlu0 %835
      %v837 = vsel %vm833, %v830, -inf
      %838 = vmax.xlane.f32.xlu0 %v837
      %v839 = vpop.xlane.xlu0 %838
      %v840 = vsel %vm833, %v831, -inf
      %841 = vmax.xlane.f32.xlu0 %v840
      %v842 = vpop.xlane.xlu0 %841
      %v843 = vsel %vm833, %v832, -inf
      %844 = vmax.xlane.f32.xlu0 %v843
      %v845 = vpop.xlane.xlu0 %844
      %v846 = vsub.f32 %v829, %v836
      %v847 = vsub.f32 %v830, %v839
      %v848 = vsub.f32 %v831, %v842
      %v849 = vsub.f32 %v832, %v845
      %v850 = vmul.f32 %v846, 1.442695
      %v851 = vpow.pop %v850
      %v852 = vmul.f32 %v847, 1.442695
      %v853 = vpow.pop %v852
      %v854 = vmul.f32 %v848, 1.442695
      %v855 = vpow.pop %v854
      %v856 = vmul.f32 %v849, 1.442695
      %v857 = vpow.pop %v856
      %v858 = vsel %vm833, %v851, 0.0
      %859 = vadd.xlane.f32.xlu0 %v858
      %v860 = vpop.xlane.xlu0 %859
      %v861 = vsel %vm833, %v853, 0.0
      %862 = vadd.xlane.f32.xlu0 %v861
      %v863 = vpop.xlane.xlu0 %862
      %v864 = vsel %vm833, %v855, 0.0
      %865 = vadd.xlane.f32.xlu0 %v864
      %v866 = vpop.xlane.xlu0 %865
      %v867 = vsel %vm833, %v857, 0.0
      %868 = vadd.xlane.f32.xlu0 %v867
      %v869 = vpop.xlane.xlu0 %868
      %v870 = vrcp.pop %v860
      %v871 = vrcp.pop %v863
      %v872 = vrcp.pop %v866
      %v873 = vrcp.pop %v869
      %v874 = vmul.f32 %v851, %v870
      %v875 = vmul.f32 %v853, %v871
      %v876 = vmul.f32 %v855, %v872
      %v877 = vmul.f32 %v857, %v873
      %v878 = vpack.c.bf16 %v874, %v874
      %v879 = vpack.c.bf16 %v875, %v875
      %v880 = vpack.c.bf16 %v876, %v876
      %v881 = vpack.c.bf16 %v877, %v877
      %883 = vrot.lane.b32.xlu0 %v629, 96
      %v884 = vpop.permute.xlu0 %883
      %v887 = vsel %vm833, %v878, 0
      %889 = vmatprep.subr.bf16.mxu0 0
      %890 = vmatpush1.bf16.msra.mxu0 %v884
      %891 = vmatprep.subr.bf16.mxu0 0
      %892 = vmatpush1.bf16.msra.mxu0 0
      %893 = vmatprep.subr.bf16.mxu0 0
      %894 = vmatpush1.bf16.msra.mxu0 0
      %895 = vmatprep.subr.bf16.mxu0 0
      %896 = vmatpush1.bf16.msra.mxu0 0
      %897 = vmatprep.subr.bf16.mxu0 0
      %898 = vmatpush1.bf16.msra.mxu0 0
      %899 = vmatprep.subr.bf16.mxu0 0
      %900 = vmatpush1.bf16.msra.mxu0 0
      %901 = vmatprep.subr.bf16.mxu0 0
      %902 = vmatpush1.bf16.msra.mxu0 0
      %903 = vmatprep.subr.bf16.mxu0 0
      %904 = vmatpush1.bf16.msra.mxu0 0
      %905 = vmatprep.subr.bf16.mxu0 0
      %906 = vmatpush1.bf16.msra.mxu0 0
      %907 = vmatprep.subr.bf16.mxu0 0
      %908 = vmatpush1.bf16.msra.mxu0 0
      %909 = vmatprep.subr.bf16.mxu0 0
      %910 = vmatpush1.bf16.msra.mxu0 0
      %911 = vmatprep.subr.bf16.mxu0 0
      %912 = vmatpush1.bf16.msra.mxu0 0
      %913 = vmatprep.subr.bf16.mxu0 0
      %914 = vmatpush1.bf16.msra.mxu0 0
      %915 = vmatprep.subr.bf16.mxu0 0
      %916 = vmatpush1.bf16.msra.mxu0 0
      %917 = vmatprep.subr.bf16.mxu0 0
      %918 = vmatpush1.bf16.msra.mxu0 0
      %919 = vmatprep.subr.bf16.mxu0 0
      %920 = vmatpush1.bf16.msra.mxu0 0
      %921 = vmatprep.mubr.bf16.mxu0 0
      %922 = vmatmul.mubr.bf16.gmra.mrb[0].mxu0 %v887
      %v923 = vpop.f32.mrb[0].mxu0
      %v924 = vadd.f32 0.0, %v923
      %v925 = vpop.f32.mrb[0].mxu0
      %v926 = vpop.f32.mrb[0].mxu0
      %v927 = vpop.f32.mrb[0].mxu0
      %928 = vdwg.mxu0
      %930 = vrot.lane.b32.xlu0 %v630, 96
      %v931 = vpop.permute.xlu0 %930
      %v934 = vsel %vm833, %v879, 0
      %936 = vmatprep.subr.bf16.mxu0 0
      %937 = vmatpush1.bf16.msra.mxu0 %v931
      %938 = vmatprep.subr.bf16.mxu0 0
      %939 = vmatpush1.bf16.msra.mxu0 0
      %940 = vmatprep.subr.bf16.mxu0 0
      %941 = vmatpush1.bf16.msra.mxu0 0
      %942 = vmatprep.subr.bf16.mxu0 0
      %943 = vmatpush1.bf16.msra.mxu0 0
      %944 = vmatprep.subr.bf16.mxu0 0
      %945 = vmatpush1.bf16.msra.mxu0 0
      %946 = vmatprep.subr.bf16.mxu0 0
      %947 = vmatpush1.bf16.msra.mxu0 0
      %948 = vmatprep.subr.bf16.mxu0 0
      %949 = vmatpush1.bf16.msra.mxu0 0
      %950 = vmatprep.subr.bf16.mxu0 0
      %951 = vmatpush1.bf16.msra.mxu0 0
      %952 = vmatprep.subr.bf16.mxu0 0
      %953 = vmatpush1.bf16.msra.mxu0 0
      %954 = vmatprep.subr.bf16.mxu0 0
      %955 = vmatpush1.bf16.msra.mxu0 0
      %956 = vmatprep.subr.bf16.mxu0 0
      %957 = vmatpush1.bf16.msra.mxu0 0
      %958 = vmatprep.subr.bf16.mxu0 0
      %959 = vmatpush1.bf16.msra.mxu0 0
      %960 = vmatprep.subr.bf16.mxu0 0
      %961 = vmatpush1.bf16.msra.mxu0 0
      %962 = vmatprep.subr.bf16.mxu0 0
      %963 = vmatpush1.bf16.msra.mxu0 0
      %964 = vmatprep.subr.bf16.mxu0 0
      %965 = vmatpush1.bf16.msra.mxu0 0
      %966 = vmatprep.subr.bf16.mxu0 0
      %967 = vmatpush1.bf16.msra.mxu0 0
      %968 = vmatprep.mubr.bf16.mxu0 0
      %969 = vmatmul.mubr.bf16.gmra.mrb[0].mxu0 %v934
      %v970 = vpop.f32.mrb[0].mxu0
      %v971 = vadd.f32 0.0, %v970
      %v972 = vpop.f32.mrb[0].mxu0
      %v973 = vpop.f32.mrb[0].mxu0
      %v974 = vpop.f32.mrb[0].mxu0
      %975 = vdwg.mxu0
      %977 = vrot.lane.b32.xlu0 %v631, 96
      %v978 = vpop.permute.xlu0 %977
      %v981 = vsel %vm833, %v880, 0
      %983 = vmatprep.subr.bf16.mxu0 0
      %984 = vmatpush1.bf16.msra.mxu0 %v978
      %985 = vmatprep.subr.bf16.mxu0 0
      %986 = vmatpush1.bf16.msra.mxu0 0
      %987 = vmatprep.subr.bf16.mxu0 0
      %988 = vmatpush1.bf16.msra.mxu0 0
      %989 = vmatprep.subr.bf16.mxu0 0
      %990 = vmatpush1.bf16.msra.mxu0 0
      %991 = vmatprep.subr.bf16.mxu0 0
      %992 = vmatpush1.bf16.msra.mxu0 0
      %993 = vmatprep.subr.bf16.mxu0 0
      %994 = vmatpush1.bf16.msra.mxu0 0
      %995 = vmatprep.subr.bf16.mxu0 0
      %996 = vmatpush1.bf16.msra.mxu0 0
      %997 = vmatprep.subr.bf16.mxu0 0
      %998 = vmatpush1.bf16.msra.mxu0 0
      %999 = vmatprep.subr.bf16.mxu0 0
      %1000 = vmatpush1.bf16.msra.mxu0 0
      %1001 = vmatprep.subr.bf16.mxu0 0
      %1002 = vmatpush1.bf16.msra.mxu0 0
      %1003 = vmatprep.subr.bf16.mxu0 0
      %1004 = vmatpush1.bf16.msra.mxu0 0
      %1005 = vmatprep.subr.bf16.mxu0 0
      %1006 = vmatpush1.bf16.msra.mxu0 0
      %1007 = vmatprep.subr.bf16.mxu0 0
      %1008 = vmatpush1.bf16.msra.mxu0 0
      %1009 = vmatprep.subr.bf16.mxu0 0
      %1010 = vmatpush1.bf16.msra.mxu0 0
      %1011 = vmatprep.subr.bf16.mxu0 0
      %1012 = vmatpush1.bf16.msra.mxu0 0
      %1013 = vmatprep.subr.bf16.mxu0 0
      %1014 = vmatpush1.bf16.msra.mxu0 0
      %1015 = vmatprep.mubr.bf16.mxu0 0
      %1016 = vmatmul.mubr.bf16.gmra.mrb[0].mxu0 %v981
      %v1017 = vpop.f32.mrb[0].mxu0
      %v1018 = vadd.f32 0.0, %v1017
      %v1019 = vpop.f32.mrb[0].mxu0
      %v1020 = vpop.f32.mrb[0].mxu0
      %v1021 = vpop.f32.mrb[0].mxu0
      %1022 = vdwg.mxu0
      %1024 = vrot.lane.b32.xlu0 %v632, 96
      %v1025 = vpop.permute.xlu0 %1024
      %v1028 = vsel %vm833, %v881, 0
      %1030 = vmatprep.subr.bf16.mxu0 0
      %1031 = vmatpush1.bf16.msra.mxu0 %v1025
      %1032 = vmatprep.subr.bf16.mxu0 0
      %1033 = vmatpush1.bf16.msra.mxu0 0
      %1034 = vmatprep.subr.bf16.mxu0 0
      %1035 = vmatpush1.bf16.msra.mxu0 0
      %1036 = vmatprep.subr.bf16.mxu0 0
      %1037 = vmatpush1.bf16.msra.mxu0 0
      %1038 = vmatprep.subr.bf16.mxu0 0
      %1039 = vmatpush1.bf16.msra.mxu0 0
      %1040 = vmatprep.subr.bf16.mxu0 0
      %1041 = vmatpush1.bf16.msra.mxu0 0
      %1042 = vmatprep.subr.bf16.mxu0 0
      %1043 = vmatpush1.bf16.msra.mxu0 0
      %1044 = vmatprep.subr.bf16.mxu0 0
      %1045 = vmatpush1.bf16.msra.mxu0 0
      %1046 = vmatprep.subr.bf16.mxu0 0
      %1047 = vmatpush1.bf16.msra.mxu0 0
      %1048 = vmatprep.subr.bf16.mxu0 0
      %1049 = vmatpush1.bf16.msra.mxu0 0
      %1050 = vmatprep.subr.bf16.mxu0 0
      %1051 = vmatpush1.bf16.msra.mxu0 0
      %1052 = vmatprep.subr.bf16.mxu0 0
      %1053 = vmatpush1.bf16.msra.mxu0 0
      %1054 = vmatprep.subr.bf16.mxu0 0
      %1055 = vmatpush1.bf16.msra.mxu0 0
      %1056 = vmatprep.subr.bf16.mxu0 0
      %1057 = vmatpush1.bf16.msra.mxu0 0
      %1058 = vmatprep.subr.bf16.mxu0 0
      %1059 = vmatpush1.bf16.msra.mxu0 0
      %1060 = vmatprep.subr.bf16.mxu0 0
      %1061 = vmatpush1.bf16.msra.mxu0 0
      %1062 = vmatprep.mubr.bf16.mxu0 0
      %1063 = vmatmul.mubr.bf16.gmra.mrb[0].mxu0 %v1028
      %v1064 = vpop.f32.mrb[0].mxu0
      %v1065 = vadd.f32 0.0, %v1064
      %v1066 = vpop.f32.mrb[0].mxu0
      %v1067 = vpop.f32.mrb[0].mxu0
      %v1068 = vpop.f32.mrb[0].mxu0
      %1069 = vdwg.mxu0
      %1071 = vrot.lane.b32.xlu0 %v971, 8
      %v1072 = vpop.permute.xlu0 %1071
      %1075 = vrot.lane.b32.xlu0 %v1018, 16
      %v1076 = vpop.permute.xlu0 %1075
      %1079 = vrot.lane.b32.xlu0 %v1065, 24
      %v1080 = vpop.permute.xlu0 %1079
      %v1082 = vsel %vm633, %v924, %v1072
      %v1083 = vsel %vm833, %v1082, %v1076
      %vm1084 = vcmask 195584
      %v1085 = vsel %vm1084, %v1083, %v1080
      %v1086 = vpack.c.bf16 %v1085, %v1085
      %v1087 = vld [vmem:[%s9] sm:$0xf]
      %v1088 = vld [vmem:[%s9 + $0x4] sm:$0xf]
      %v1089 = vld [vmem:[%s9 + $0x8] sm:$0xf]
      %v1090 = vld [vmem:[%s9 + $0xc] sm:$0xf]
      %v1091 = vld [vmem:[%s10] sm:$0x1]
      %v1093 = vlaneseq
      %v1094 = vshrl.u32 %v1093, 7
      %v1095 = vsub.s32 0, %v1094
      %v1096 = vrot.slane %v1091, %v1095
      %v1102 = vunpack.c.l.b16 %v1087
      %v1103 = vunpack.c.l.b16 %v1088
      %v1104 = vunpack.c.l.b16 %v1089
      %v1105 = vunpack.c.l.b16 %v1090
      %v1106 = vpack.c.b16 %v1103, %v1102
      %v1107 = vpack.c.b16 %v1105, %v1104
      %v1111 = vsel %vm422, %v1086, 0
      %1113 = vmatprep.subr.bf16.mxu0 0
      %1114 = vmatpush1.bf16.msra.mxu0 %v1106
      %1115 = vmatprep.subr.bf16.mxu0 0
      %1116 = vmatpush1.bf16.msra.mxu0 %v1107
      %1117 = vmatprep.subr.bf16.mxu0 0
      %1118 = vmatpush1.bf16.msra.mxu0 0
      %1119 = vmatprep.subr.bf16.mxu0 0
      %1120 = vmatpush1.bf16.msra.mxu0 0
      %1121 = vmatprep.subr.bf16.mxu0 0
      %1122 = vmatpush1.bf16.msra.mxu0 0
      %1123 = vmatprep.subr.bf16.mxu0 0
      %1124 = vmatpush1.bf16.msra.mxu0 0
      %1125 = vmatprep.subr.bf16.mxu0 0
      %1126 = vmatpush1.bf16.msra.mxu0 0
      %1127 = vmatprep.subr.bf16.mxu0 0
      %1128 = vmatpush1.bf16.msra.mxu0 0
      %1129 = vmatprep.subr.bf16.mxu0 0
      %1130 = vmatpush1.bf16.msra.mxu0 0
      %1131 = vmatprep.subr.bf16.mxu0 0
      %1132 = vmatpush1.bf16.msra.mxu0 0
      %1133 = vmatprep.subr.bf16.mxu0 0
      %1134 = vmatpush1.bf16.msra.mxu0 0
      %1135 = vmatprep.subr.bf16.mxu0 0
      %1136 = vmatpush1.bf16.msra.mxu0 0
      %1137 = vmatprep.subr.bf16.mxu0 0
      %1138 = vmatpush1.bf16.msra.mxu0 0
      %1139 = vmatprep.subr.bf16.mxu0 0
      %1140 = vmatpush1.bf16.msra.mxu0 0
      %1141 = vmatprep.subr.bf16.mxu0 0
      %1142 = vmatpush1.bf16.msra.mxu0 0
      %1143 = vmatprep.subr.bf16.mxu0 0
      %1144 = vmatpush1.bf16.msra.mxu0 0
      %1145 = vmatprep.mubr.bf16.mxu0 0
      %1146 = vmatmul.mubr.bf16.gmra.mrb[0].mxu0 %v1111
      %v1147 = vpop.f32.mrb[0].mxu0
      %v1148 = vadd.f32 %v1096, %v1147
      %v1149 = vpop.f32.mrb[0].mxu0
      %v1150 = vpop.f32.mrb[0].mxu0
      %v1151 = vpop.f32.mrb[0].mxu0
      %1152 = vdwg.mxu0
      %v1153 = vadd.f32 %v417, %v1148
      %1154 = vst.msk [vmem:[%s415] sm:$0xff] %vm422, %v1153
      %p1155 = scmp.lt.s32.totalorder %s22, 1
      %s1156 = scalar_select %p1155, %s22, 1
      %s1157 = smul.addr %s1156, 8
      %s1158 = scalar_lea.vmem %s11, %s1157
      // Predicated region
      $region65: #{decoder_forward.8} parent=63 // pred_check
        %p1159 = pneg %p286
      $region66: #{decoder_forward.8} parent=63 // pred_check_branch
        %1161 = sbr.rel (%p1159) target = $region68
      $region67: #{decoder_forward.8} parent=63 // pred_region
        _
      $region68: #{decoder_forward.8} parent=63 // pred_fallthru
        _
    $region64: #{decoder_forward.8} parent=5 // pred_fallthru
      _
    %p1162 = scmp.le.s32.totalorder 2, %s17
    // Predicated region
    $region69: #{decoder_forward.8} parent=5 // pred_check
      %p1163 = pneg %p1162
    $region70: #{decoder_forward.8} parent=5 // pred_check_branch
      %1165 = sbr.rel (%p1163) target = $region72
    $region71: #{decoder_forward.8} parent=5 // pred_region
      %s1166 = ssub.s32 %s17, 2
      // Predicated region
      $region73: #{decoder_forward.8} parent=71 // pred_check
        %p1167 = pneg %p292
      $region74: #{decoder_forward.8} parent=71 // pred_check_branch
        %1169 = sbr.rel (%p1167) target = $region76
      $region75: #{decoder_forward.8} parent=71 // pred_region
        %p1170 = scmp.lt.s32.totalorder %s23, 1
        %s1171 = scalar_select %p1170, %s23, 1
        %s1172 = smul.addr %s1171, 8
        %s1173 = scalar_lea.vmem %s11, %s1172
      $region76: #{decoder_forward.8} parent=71 // pred_fallthru
        _
    $region72: #{decoder_forward.8} parent=5 // pred_fallthru
      _
  $region6: #{decoder_forward.8} parent=0 // loop_footer
    %s21 = sadd.s32 1, %s17
  $region7: #{decoder_forward.8} parent=0 // loop_footer_branch
    %16 = sbr.rel target = $region3
  $region8: #{decoder_forward.8} parent=0 // loop_exit
    _

</llo_original>
